<compile_context>
chip_gen: v5e
topology: v5e:2x2
jax: 0.10.0
libtpu: 0.0.40
codegen_flags: <defaults>
</compile_context>

<pallas_src>
import math

import jax
import jax.numpy as jnp
from jax import lax
from jax.experimental import pallas as pl
from jax.experimental.pallas import tpu as pltpu


def _gelu(x):
    # exact (erf-based) GELU — matches torch.nn.GELU() default
    return 0.5 * x * (1.0 + lax.erf(x * (1.0 / math.sqrt(2.0))))


# ----------------------------------------------------------------------------- glue
def _row_conv_mats(w_hwio, W):
    """w_hwio: (3, 3, Cin, Cout) -> (3, W*Cin, (W-2)*Cout) banded matrices.

    mats[di, m*Cin+ci, p*Cout+co] = w[di, m-p, ci, co] if 0 <= m-p <= 2 else 0, so
    conv(x)[r, p*Cout+co] = sum_di (x2[r+di, :] @ mats[di])[p*Cout+co] for an image
    stored in the fused (H, W*Cin) layout.  Host-side glue (runs once).

    Scaling note: the band has ~(W-9)/W structural zeros along K; once W*Cin
    exceeds one MXU K-pass (128/256), split into K-tiles skipping zero blocks or
    switch to a shifted-input (im2col-lite) form with K ~ 9*Cin.
    """
    kh, kw, Cin, Cout = w_hwio.shape
    Wo = W - 2
    m = jnp.arange(W)
    p = jnp.arange(Wo)
    dj = jnp.arange(kw)
    onehot = (m[None, :, None] - p[None, None, :] == dj[:, None, None]).astype(jnp.float32)
    # T[di, m, ci, p, co] = sum_dj onehot[dj, m, p] * w[di, dj, ci, co]
    T = jnp.einsum('jmp,djio->dmipo', onehot, w_hwio.astype(jnp.float32))
    return T.reshape(kh, W * Cin, Wo * Cout)


def _pool_row_selector(bt, Himg):
    """Block-diagonal one-hot (bt*Hp, bt*Himg-3) row selector for 2x2/stride-2 pool.

    The slab-wide conv + row-pair max leaves valid pair rows for image i at slab
    index i*Himg + 2q (q in [0, Hp)); everything else (image seams) is garbage and
    is dropped by this exact selection matmul.
    """
    Ho = Himg - 2
    Hp = Ho // 2
    rows = bt * Hp
    cols = bt * Himg - 3
    out_i = jnp.arange(rows) // Hp
    out_q = jnp.arange(rows) % Hp
    src = out_i * Himg + 2 * out_q
    return (jnp.arange(cols)[None, :] == src[:, None]).astype(jnp.float32)


def _pool_col_selector(Wo, C):
    """Exact one-hot ((Wo-1)*C, (Wo//2)*C) column selector (per-row, image-independent)."""
    Wp = Wo // 2
    sel_jp = (jnp.arange(Wo - 1)[:, None] == 2 * jnp.arange(Wp)[None, :]).astype(jnp.float32)
    sel = jnp.einsum('jp,cd->jcpd', sel_jp, jnp.eye(C, dtype=jnp.float32))
    return sel.reshape((Wo - 1) * C, Wp * C)


def _gmax_row_selector(bt, Himg):
    """One-hot (bt, bt*Himg - (Himg-2) - 1) selector picking each image's folded row-max."""
    Ho = Himg - 2
    cols = bt * Himg - Ho - 1
    src = jnp.arange(bt) * Himg
    return (jnp.arange(cols)[None, :] == src[:, None]).astype(jnp.float32)


def _pick_b_tile(B, H):
    """Images per grid step.

    Small batches: one fat step (bt=B) — per-grid-step overhead (~0.35us) dominates
    the tiny compute, so splitting only hurts single-TC chips.  Larger batches:
    multiple-of-8 tiles (keeps block shapes (8,128)-legal) targeting ~256 stacked
    sublanes per step (fills the v6e/v7x MXU height; gives v7x >=2 parallel blocks).
    """
    cap = max(8, (256 + H - 1) // H)
    if B <= cap:
        return B
    bt = (min(cap, B) // 8) * 8
    while bt >= 8 and B % bt:
        bt -= 8
    return bt if bt >= 8 else B


# --------------------------------------------------------------------------- kernel
def foveated_perception_forward(x_nchw, params, *, matmul_dtype=jnp.float32):
    """x_nchw: (B, Cin, H, W) like the PyTorch module. Returns (B, out_channels)."""
    w1, b1, w2, b2, w3, b3 = params                 # w*: HWIO (3,3,Cin,Cout), b*: (1, C)
    x = jnp.transpose(x_nchw, (0, 2, 3, 1)).astype(jnp.float32)   # NCHW -> NHWC (glue)
    B, H, W, Cin = x.shape
    C1, C2, C3 = w1.shape[-1], w2.shape[-1], w3.shape[-1]

    Ho1, Wo1 = H - 2, W - 2
    Hp1, Wp1 = Ho1 // 2, Wo1 // 2
    Ho2, Wo2 = Hp1 - 2, Wp1 - 2
    Hp2, Wp2 = Ho2 // 2, Wo2 // 2
    Ho3, Wo3 = Hp2 - 2, Wp2 - 2
    assert Ho3 >= 1 and Wo3 >= 1, "input spatially too small for 3 conv stages"

    dd = jnp.dtype(matmul_dtype)
    # Pin precision explicitly: exact f32 for the strict path; bf16 operands (with
    # f32 accumulation) are the deliberate fast path on v6e/v7x.
    prec = lax.Precision.HIGHEST if dd == jnp.dtype(jnp.float32) else lax.Precision.DEFAULT

    bt = _pick_b_tile(B, H)
    assert B % bt == 0
    grid = B // bt

    # Host-side glue: fused (bt*H, W*C) slab layout + precomputed conv/pool matrices.
    x_slab = x.reshape(B * H, W * Cin)
    w1m = _row_conv_mats(w1, W).astype(dd)
    w2m = _row_conv_mats(w2, Wp1).astype(dd)
    w3m = _row_conv_mats(w3, Wp2).astype(dd)
    b1r = jnp.tile(b1.reshape(1, C1), (1, Wo1)).astype(jnp.float32)
    b2r = jnp.tile(b2.reshape(1, C2), (1, Wo2)).astype(jnp.float32)
    b3r = jnp.tile(b3.reshape(1, C3), (1, Wo3)).astype(jnp.float32)
    sh1 = _pool_row_selector(bt, H).astype(dd)
    sw1 = _pool_col_selector(Wo1, C1).astype(dd)
    sh2 = _pool_row_selector(bt, Hp1).astype(dd)
    sw2 = _pool_col_selector(Wo2, C2).astype(dd)
    sgm = _gmax_row_selector(bt, Hp2).astype(dd)

    def dot(a, b):
        return jnp.dot(a.astype(dd), b.astype(dd),
                       precision=prec, preferred_element_type=jnp.float32)

    def conv3(x2, w_ref, brow):
        """x2: (M, Wc*Cin) slab; w_ref: (3, Wc*Cin, Wco*Cout); brow: (1, Wco*Cout)."""
        R = x2.shape[0] - 2
        y = dot(x2[0:R, :], w_ref[0])
        y = y + dot(x2[1:R + 1, :], w_ref[1])
        y = y + dot(x2[2:R + 2, :], w_ref[2])
        return y + brow

    def pool2(y, selH, selW, C):
        """y: (bt*Himg-2, Wo*C) slab conv output -> (bt*Hp, Wp*C); seams dropped by selH."""
        R, WC = y.shape
        pair = jnp.maximum(y[0:R - 1, :], y[1:R, :])     # rows i, i+1
        z = dot(selH, pair)                              # exact per-image row selection
        cpair = jnp.maximum(z[:, 0:WC - C], z[:, C:WC])  # cols j, j+1 (per channel)
        return dot(cpair, selW)                          # exact column selection

    def kernel(x_ref, w1_ref, b1_ref, sh1_ref, sw1_ref,
               w2_ref, b2_ref, sh2_ref, sw2_ref,
               w3_ref, b3_ref, sgm_ref, out_ref):
        x2 = x_ref[...]                                                  # (bt*H, W*Cin)
        # stage 1: conv1 -> maxpool 2x2 -> gelu            (whole batch tile at once)
        a1 = _gelu(pool2(conv3(x2, w1_ref, b1_ref[...]), sh1_ref[...], sw1_ref[...], C1))
        # stage 2: conv2 -> maxpool 2x2 -> gelu
        a2 = _gelu(pool2(conv3(a1, w2_ref, b2_ref[...]), sh2_ref[...], sw2_ref[...], C2))
        # stage 3: conv3 -> AdaptiveMaxPool2d((1,1)) -> gelu
        y3 = conv3(a2, w3_ref, b3_ref[...])                              # (bt*Hp2-2, Wo3*C3)
        R3 = y3.shape[0]
        m = y3[0:R3 - (Ho3 - 1), :]
        for r in range(1, Ho3):                      # fold the Ho3 valid rows per image
            m = jnp.maximum(m, y3[r:R3 - (Ho3 - 1) + r, :])
        gm = dot(sgm_ref[...], m)                    # (bt, Wo3*C3): per-image row max
        res = gm[:, 0:C3]
        for j in range(1, Wo3):                      # fold the Wo3 column blocks
            res = jnp.maximum(res, gm[:, j * C3:(j + 1) * C3])
        out_ref[...] = _gelu(res).astype(out_ref.dtype)   # single batched (bt, C3) store

    def full(a):                                     # whole-array block, replicated over grid
        return pl.BlockSpec(a.shape, lambda b: (0,) * a.ndim)

    out = pl.pallas_call(
        kernel,
        out_shape=jax.ShapeDtypeStruct((B, C3), jnp.float32),
        grid_spec=pltpu.PrefetchScalarGridSpec(
            num_scalar_prefetch=0,
            grid=(grid,),
            in_specs=[
                pl.BlockSpec((bt * H, W * Cin), lambda b: (b, 0)),
                full(w1m), full(b1r), full(sh1), full(sw1),
                full(w2m), full(b2r), full(sh2), full(sw2),
                full(w3m), full(b3r), full(sgm),
            ],
            out_specs=pl.BlockSpec((bt, C3), lambda b: (b, 0)),
        ),
        compiler_params=pltpu.CompilerParams(dimension_semantics=("parallel",)),
    )(x_slab, w1m, b1r, sh1, sw1, w2m, b2r, sh2, sw2, w3m, b3r, sgm)
    return out                                       # nn.Flatten() of (B, C3, 1, 1)


# ------------------------------------------------------------------------ reference
def _reference_forward(x_nchw, params):
    """Pure-JAX reference (lax conv / reduce_window) for correctness checking."""
    w1, b1, w2, b2, w3, b3 = params
    x = jnp.transpose(x_nchw, (0, 2, 3, 1)).astype(jnp.float32)

    def conv(x, w, b):
        y = lax.conv_general_dilated(
            x, w, window_strides=(1, 1), padding="VALID",
            dimension_numbers=("NHWC", "HWIO", "NHWC"))
        return y + b.reshape(1, 1, 1, -1)

    def mp(x):
        return lax.reduce_window(x, -jnp.inf, lax.max,
                                 (1, 2, 2, 1), (1, 2, 2, 1), "VALID")

    y = _gelu(mp(conv(x, w1, b1)))
    y = _gelu(mp(conv(y, w2, b2)))
    y = _gelu(jnp.max(conv(y, w3, b3), axis=(1, 2)))  # adaptive max pool (1,1)
    return y                                          # (B, C3)


if __name__ == "__main__":
    # Shapes consistent with the module: 3 stages of 3x3-valid conv + 2x2 pool need
    # H, W >= 18; use 22 so the stage-3 row/column folds are exercised (Ho3 = Wo3 = 2).
    B, in_channels, H, W = 4, 3, 22, 22
    out_channels = 12
    C1 = out_channels // 3            # conv1 out: 4
    C2 = 2 * out_channels // 3        # conv2 out: 8
    C3 = out_channels                 # conv3 out: 12

    key = jax.random.PRNGKey(0)
    kx, kx2, k1, k2, k3, k4, k5, k6 = jax.random.split(key, 8)
    x_img = jax.random.normal(kx, (B, in_channels, H, W), jnp.float32)     # NCHW like PyTorch

    # Deterministic synthetic parameters. PyTorch Conv2d weights are (Cout, Cin, 3, 3);
    # transpose to HWIO for the channels-last kernel (glue).
    def make_w(k, cin, cout):
        w_oihw = jax.random.normal(k, (cout, cin, 3, 3), jnp.float32) / math.sqrt(cin * 9)
        return jnp.transpose(w_oihw, (2, 3, 1, 0))              # -> (3, 3, Cin, Cout)

    w1 = make_w(k1, in_channels, C1)
    w2 = make_w(k2, C1, C2)
    w3 = make_w(k3, C2, C3)
    b1 = jax.random.normal(k4, (1, C1), jnp.float32) * 0.05
    b2 = jax.random.normal(k5, (1, C2), jnp.float32) * 0.05
    b3 = jax.random.normal(k6, (1, C3), jnp.float32) * 0.05
    params = (w1, b1, w2, b2, w3, b3)

    # --- exact f32 path (single fat grid step) ---
    out = foveated_perception_forward(x_img, params)
    out = jax.block_until_ready(out)
    ref = _reference_forward(x_img, params)
    assert out.shape == (B, out_channels), out.shape
    err = float(jnp.max(jnp.abs(out - ref)))
    assert jnp.allclose(out, ref, rtol=1e-4, atol=5e-5), f"max abs err {err}"

    # --- exact f32 path, larger batch: exercises the multi-block grid (bt=8, grid=2) ---
    B2 = 16
    x_big = jax.random.normal(kx2, (B2, in_channels, H, W), jnp.float32)
    out_big = jax.block_until_ready(foveated_perception_forward(x_big, params))
    ref_big = _reference_forward(x_big, params)
    err_big = float(jnp.max(jnp.abs(out_big - ref_big)))
    assert out_big.shape == (B2, out_channels)
    assert jnp.allclose(out_big, ref_big, rtol=1e-4, atol=5e-5), f"max abs err {err_big}"

    # --- bf16 MXU-operand fast path (v6e/v7x); values are bf16-rounded, relax tolerance ---
    out_bf = jax.block_until_ready(
        foveated_perception_forward(x_img, params, matmul_dtype=jnp.bfloat16))
    err_bf = float(jnp.max(jnp.abs(out_bf - ref)))
    assert err_bf < 0.1, f"bf16 path max abs err {err_bf}"

    print("KERNEL_OK")
</pallas_src>

<mosaic_0001>
module attributes {stable_mosaic.version = 11 : i64} {
  func.func @kernel(%arg0: i32, %arg1: memref<88x66xf32, #tpu.memory_space<vmem>>, %arg2: memref<3x66x80xf32, #tpu.memory_space<vmem>>, %arg3: memref<1x80xf32, #tpu.memory_space<vmem>>, %arg4: memref<40x85xf32, #tpu.memory_space<vmem>>, %arg5: memref<76x40xf32, #tpu.memory_space<vmem>>, %arg6: memref<3x40x64xf32, #tpu.memory_space<vmem>>, %arg7: memref<1x64xf32, #tpu.memory_space<vmem>>, %arg8: memref<16x37xf32, #tpu.memory_space<vmem>>, %arg9: memref<56x32xf32, #tpu.memory_space<vmem>>, %arg10: memref<3x32x24xf32, #tpu.memory_space<vmem>>, %arg11: memref<1x24xf32, #tpu.memory_space<vmem>>, %arg12: memref<4x13xf32, #tpu.memory_space<vmem>>, %arg13: memref<4x12xf32, #tpu.memory_space<vmem>>) attributes {dimension_semantics = [#tpu.dimension_semantics<parallel>], iteration_bounds = array<i64: 1>, scalar_prefetch = 0 : i64, scratch_operands = 0 : i64, tpu.core_type = #tpu.core_type<tc>, window_params = [{transform_indices = @transform_0, window_bounds = array<i64: 88, 66>}, {pipeline_mode = #tpu.pipeline_mode<synchronous>, transform_indices = @transform_1, window_bounds = array<i64: 3, 66, 80>}, {pipeline_mode = #tpu.pipeline_mode<synchronous>, transform_indices = @transform_2, window_bounds = array<i64: 1, 80>}, {pipeline_mode = #tpu.pipeline_mode<synchronous>, transform_indices = @transform_3, window_bounds = array<i64: 40, 85>}, {pipeline_mode = #tpu.pipeline_mode<synchronous>, transform_indices = @transform_4, window_bounds = array<i64: 76, 40>}, {pipeline_mode = #tpu.pipeline_mode<synchronous>, transform_indices = @transform_5, window_bounds = array<i64: 3, 40, 64>}, {pipeline_mode = #tpu.pipeline_mode<synchronous>, transform_indices = @transform_6, window_bounds = array<i64: 1, 64>}, {pipeline_mode = #tpu.pipeline_mode<synchronous>, transform_indices = @transform_7, window_bounds = array<i64: 16, 37>}, {pipeline_mode = #tpu.pipeline_mode<synchronous>, transform_indices = @transform_8, window_bounds = array<i64: 56, 32>}, {pipeline_mode = #tpu.pipeline_mode<synchronous>, transform_indices = @transform_9, window_bounds = array<i64: 3, 32, 24>}, {pipeline_mode = #tpu.pipeline_mode<synchronous>, transform_indices = @transform_10, window_bounds = array<i64: 1, 24>}, {pipeline_mode = #tpu.pipeline_mode<synchronous>, transform_indices = @transform_11, window_bounds = array<i64: 4, 13>}, {transform_indices = @transform_12, window_bounds = array<i64: 4, 12>}]} {
    %c0 = arith.constant 0 : index
    %c0_0 = arith.constant 0 : index
    %0 = vector.load %arg1[%c0, %c0_0] : memref<88x66xf32, #tpu.memory_space<vmem>>, vector<88x66xf32>
    %c0_1 = arith.constant 0 : index
    %c0_2 = arith.constant 0 : index
    %1 = vector.load %arg3[%c0_1, %c0_2] : memref<1x80xf32, #tpu.memory_space<vmem>>, vector<1x80xf32>
    %2 = vector.extract_strided_slice %0 {offsets = [0, 0], sizes = [86, 66], strides = [1, 1]} : vector<88x66xf32> to vector<86x66xf32>
    %c0_3 = arith.constant 0 : index
    %c0_4 = arith.constant 0 : index
    %c0_5 = arith.constant 0 : index
    %3 = vector.load %arg2[%c0_3, %c0_4, %c0_5] : memref<3x66x80xf32, #tpu.memory_space<vmem>>, vector<1x66x80xf32>
    %4 = vector.shape_cast %3 : vector<1x66x80xf32> to vector<66x80xf32>
    %cst = arith.constant dense<0.000000e+00> : vector<86x80xf32>
    %5 = tpu.matmul %2, %4, %cst {dimension_numbers = #tpu.dot_dimension_numbers<[1], [0], [0], [1], [0, 0, 1, 1], [], []>, precision = #tpu.contract_precision<fp32>} : vector<86x66xf32>, vector<66x80xf32>, vector<86x80xf32> -> vector<86x80xf32>
    %6 = vector.extract_strided_slice %0 {offsets = [1, 0], sizes = [86, 66], strides = [1, 1]} : vector<88x66xf32> to vector<86x66xf32>
    %c1 = arith.constant 1 : index
    %c0_6 = arith.constant 0 : index
    %c0_7 = arith.constant 0 : index
    %7 = vector.load %arg2[%c1, %c0_6, %c0_7] : memref<3x66x80xf32, #tpu.memory_space<vmem>>, vector<1x66x80xf32>
    %8 = vector.shape_cast %7 : vector<1x66x80xf32> to vector<66x80xf32>
    %cst_8 = arith.constant dense<0.000000e+00> : vector<86x80xf32>
    %9 = tpu.matmul %6, %8, %cst_8 {dimension_numbers = #tpu.dot_dimension_numbers<[1], [0], [0], [1], [0, 0, 1, 1], [], []>, precision = #tpu.contract_precision<fp32>} : vector<86x66xf32>, vector<66x80xf32>, vector<86x80xf32> -> vector<86x80xf32>
    %10 = arith.addf %5, %9 : vector<86x80xf32>
    %11 = vector.extract_strided_slice %0 {offsets = [2, 0], sizes = [86, 66], strides = [1, 1]} : vector<88x66xf32> to vector<86x66xf32>
    %c2 = arith.constant 2 : index
    %c0_9 = arith.constant 0 : index
    %c0_10 = arith.constant 0 : index
    %12 = vector.load %arg2[%c2, %c0_9, %c0_10] : memref<3x66x80xf32, #tpu.memory_space<vmem>>, vector<1x66x80xf32>
    %13 = vector.shape_cast %12 : vector<1x66x80xf32> to vector<66x80xf32>
    %cst_11 = arith.constant dense<0.000000e+00> : vector<86x80xf32>
    %14 = tpu.matmul %11, %13, %cst_11 {dimension_numbers = #tpu.dot_dimension_numbers<[1], [0], [0], [1], [0, 0, 1, 1], [], []>, precision = #tpu.contract_precision<fp32>} : vector<86x66xf32>, vector<66x80xf32>, vector<86x80xf32> -> vector<86x80xf32>
    %15 = arith.addf %10, %14 : vector<86x80xf32>
    %16 = vector.broadcast %1 : vector<1x80xf32> to vector<86x80xf32>
    %17 = arith.addf %15, %16 : vector<86x80xf32>
    %c0_12 = arith.constant 0 : index
    %c0_13 = arith.constant 0 : index
    %18 = vector.load %arg4[%c0_12, %c0_13] : memref<40x85xf32, #tpu.memory_space<vmem>>, vector<40x85xf32>
    %c0_14 = arith.constant 0 : index
    %c0_15 = arith.constant 0 : index
    %19 = vector.load %arg5[%c0_14, %c0_15] : memref<76x40xf32, #tpu.memory_space<vmem>>, vector<76x40xf32>
    %20 = vector.extract_strided_slice %17 {offsets = [0, 0], sizes = [85, 80], strides = [1, 1]} : vector<86x80xf32> to vector<85x80xf32>
    %21 = vector.extract_strided_slice %17 {offsets = [1, 0], sizes = [85, 80], strides = [1, 1]} : vector<86x80xf32> to vector<85x80xf32>
    %22 = arith.maximumf %20, %21 : vector<85x80xf32>
    %cst_16 = arith.constant dense<0.000000e+00> : vector<40x80xf32>
    %23 = tpu.matmul %18, %22, %cst_16 {dimension_numbers = #tpu.dot_dimension_numbers<[1], [0], [0], [1], [0, 0, 1, 1], [], []>, precision = #tpu.contract_precision<fp32>} : vector<40x85xf32>, vector<85x80xf32>, vector<40x80xf32> -> vector<40x80xf32>
    %24 = vector.extract_strided_slice %23 {offsets = [0, 0], sizes = [40, 76], strides = [1, 1]} : vector<40x80xf32> to vector<40x76xf32>
    %25 = vector.extract_strided_slice %23 {offsets = [0, 4], sizes = [40, 76], strides = [1, 1]} : vector<40x80xf32> to vector<40x76xf32>
    %26 = arith.maximumf %24, %25 : vector<40x76xf32>
    %cst_17 = arith.constant dense<0.000000e+00> : vector<40x40xf32>
    %27 = tpu.matmul %26, %19, %cst_17 {dimension_numbers = #tpu.dot_dimension_numbers<[1], [0], [0], [1], [0, 0, 1, 1], [], []>, precision = #tpu.contract_precision<fp32>} : vector<40x76xf32>, vector<76x40xf32>, vector<40x40xf32> -> vector<40x40xf32>
    %cst_18 = arith.constant 5.000000e-01 : f32
    %28 = vector.broadcast %cst_18 : f32 to vector<40x40xf32>
    %29 = arith.mulf %28, %27 : vector<40x40xf32>
    %cst_19 = arith.constant 0.707106769 : f32
    %30 = vector.broadcast %cst_19 : f32 to vector<40x40xf32>
    %31 = arith.mulf %27, %30 : vector<40x40xf32>
    %32 = math.erf %31 : vector<40x40xf32>
    %cst_20 = arith.constant 1.000000e+00 : f32
    %33 = vector.broadcast %cst_20 : f32 to vector<40x40xf32>
    %34 = arith.addf %33, %32 : vector<40x40xf32>
    %35 = arith.mulf %29, %34 : vector<40x40xf32>
    %c0_21 = arith.constant 0 : index
    %c0_22 = arith.constant 0 : index
    %36 = vector.load %arg7[%c0_21, %c0_22] : memref<1x64xf32, #tpu.memory_space<vmem>>, vector<1x64xf32>
    %37 = vector.extract_strided_slice %35 {offsets = [0, 0], sizes = [38, 40], strides = [1, 1]} : vector<40x40xf32> to vector<38x40xf32>
    %c0_23 = arith.constant 0 : index
    %c0_24 = arith.constant 0 : index
    %c0_25 = arith.constant 0 : index
    %38 = vector.load %arg6[%c0_23, %c0_24, %c0_25] : memref<3x40x64xf32, #tpu.memory_space<vmem>>, vector<1x40x64xf32>
    %39 = vector.shape_cast %38 : vector<1x40x64xf32> to vector<40x64xf32>
    %cst_26 = arith.constant dense<0.000000e+00> : vector<38x64xf32>
    %40 = tpu.matmul %37, %39, %cst_26 {dimension_numbers = #tpu.dot_dimension_numbers<[1], [0], [0], [1], [0, 0, 1, 1], [], []>, precision = #tpu.contract_precision<fp32>} : vector<38x40xf32>, vector<40x64xf32>, vector<38x64xf32> -> vector<38x64xf32>
    %41 = vector.extract_strided_slice %35 {offsets = [1, 0], sizes = [38, 40], strides = [1, 1]} : vector<40x40xf32> to vector<38x40xf32>
    %c1_27 = arith.constant 1 : index
    %c0_28 = arith.constant 0 : index
    %c0_29 = arith.constant 0 : index
    %42 = vector.load %arg6[%c1_27, %c0_28, %c0_29] : memref<3x40x64xf32, #tpu.memory_space<vmem>>, vector<1x40x64xf32>
    %43 = vector.shape_cast %42 : vector<1x40x64xf32> to vector<40x64xf32>
    %cst_30 = arith.constant dense<0.000000e+00> : vector<38x64xf32>
    %44 = tpu.matmul %41, %43, %cst_30 {dimension_numbers = #tpu.dot_dimension_numbers<[1], [0], [0], [1], [0, 0, 1, 1], [], []>, precision = #tpu.contract_precision<fp32>} : vector<38x40xf32>, vector<40x64xf32>, vector<38x64xf32> -> vector<38x64xf32>
    %45 = arith.addf %40, %44 : vector<38x64xf32>
    %46 = vector.extract_strided_slice %35 {offsets = [2, 0], sizes = [38, 40], strides = [1, 1]} : vector<40x40xf32> to vector<38x40xf32>
    %c2_31 = arith.constant 2 : index
    %c0_32 = arith.constant 0 : index
    %c0_33 = arith.constant 0 : index
    %47 = vector.load %arg6[%c2_31, %c0_32, %c0_33] : memref<3x40x64xf32, #tpu.memory_space<vmem>>, vector<1x40x64xf32>
    %48 = vector.shape_cast %47 : vector<1x40x64xf32> to vector<40x64xf32>
    %cst_34 = arith.constant dense<0.000000e+00> : vector<38x64xf32>
    %49 = tpu.matmul %46, %48, %cst_34 {dimension_numbers = #tpu.dot_dimension_numbers<[1], [0], [0], [1], [0, 0, 1, 1], [], []>, precision = #tpu.contract_precision<fp32>} : vector<38x40xf32>, vector<40x64xf32>, vector<38x64xf32> -> vector<38x64xf32>
    %50 = arith.addf %45, %49 : vector<38x64xf32>
    %51 = vector.broadcast %36 : vector<1x64xf32> to vector<38x64xf32>
    %52 = arith.addf %50, %51 : vector<38x64xf32>
    %c0_35 = arith.constant 0 : index
    %c0_36 = arith.constant 0 : index
    %53 = vector.load %arg8[%c0_35, %c0_36] : memref<16x37xf32, #tpu.memory_space<vmem>>, vector<16x37xf32>
    %c0_37 = arith.constant 0 : index
    %c0_38 = arith.constant 0 : index
    %54 = vector.load %arg9[%c0_37, %c0_38] : memref<56x32xf32, #tpu.memory_space<vmem>>, vector<56x32xf32>
    %55 = vector.extract_strided_slice %52 {offsets = [0, 0], sizes = [37, 64], strides = [1, 1]} : vector<38x64xf32> to vector<37x64xf32>
    %56 = vector.extract_strided_slice %52 {offsets = [1, 0], sizes = [37, 64], strides = [1, 1]} : vector<38x64xf32> to vector<37x64xf32>
    %57 = arith.maximumf %55, %56 : vector<37x64xf32>
    %cst_39 = arith.constant dense<0.000000e+00> : vector<16x64xf32>
    %58 = tpu.matmul %53, %57, %cst_39 {dimension_numbers = #tpu.dot_dimension_numbers<[1], [0], [0], [1], [0, 0, 1, 1], [], []>, precision = #tpu.contract_precision<fp32>} : vector<16x37xf32>, vector<37x64xf32>, vector<16x64xf32> -> vector<16x64xf32>
    %59 = vector.extract_strided_slice %58 {offsets = [0, 0], sizes = [16, 56], strides = [1, 1]} : vector<16x64xf32> to vector<16x56xf32>
    %60 = vector.extract_strided_slice %58 {offsets = [0, 8], sizes = [16, 56], strides = [1, 1]} : vector<16x64xf32> to vector<16x56xf32>
    %61 = arith.maximumf %59, %60 : vector<16x56xf32>
    %cst_40 = arith.constant dense<0.000000e+00> : vector<16x32xf32>
    %62 = tpu.matmul %61, %54, %cst_40 {dimension_numbers = #tpu.dot_dimension_numbers<[1], [0], [0], [1], [0, 0, 1, 1], [], []>, precision = #tpu.contract_precision<fp32>} : vector<16x56xf32>, vector<56x32xf32>, vector<16x32xf32> -> vector<16x32xf32>
    %cst_41 = arith.constant 5.000000e-01 : f32
    %63 = vector.broadcast %cst_41 : f32 to vector<16x32xf32>
    %64 = arith.mulf %63, %62 : vector<16x32xf32>
    %cst_42 = arith.constant 0.707106769 : f32
    %65 = vector.broadcast %cst_42 : f32 to vector<16x32xf32>
    %66 = arith.mulf %62, %65 : vector<16x32xf32>
    %67 = math.erf %66 : vector<16x32xf32>
    %cst_43 = arith.constant 1.000000e+00 : f32
    %68 = vector.broadcast %cst_43 : f32 to vector<16x32xf32>
    %69 = arith.addf %68, %67 : vector<16x32xf32>
    %70 = arith.mulf %64, %69 : vector<16x32xf32>
    %c0_44 = arith.constant 0 : index
    %c0_45 = arith.constant 0 : index
    %71 = vector.load %arg11[%c0_44, %c0_45] : memref<1x24xf32, #tpu.memory_space<vmem>>, vector<1x24xf32>
    %72 = vector.extract_strided_slice %70 {offsets = [0, 0], sizes = [14, 32], strides = [1, 1]} : vector<16x32xf32> to vector<14x32xf32>
    %c0_46 = arith.constant 0 : index
    %c0_47 = arith.constant 0 : index
    %c0_48 = arith.constant 0 : index
    %73 = vector.load %arg10[%c0_46, %c0_47, %c0_48] : memref<3x32x24xf32, #tpu.memory_space<vmem>>, vector<1x32x24xf32>
    %74 = vector.shape_cast %73 : vector<1x32x24xf32> to vector<32x24xf32>
    %cst_49 = arith.constant dense<0.000000e+00> : vector<14x24xf32>
    %75 = tpu.matmul %72, %74, %cst_49 {dimension_numbers = #tpu.dot_dimension_numbers<[1], [0], [0], [1], [0, 0, 1, 1], [], []>, precision = #tpu.contract_precision<fp32>} : vector<14x32xf32>, vector<32x24xf32>, vector<14x24xf32> -> vector<14x24xf32>
    %76 = vector.extract_strided_slice %70 {offsets = [1, 0], sizes = [14, 32], strides = [1, 1]} : vector<16x32xf32> to vector<14x32xf32>
    %c1_50 = arith.constant 1 : index
    %c0_51 = arith.constant 0 : index
    %c0_52 = arith.constant 0 : index
    %77 = vector.load %arg10[%c1_50, %c0_51, %c0_52] : memref<3x32x24xf32, #tpu.memory_space<vmem>>, vector<1x32x24xf32>
    %78 = vector.shape_cast %77 : vector<1x32x24xf32> to vector<32x24xf32>
    %cst_53 = arith.constant dense<0.000000e+00> : vector<14x24xf32>
    %79 = tpu.matmul %76, %78, %cst_53 {dimension_numbers = #tpu.dot_dimension_numbers<[1], [0], [0], [1], [0, 0, 1, 1], [], []>, precision = #tpu.contract_precision<fp32>} : vector<14x32xf32>, vector<32x24xf32>, vector<14x24xf32> -> vector<14x24xf32>
    %80 = arith.addf %75, %79 : vector<14x24xf32>
    %81 = vector.extract_strided_slice %70 {offsets = [2, 0], sizes = [14, 32], strides = [1, 1]} : vector<16x32xf32> to vector<14x32xf32>
    %c2_54 = arith.constant 2 : index
    %c0_55 = arith.constant 0 : index
    %c0_56 = arith.constant 0 : index
    %82 = vector.load %arg10[%c2_54, %c0_55, %c0_56] : memref<3x32x24xf32, #tpu.memory_space<vmem>>, vector<1x32x24xf32>
    %83 = vector.shape_cast %82 : vector<1x32x24xf32> to vector<32x24xf32>
    %cst_57 = arith.constant dense<0.000000e+00> : vector<14x24xf32>
    %84 = tpu.matmul %81, %83, %cst_57 {dimension_numbers = #tpu.dot_dimension_numbers<[1], [0], [0], [1], [0, 0, 1, 1], [], []>, precision = #tpu.contract_precision<fp32>} : vector<14x32xf32>, vector<32x24xf32>, vector<14x24xf32> -> vector<14x24xf32>
    %85 = arith.addf %80, %84 : vector<14x24xf32>
    %86 = vector.broadcast %71 : vector<1x24xf32> to vector<14x24xf32>
    %87 = arith.addf %85, %86 : vector<14x24xf32>
    %88 = vector.extract_strided_slice %87 {offsets = [0, 0], sizes = [13, 24], strides = [1, 1]} : vector<14x24xf32> to vector<13x24xf32>
    %89 = vector.extract_strided_slice %87 {offsets = [1, 0], sizes = [13, 24], strides = [1, 1]} : vector<14x24xf32> to vector<13x24xf32>
    %90 = arith.maximumf %88, %89 : vector<13x24xf32>
    %c0_58 = arith.constant 0 : index
    %c0_59 = arith.constant 0 : index
    %91 = vector.load %arg12[%c0_58, %c0_59] : memref<4x13xf32, #tpu.memory_space<vmem>>, vector<4x13xf32>
    %cst_60 = arith.constant dense<0.000000e+00> : vector<4x24xf32>
    %92 = tpu.matmul %91, %90, %cst_60 {dimension_numbers = #tpu.dot_dimension_numbers<[1], [0], [0], [1], [0, 0, 1, 1], [], []>, precision = #tpu.contract_precision<fp32>} : vector<4x13xf32>, vector<13x24xf32>, vector<4x24xf32> -> vector<4x24xf32>
    %93 = vector.extract_strided_slice %92 {offsets = [0, 0], sizes = [4, 12], strides = [1, 1]} : vector<4x24xf32> to vector<4x12xf32>
    %94 = vector.extract_strided_slice %92 {offsets = [0, 12], sizes = [4, 12], strides = [1, 1]} : vector<4x24xf32> to vector<4x12xf32>
    %95 = arith.maximumf %93, %94 : vector<4x12xf32>
    %cst_61 = arith.constant 5.000000e-01 : f32
    %96 = vector.broadcast %cst_61 : f32 to vector<4x12xf32>
    %97 = arith.mulf %96, %95 : vector<4x12xf32>
    %cst_62 = arith.constant 0.707106769 : f32
    %98 = vector.broadcast %cst_62 : f32 to vector<4x12xf32>
    %99 = arith.mulf %95, %98 : vector<4x12xf32>
    %100 = math.erf %99 : vector<4x12xf32>
    %cst_63 = arith.constant 1.000000e+00 : f32
    %101 = vector.broadcast %cst_63 : f32 to vector<4x12xf32>
    %102 = arith.addf %101, %100 : vector<4x12xf32>
    %103 = arith.mulf %97, %102 : vector<4x12xf32>
    %c0_64 = arith.constant 0 : index
    %c0_65 = arith.constant 0 : index
    %104 = vector.load %arg13[%c0_64, %c0_65] : memref<4x12xf32, #tpu.memory_space<vmem>>, vector<4x12xf32>
    tpu.vector_store %arg13[%c0_64, %c0_65], %103 {strides = array<i32>} : memref<4x12xf32, #tpu.memory_space<vmem>>, vector<4x12xf32>,
    return
  }
  func.func @transform_0(%arg0: i32) -> (i32, i32) {
    %c0_i32 = arith.constant 0 : i32
    %c0_i32_0 = arith.constant 0 : i32
    return %arg0, %c0_i32 : i32, i32
  }
  func.func @transform_1(%arg0: i32) -> (i32, i32, i32) {
    %c0_i32 = arith.constant 0 : i32
    %c0_i32_0 = arith.constant 0 : i32
    %c0_i32_1 = arith.constant 0 : i32
    %c0_i32_2 = arith.constant 0 : i32
    return %c0_i32, %c0_i32_0, %c0_i32_1 : i32, i32, i32
  }
  func.func @transform_2(%arg0: i32) -> (i32, i32) {
    %c0_i32 = arith.constant 0 : i32
    %c0_i32_0 = arith.constant 0 : i32
    %c0_i32_1 = arith.constant 0 : i32
    return %c0_i32, %c0_i32_0 : i32, i32
  }
  func.func @transform_3(%arg0: i32) -> (i32, i32) {
    %c0_i32 = arith.constant 0 : i32
    %c0_i32_0 = arith.constant 0 : i32
    %c0_i32_1 = arith.constant 0 : i32
    return %c0_i32, %c0_i32_0 : i32, i32
  }
  func.func @transform_4(%arg0: i32) -> (i32, i32) {
    %c0_i32 = arith.constant 0 : i32
    %c0_i32_0 = arith.constant 0 : i32
    %c0_i32_1 = arith.constant 0 : i32
    return %c0_i32, %c0_i32_0 : i32, i32
  }
  func.func @transform_5(%arg0: i32) -> (i32, i32, i32) {
    %c0_i32 = arith.constant 0 : i32
    %c0_i32_0 = arith.constant 0 : i32
    %c0_i32_1 = arith.constant 0 : i32
    %c0_i32_2 = arith.constant 0 : i32
    return %c0_i32, %c0_i32_0, %c0_i32_1 : i32, i32, i32
  }
  func.func @transform_6(%arg0: i32) -> (i32, i32) {
    %c0_i32 = arith.constant 0 : i32
    %c0_i32_0 = arith.constant 0 : i32
    %c0_i32_1 = arith.constant 0 : i32
    return %c0_i32, %c0_i32_0 : i32, i32
  }
  func.func @transform_7(%arg0: i32) -> (i32, i32) {
    %c0_i32 = arith.constant 0 : i32
    %c0_i32_0 = arith.constant 0 : i32
    %c0_i32_1 = arith.constant 0 : i32
    return %c0_i32, %c0_i32_0 : i32, i32
  }
  func.func @transform_8(%arg0: i32) -> (i32, i32) {
    %c0_i32 = arith.constant 0 : i32
    %c0_i32_0 = arith.constant 0 : i32
    %c0_i32_1 = arith.constant 0 : i32
    return %c0_i32, %c0_i32_0 : i32, i32
  }
  func.func @transform_9(%arg0: i32) -> (i32, i32, i32) {
    %c0_i32 = arith.constant 0 : i32
    %c0_i32_0 = arith.constant 0 : i32
    %c0_i32_1 = arith.constant 0 : i32
    %c0_i32_2 = arith.constant 0 : i32
    return %c0_i32, %c0_i32_0, %c0_i32_1 : i32, i32, i32
  }
  func.func @transform_10(%arg0: i32) -> (i32, i32) {
    %c0_i32 = arith.constant 0 : i32
    %c0_i32_0 = arith.constant 0 : i32
    %c0_i32_1 = arith.constant 0 : i32
    return %c0_i32, %c0_i32_0 : i32, i32
  }
  func.func @transform_11(%arg0: i32) -> (i32, i32) {
    %c0_i32 = arith.constant 0 : i32
    %c0_i32_0 = arith.constant 0 : i32
    %c0_i32_1 = arith.constant 0 : i32
    return %c0_i32, %c0_i32_0 : i32, i32
  }
  func.func @transform_12(%arg0: i32) -> (i32, i32) {
    %c0_i32 = arith.constant 0 : i32
    %c0_i32_0 = arith.constant 0 : i32
    return %arg0, %c0_i32 : i32, i32
  }
}

</mosaic_0001>

<llo_original>
// kernel: tpu_custom_call.1
$region0: #{tpu_custom_call.1}
  #allocation0 [shape = 'u32[]', space=smem, size = 0x4, offset = 0x4, fixed_abs, tag = 'smem constant byte address 0x4 - core index']
  #allocation1 [shape = 'u32[72,128]{1,0:T(1,128)}', space=vmem, size = 0x9000, scoped, tag = 'internal scratch']
  %s0 = inlined_call_operand.vmem [shape: f32[88,66], index: 0, kind: input, shape index: {}]
  %s1 = inlined_call_operand.vmem [shape: f32[3,66,80], index: 1, kind: input, shape index: {}]
  %s2 = inlined_call_operand.vmem [shape: f32[1,80], index: 2, kind: input, shape index: {}]
  %s3 = inlined_call_operand.vmem [shape: f32[40,85], index: 3, kind: input, shape index: {}]
  %s4 = inlined_call_operand.vmem [shape: f32[76,40], index: 4, kind: input, shape index: {}]
  %s5 = inlined_call_operand.hbm [shape: f32[3,40,64], index: 5, kind: input, shape index: {}]
  %s6 = inlined_call_operand.vmem [shape: f32[1,64], index: 6, kind: input, shape index: {}]
  %s7 = inlined_call_operand.vmem [shape: f32[16,37], index: 7, kind: input, shape index: {}]
  %s8 = inlined_call_operand.vmem [shape: f32[56,32], index: 8, kind: input, shape index: {}]
  %s9 = inlined_call_operand.vmem [shape: f32[3,32,24], index: 9, kind: input, shape index: {}]
  %s10 = inlined_call_operand.vmem [shape: f32[1,24], index: 10, kind: input, shape index: {}]
  %s11 = inlined_call_operand.vmem [shape: f32[4,13], index: 11, kind: input, shape index: {}]
  %s12 = inlined_call_operand.hbm [shape: f32[4,12], index: 12, kind: output, shape index: {}]
  %s13 = sld [smem:[#allocation0]]
  $region62: #{tpu_custom_call.1} parent=0
    _
  %s15 = ssub.s32 1, %s13
  %s16 = scalar_select 0, %s15, %s13
  $region1: #{tpu_custom_call.1} parent=0
    #allocation2 [shape = 'u8[61440]{0}', space=vmem, size = 0xf000, scoped, tag = 'input window, operand 5, single buffered']
    #allocation3 [shape = 's32[1]{0}', space=sflag, size = 0x4, scoped, tag = 'scoped memory for tpu_custom_call.1']
    #allocation4 [shape = 's32[1]{0}', space=sflag, size = 0x4, scoped, tag = 'scoped memory for tpu_custom_call.1']
    #allocation5 [shape = 'u8[2048]{0}', space=vmem, size = 0x800, scoped, tag = 'output window, operand 0, single buffered']
    %17 = vsyncpa [#allocation3], 0
    %18 = vsyncpa [#allocation4], 0
    // Predicated region
    $region2: #{tpu_custom_call.1} parent=1 // pred_check
      _
    $region3: #{tpu_custom_call.1} parent=1 // pred_check_branch
      %20 = sbr.rel (0) target = $region5
    $region4: #{tpu_custom_call.1} parent=1 // pred_region
      _
    $region5: #{tpu_custom_call.1} parent=1 // pred_fallthru
      _
    // Predicated region
    $region6: #{tpu_custom_call.1} parent=1 // pred_check
      _
    $region7: #{tpu_custom_call.1} parent=1 // pred_check_branch
      %22 = sbr.rel (0) target = $region9
    $region8: #{tpu_custom_call.1} parent=1 // pred_region
      _
    $region9: #{tpu_custom_call.1} parent=1 // pred_fallthru
      _
    // Predicated region
    $region10: #{tpu_custom_call.1} parent=1 // pred_check
      _
    $region11: #{tpu_custom_call.1} parent=1 // pred_check_branch
      %24 = sbr.rel (0) target = $region13
    $region12: #{tpu_custom_call.1} parent=1 // pred_region
      _
    $region13: #{tpu_custom_call.1} parent=1 // pred_fallthru
      _
    // Predicated region
    $region14: #{tpu_custom_call.1} parent=1 // pred_check
      _
    $region15: #{tpu_custom_call.1} parent=1 // pred_check_branch
      %26 = sbr.rel (0) target = $region17
    $region16: #{tpu_custom_call.1} parent=1 // pred_region
      _
    $region17: #{tpu_custom_call.1} parent=1 // pred_fallthru
      _
    // Predicated region
    $region18: #{tpu_custom_call.1} parent=1 // pred_check
      _
    $region19: #{tpu_custom_call.1} parent=1 // pred_check_branch
      %28 = sbr.rel (0) target = $region21
    $region20: #{tpu_custom_call.1} parent=1 // pred_region
      _
    $region21: #{tpu_custom_call.1} parent=1 // pred_fallthru
      _
    // Predicated region
    $region22: #{tpu_custom_call.1} parent=1 // pred_check
      _
    $region23: #{tpu_custom_call.1} parent=1 // pred_check_branch
      %30 = sbr.rel (0) target = $region25
    $region24: #{tpu_custom_call.1} parent=1 // pred_region
      %32 = vsyncadd [#allocation3], 0
      %s33 = sshll.u32 %s5, 4
      %s34 = int_to_ptr.hbm [resolvable:$true] %s33
      %s35 = sshll.u32 [#allocation2], 4
      %s36 = int_to_ptr.vmem [resolvable:$true] %s35
      %41 = dma.hbm_to_vmem [thread:$0]  %s34, 1920, %s36, [#allocation3], 128, 128, 8
    $region25: #{tpu_custom_call.1} parent=1 // pred_fallthru
      _
    // Predicated region
    $region26: #{tpu_custom_call.1} parent=1 // pred_check
      _
    $region27: #{tpu_custom_call.1} parent=1 // pred_check_branch
      %43 = sbr.rel (0) target = $region29
    $region28: #{tpu_custom_call.1} parent=1 // pred_region
      _
    $region29: #{tpu_custom_call.1} parent=1 // pred_fallthru
      _
    // Predicated region
    $region30: #{tpu_custom_call.1} parent=1 // pred_check
      _
    $region31: #{tpu_custom_call.1} parent=1 // pred_check_branch
      %45 = sbr.rel (0) target = $region33
    $region32: #{tpu_custom_call.1} parent=1 // pred_region
      _
    $region33: #{tpu_custom_call.1} parent=1 // pred_fallthru
      _
    // Predicated region
    $region34: #{tpu_custom_call.1} parent=1 // pred_check
      _
    $region35: #{tpu_custom_call.1} parent=1 // pred_check_branch
      %47 = sbr.rel (0) target = $region37
    $region36: #{tpu_custom_call.1} parent=1 // pred_region
      _
    $region37: #{tpu_custom_call.1} parent=1 // pred_fallthru
      _
    // Predicated region
    $region38: #{tpu_custom_call.1} parent=1 // pred_check
      _
    $region39: #{tpu_custom_call.1} parent=1 // pred_check_branch
      %49 = sbr.rel (0) target = $region41
    $region40: #{tpu_custom_call.1} parent=1 // pred_region
      _
    $region41: #{tpu_custom_call.1} parent=1 // pred_fallthru
      _
    // Predicated region
    $region42: #{tpu_custom_call.1} parent=1 // pred_check
      _
    $region43: #{tpu_custom_call.1} parent=1 // pred_check_branch
      %51 = sbr.rel (0) target = $region45
    $region44: #{tpu_custom_call.1} parent=1 // pred_region
      _
    $region45: #{tpu_custom_call.1} parent=1 // pred_fallthru
      _
    // Predicated region
    $region46: #{tpu_custom_call.1} parent=1 // pred_check
      _
    $region47: #{tpu_custom_call.1} parent=1 // pred_check_branch
      %53 = sbr.rel (0) target = $region49
    $region48: #{tpu_custom_call.1} parent=1 // pred_region
      _
    $region49: #{tpu_custom_call.1} parent=1 // pred_fallthru
      _
    // Predicated region
    $region50: #{tpu_custom_call.1} parent=1 // pred_check
      _
    $region51: #{tpu_custom_call.1} parent=1 // pred_check_branch
      %55 = sbr.rel (0) target = $region53
    $region52: #{tpu_custom_call.1} parent=1 // pred_region
      %57 = dma.done [#allocation3], 1920
    $region53: #{tpu_custom_call.1} parent=1 // pred_fallthru
      _
    %v58 = vld [vmem:[%s0] sm:$0xff]
    %v59 = vld [vmem:[%s0 + $0x8] sm:$0xff]
    %v60 = vld [vmem:[%s0 + $0x10] sm:$0xff]
    %v61 = vld [vmem:[%s0 + $0x18] sm:$0xff]
    %v62 = vld [vmem:[%s0 + $0x20] sm:$0xff]
    %v63 = vld [vmem:[%s0 + $0x28] sm:$0xff]
    %v64 = vld [vmem:[%s0 + $0x30] sm:$0xff]
    %v65 = vld [vmem:[%s0 + $0x38] sm:$0xff]
    %v66 = vld [vmem:[%s0 + $0x40] sm:$0xff]
    %v67 = vld [vmem:[%s0 + $0x48] sm:$0xff]
    %v68 = vld [vmem:[%s0 + $0x50] sm:$0xff]
    %v69 = vld [vmem:[%s2] sm:$0x1]
    %v70 = vld [vmem:[%s1] sm:$0xff]
    %v71 = vld [vmem:[%s1 + $0x8] sm:$0xff]
    %v72 = vld [vmem:[%s1 + $0x10] sm:$0xff]
    %v73 = vld [vmem:[%s1 + $0x18] sm:$0xff]
    %v74 = vld [vmem:[%s1 + $0x20] sm:$0xff]
    %v75 = vld [vmem:[%s1 + $0x28] sm:$0xff]
    %v76 = vld [vmem:[%s1 + $0x30] sm:$0xff]
    %v77 = vld [vmem:[%s1 + $0x38] sm:$0xff]
    %v78 = vld [vmem:[%s1 + $0x40] sm:$0x3]
    %s79 = scalar_lea.vmem %s1, 72
    %v80 = vld [vmem:[%s79] sm:$0xff]
    %v81 = vld [vmem:[%s79 + $0x8] sm:$0xff]
    %v82 = vld [vmem:[%s79 + $0x10] sm:$0xff]
    %v83 = vld [vmem:[%s79 + $0x18] sm:$0xff]
    %v84 = vld [vmem:[%s79 + $0x20] sm:$0xff]
    %v85 = vld [vmem:[%s79 + $0x28] sm:$0xff]
    %v86 = vld [vmem:[%s79 + $0x30] sm:$0xff]
    %v87 = vld [vmem:[%s79 + $0x38] sm:$0xff]
    %v88 = vld [vmem:[%s79 + $0x40] sm:$0x3]
    %vm100 = vcmask 1046528
    %v101 = vrot.slane %v58, 1
    %v102 = vrot.slane %v59, 1
    %v103 = vsel %vm100, %v101, %v102
    %v104 = vrot.slane %v60, 1
    %v105 = vsel %vm100, %v102, %v104
    %v106 = vrot.slane %v61, 1
    %v107 = vsel %vm100, %v104, %v106
    %v108 = vrot.slane %v62, 1
    %v109 = vsel %vm100, %v106, %v108
    %v110 = vrot.slane %v63, 1
    %v111 = vsel %vm100, %v108, %v110
    %v112 = vrot.slane %v64, 1
    %v113 = vsel %vm100, %v110, %v112
    %v114 = vrot.slane %v65, 1
    %v115 = vsel %vm100, %v112, %v114
    %v116 = vrot.slane %v66, 1
    %v117 = vsel %vm100, %v114, %v116
    %v118 = vrot.slane %v67, 1
    %v119 = vsel %vm100, %v116, %v118
    %v120 = vrot.slane %v68, 1
    %v121 = vsel %vm100, %v118, %v120
    %vm122 = vcmask 539648
    %v123 = vsel %vm122, %v103, 0
    %v125 = vsel %vm122, %v105, 0
    %v127 = vsel %vm122, %v107, 0
    %v129 = vsel %vm122, %v109, 0
    %v131 = vsel %vm122, %v111, 0
    %v133 = vsel %vm122, %v113, 0
    %v135 = vsel %vm122, %v115, 0
    %v137 = vsel %vm122, %v117, 0
    %v139 = vsel %vm122, %v119, 0
    %v141 = vsel %vm122, %v121, 0
    %v143 = vsel %vm122, %v120, 0
    %vm145 = vcmask 1041408
    %v147 = vsel %vm145, %v88, 0
    %149 = vmatpush.msra.mxu0 0.0
    %150 = vmatpush.msra.mxu0 0.0
    %151 = vmatpush.msra.mxu0 0.0
    %152 = vmatpush.msra.mxu0 0.0
    %153 = vmatpush.msra.mxu0 0.0
    %154 = vmatpush.msra.mxu0 0.0
    %155 = vmatpush.msra.mxu0 0.0
    %v156 = vand.u32 %v147, 4294901760
    %157 = vmatpush.msra.mxu0 %v156
    %v158 = vand.u32 %v87, 4294901760
    %159 = vmatpush.msra.mxu0 %v158
    %v160 = vand.u32 %v86, 4294901760
    %161 = vmatpush.msra.mxu0 %v160
    %v162 = vand.u32 %v85, 4294901760
    %163 = vmatpush.msra.mxu0 %v162
    %v164 = vand.u32 %v84, 4294901760
    %165 = vmatpush.msra.mxu0 %v164
    %v166 = vand.u32 %v83, 4294901760
    %167 = vmatpush.msra.mxu0 %v166
    %v168 = vand.u32 %v82, 4294901760
    %169 = vmatpush.msra.mxu0 %v168
    %v170 = vand.u32 %v81, 4294901760
    %171 = vmatpush.msra.mxu0 %v170
    %v172 = vand.u32 %v80, 4294901760
    %173 = vmatpush.msra.mxu0 %v172
    %v174 = vand.u32 %v123, 4294901760
    %v175 = vsub.f32 %v123, %v174
    %v176 = vand.u32 %v175, 4294901760
    %v177 = vsub.f32 %v175, %v176
    %v178 = vand.u32 %v177, 4294901760
    %179 = vmatmul.f32.gmra.mxu0 %v178
    %v180 = vpop.f32.mrf.mxu0
    %v181 = vadd.f32 0.0, %v180
    %v182 = vand.u32 %v125, 4294901760
    %v183 = vsub.f32 %v125, %v182
    %v184 = vand.u32 %v183, 4294901760
    %v185 = vsub.f32 %v183, %v184
    %v186 = vand.u32 %v185, 4294901760
    %187 = vmatmul.f32.gmra.mxu0 %v186
    %v188 = vpop.f32.mrf.mxu0
    %v189 = vadd.f32 0.0, %v188
    %v190 = vand.u32 %v127, 4294901760
    %v191 = vsub.f32 %v127, %v190
    %v192 = vand.u32 %v191, 4294901760
    %v193 = vsub.f32 %v191, %v192
    %v194 = vand.u32 %v193, 4294901760
    %195 = vmatmul.f32.gmra.mxu0 %v194
    %v196 = vpop.f32.mrf.mxu0
    %v197 = vadd.f32 0.0, %v196
    %v198 = vand.u32 %v129, 4294901760
    %v199 = vsub.f32 %v129, %v198
    %v200 = vand.u32 %v199, 4294901760
    %v201 = vsub.f32 %v199, %v200
    %v202 = vand.u32 %v201, 4294901760
    %203 = vmatmul.f32.gmra.mxu0 %v202
    %v204 = vpop.f32.mrf.mxu0
    %v205 = vadd.f32 0.0, %v204
    %v206 = vand.u32 %v131, 4294901760
    %v207 = vsub.f32 %v131, %v206
    %v208 = vand.u32 %v207, 4294901760
    %v209 = vsub.f32 %v207, %v208
    %v210 = vand.u32 %v209, 4294901760
    %211 = vmatmul.f32.gmra.mxu0 %v210
    %v212 = vpop.f32.mrf.mxu0
    %v213 = vadd.f32 0.0, %v212
    %v214 = vand.u32 %v133, 4294901760
    %v215 = vsub.f32 %v133, %v214
    %v216 = vand.u32 %v215, 4294901760
    %v217 = vsub.f32 %v215, %v216
    %v218 = vand.u32 %v217, 4294901760
    %219 = vmatmul.f32.gmra.mxu0 %v218
    %v220 = vpop.f32.mrf.mxu0
    %v221 = vadd.f32 0.0, %v220
    %v222 = vand.u32 %v135, 4294901760
    %v223 = vsub.f32 %v135, %v222
    %v224 = vand.u32 %v223, 4294901760
    %v225 = vsub.f32 %v223, %v224
    %v226 = vand.u32 %v225, 4294901760
    %227 = vmatmul.f32.gmra.mxu0 %v226
    %v228 = vpop.f32.mrf.mxu0
    %v229 = vadd.f32 0.0, %v228
    %v230 = vand.u32 %v137, 4294901760
    %v231 = vsub.f32 %v137, %v230
    %v232 = vand.u32 %v231, 4294901760
    %v233 = vsub.f32 %v231, %v232
    %v234 = vand.u32 %v233, 4294901760
    %235 = vmatmul.f32.gmra.mxu0 %v234
    %v236 = vpop.f32.mrf.mxu0
    %v237 = vadd.f32 0.0, %v236
    %v238 = vand.u32 %v139, 4294901760
    %v239 = vsub.f32 %v139, %v238
    %v240 = vand.u32 %v239, 4294901760
    %v241 = vsub.f32 %v239, %v240
    %v242 = vand.u32 %v241, 4294901760
    %243 = vmatmul.f32.gmra.mxu0 %v242
    %v244 = vpop.f32.mrf.mxu0
    %v245 = vadd.f32 0.0, %v244
    %v246 = vand.u32 %v141, 4294901760
    %v247 = vsub.f32 %v141, %v246
    %v248 = vand.u32 %v247, 4294901760
    %v249 = vsub.f32 %v247, %v248
    %v250 = vand.u32 %v249, 4294901760
    %251 = vmatmul.f32.gmra.mxu0 %v250
    %v252 = vpop.f32.mrf.mxu0
    %v253 = vadd.f32 0.0, %v252
    %v254 = vand.u32 %v143, 4294901760
    %v255 = vsub.f32 %v143, %v254
    %v256 = vand.u32 %v255, 4294901760
    %v257 = vsub.f32 %v255, %v256
    %v258 = vand.u32 %v257, 4294901760
    %259 = vmatmul.f32.gmra.mxu0 %v258
    %v260 = vpop.f32.mrf.mxu0
    %v261 = vadd.f32 0.0, %v260
    %262 = vdwg.mxu0
    %263 = vmatpush.msra.mxu0 0.0
    %264 = vmatpush.msra.mxu0 0.0
    %265 = vmatpush.msra.mxu0 0.0
    %266 = vmatpush.msra.mxu0 0.0
    %267 = vmatpush.msra.mxu0 0.0
    %268 = vmatpush.msra.mxu0 0.0
    %269 = vmatpush.msra.mxu0 0.0
    %v270 = vand.u32 %v147, 4294901760
    %v271 = vsub.f32 %v147, %v270
    %v272 = vand.u32 %v271, 4294901760
    %v273 = vsub.f32 %v271, %v272
    %v274 = vand.u32 %v273, 4294901760
    %275 = vmatpush.msra.mxu0 %v274
    %v276 = vand.u32 %v87, 4294901760
    %v277 = vsub.f32 %v87, %v276
    %v278 = vand.u32 %v277, 4294901760
    %v279 = vsub.f32 %v277, %v278
    %v280 = vand.u32 %v279, 4294901760
    %281 = vmatpush.msra.mxu0 %v280
    %v282 = vand.u32 %v86, 4294901760
    %v283 = vsub.f32 %v86, %v282
    %v284 = vand.u32 %v283, 4294901760
    %v285 = vsub.f32 %v283, %v284
    %v286 = vand.u32 %v285, 4294901760
    %287 = vmatpush.msra.mxu0 %v286
    %v288 = vand.u32 %v85, 4294901760
    %v289 = vsub.f32 %v85, %v288
    %v290 = vand.u32 %v289, 4294901760
    %v291 = vsub.f32 %v289, %v290
    %v292 = vand.u32 %v291, 4294901760
    %293 = vmatpush.msra.mxu0 %v292
    %v294 = vand.u32 %v84, 4294901760
    %v295 = vsub.f32 %v84, %v294
    %v296 = vand.u32 %v295, 4294901760
    %v297 = vsub.f32 %v295, %v296
    %v298 = vand.u32 %v297, 4294901760
    %299 = vmatpush.msra.mxu0 %v298
    %v300 = vand.u32 %v83, 4294901760
    %v301 = vsub.f32 %v83, %v300
    %v302 = vand.u32 %v301, 4294901760
    %v303 = vsub.f32 %v301, %v302
    %v304 = vand.u32 %v303, 4294901760
    %305 = vmatpush.msra.mxu0 %v304
    %v306 = vand.u32 %v82, 4294901760
    %v307 = vsub.f32 %v82, %v306
    %v308 = vand.u32 %v307, 4294901760
    %v309 = vsub.f32 %v307, %v308
    %v310 = vand.u32 %v309, 4294901760
    %311 = vmatpush.msra.mxu0 %v310
    %v312 = vand.u32 %v81, 4294901760
    %v313 = vsub.f32 %v81, %v312
    %v314 = vand.u32 %v313, 4294901760
    %v315 = vsub.f32 %v313, %v314
    %v316 = vand.u32 %v315, 4294901760
    %317 = vmatpush.msra.mxu0 %v316
    %v318 = vand.u32 %v80, 4294901760
    %v319 = vsub.f32 %v80, %v318
    %v320 = vand.u32 %v319, 4294901760
    %v321 = vsub.f32 %v319, %v320
    %v322 = vand.u32 %v321, 4294901760
    %323 = vmatpush.msra.mxu0 %v322
    %v324 = vand.u32 %v123, 4294901760
    %325 = vmatmul.f32.gmra.mxu0 %v324
    %v326 = vpop.f32.mrf.mxu0
    %v327 = vadd.f32 %v181, %v326
    %v328 = vand.u32 %v125, 4294901760
    %329 = vmatmul.f32.gmra.mxu0 %v328
    %v330 = vpop.f32.mrf.mxu0
    %v331 = vadd.f32 %v189, %v330
    %v332 = vand.u32 %v127, 4294901760
    %333 = vmatmul.f32.gmra.mxu0 %v332
    %v334 = vpop.f32.mrf.mxu0
    %v335 = vadd.f32 %v197, %v334
    %v336 = vand.u32 %v129, 4294901760
    %337 = vmatmul.f32.gmra.mxu0 %v336
    %v338 = vpop.f32.mrf.mxu0
    %v339 = vadd.f32 %v205, %v338
    %v340 = vand.u32 %v131, 4294901760
    %341 = vmatmul.f32.gmra.mxu0 %v340
    %v342 = vpop.f32.mrf.mxu0
    %v343 = vadd.f32 %v213, %v342
    %v344 = vand.u32 %v133, 4294901760
    %345 = vmatmul.f32.gmra.mxu0 %v344
    %v346 = vpop.f32.mrf.mxu0
    %v347 = vadd.f32 %v221, %v346
    %v348 = vand.u32 %v135, 4294901760
    %349 = vmatmul.f32.gmra.mxu0 %v348
    %v350 = vpop.f32.mrf.mxu0
    %v351 = vadd.f32 %v229, %v350
    %v352 = vand.u32 %v137, 4294901760
    %353 = vmatmul.f32.gmra.mxu0 %v352
    %v354 = vpop.f32.mrf.mxu0
    %v355 = vadd.f32 %v237, %v354
    %v356 = vand.u32 %v139, 4294901760
    %357 = vmatmul.f32.gmra.mxu0 %v356
    %v358 = vpop.f32.mrf.mxu0
    %v359 = vadd.f32 %v245, %v358
    %v360 = vand.u32 %v141, 4294901760
    %361 = vmatmul.f32.gmra.mxu0 %v360
    %v362 = vpop.f32.mrf.mxu0
    %v363 = vadd.f32 %v253, %v362
    %v364 = vand.u32 %v143, 4294901760
    %365 = vmatmul.f32.gmra.mxu0 %v364
    %v366 = vpop.f32.mrf.mxu0
    %v367 = vadd.f32 %v261, %v366
    %368 = vdwg.mxu0
    %369 = vmatpush.msra.mxu0 0.0
    %370 = vmatpush.msra.mxu0 0.0
    %371 = vmatpush.msra.mxu0 0.0
    %372 = vmatpush.msra.mxu0 0.0
    %373 = vmatpush.msra.mxu0 0.0
    %374 = vmatpush.msra.mxu0 0.0
    %375 = vmatpush.msra.mxu0 0.0
    %v376 = vand.u32 %v147, 4294901760
    %v377 = vsub.f32 %v147, %v376
    %378 = vmatpush.msra.mxu0 %v377
    %v379 = vand.u32 %v87, 4294901760
    %v380 = vsub.f32 %v87, %v379
    %381 = vmatpush.msra.mxu0 %v380
    %v382 = vand.u32 %v86, 4294901760
    %v383 = vsub.f32 %v86, %v382
    %384 = vmatpush.msra.mxu0 %v383
    %v385 = vand.u32 %v85, 4294901760
    %v386 = vsub.f32 %v85, %v385
    %387 = vmatpush.msra.mxu0 %v386
    %v388 = vand.u32 %v84, 4294901760
    %v389 = vsub.f32 %v84, %v388
    %390 = vmatpush.msra.mxu0 %v389
    %v391 = vand.u32 %v83, 4294901760
    %v392 = vsub.f32 %v83, %v391
    %393 = vmatpush.msra.mxu0 %v392
    %v394 = vand.u32 %v82, 4294901760
    %v395 = vsub.f32 %v82, %v394
    %396 = vmatpush.msra.mxu0 %v395
    %v397 = vand.u32 %v81, 4294901760
    %v398 = vsub.f32 %v81, %v397
    %399 = vmatpush.msra.mxu0 %v398
    %v400 = vand.u32 %v80, 4294901760
    %v401 = vsub.f32 %v80, %v400
    %402 = vmatpush.msra.mxu0 %v401
    %v403 = vand.u32 %v123, 4294901760
    %v404 = vsub.f32 %v123, %v403
    %405 = vmatmul.f32.gmra.mxu0 %v404
    %v406 = vpop.f32.mrf.mxu0
    %v407 = vadd.f32 %v327, %v406
    %v408 = vand.u32 %v125, 4294901760
    %v409 = vsub.f32 %v125, %v408
    %410 = vmatmul.f32.gmra.mxu0 %v409
    %v411 = vpop.f32.mrf.mxu0
    %v412 = vadd.f32 %v331, %v411
    %v413 = vand.u32 %v127, 4294901760
    %v414 = vsub.f32 %v127, %v413
    %415 = vmatmul.f32.gmra.mxu0 %v414
    %v416 = vpop.f32.mrf.mxu0
    %v417 = vadd.f32 %v335, %v416
    %v418 = vand.u32 %v129, 4294901760
    %v419 = vsub.f32 %v129, %v418
    %420 = vmatmul.f32.gmra.mxu0 %v419
    %v421 = vpop.f32.mrf.mxu0
    %v422 = vadd.f32 %v339, %v421
    %v423 = vand.u32 %v131, 4294901760
    %v424 = vsub.f32 %v131, %v423
    %425 = vmatmul.f32.gmra.mxu0 %v424
    %v426 = vpop.f32.mrf.mxu0
    %v427 = vadd.f32 %v343, %v426
    %v428 = vand.u32 %v133, 4294901760
    %v429 = vsub.f32 %v133, %v428
    %430 = vmatmul.f32.gmra.mxu0 %v429
    %v431 = vpop.f32.mrf.mxu0
    %v432 = vadd.f32 %v347, %v431
    %v433 = vand.u32 %v135, 4294901760
    %v434 = vsub.f32 %v135, %v433
    %435 = vmatmul.f32.gmra.mxu0 %v434
    %v436 = vpop.f32.mrf.mxu0
    %v437 = vadd.f32 %v351, %v436
    %v438 = vand.u32 %v137, 4294901760
    %v439 = vsub.f32 %v137, %v438
    %440 = vmatmul.f32.gmra.mxu0 %v439
    %v441 = vpop.f32.mrf.mxu0
    %v442 = vadd.f32 %v355, %v441
    %v443 = vand.u32 %v139, 4294901760
    %v444 = vsub.f32 %v139, %v443
    %445 = vmatmul.f32.gmra.mxu0 %v444
    %v446 = vpop.f32.mrf.mxu0
    %v447 = vadd.f32 %v359, %v446
    %v448 = vand.u32 %v141, 4294901760
    %v449 = vsub.f32 %v141, %v448
    %450 = vmatmul.f32.gmra.mxu0 %v449
    %v451 = vpop.f32.mrf.mxu0
    %v452 = vadd.f32 %v363, %v451
    %v453 = vand.u32 %v143, 4294901760
    %v454 = vsub.f32 %v143, %v453
    %455 = vmatmul.f32.gmra.mxu0 %v454
    %v456 = vpop.f32.mrf.mxu0
    %v457 = vadd.f32 %v367, %v456
    %458 = vdwg.mxu0
    %459 = vmatpush.msra.mxu0 0.0
    %460 = vmatpush.msra.mxu0 0.0
    %461 = vmatpush.msra.mxu0 0.0
    %462 = vmatpush.msra.mxu0 0.0
    %463 = vmatpush.msra.mxu0 0.0
    %464 = vmatpush.msra.mxu0 0.0
    %465 = vmatpush.msra.mxu0 0.0
    %v466 = vand.u32 %v147, 4294901760
    %467 = vmatpush.msra.mxu0 %v466
    %v468 = vand.u32 %v87, 4294901760
    %469 = vmatpush.msra.mxu0 %v468
    %v470 = vand.u32 %v86, 4294901760
    %471 = vmatpush.msra.mxu0 %v470
    %v472 = vand.u32 %v85, 4294901760
    %473 = vmatpush.msra.mxu0 %v472
    %v474 = vand.u32 %v84, 4294901760
    %475 = vmatpush.msra.mxu0 %v474
    %v476 = vand.u32 %v83, 4294901760
    %477 = vmatpush.msra.mxu0 %v476
    %v478 = vand.u32 %v82, 4294901760
    %479 = vmatpush.msra.mxu0 %v478
    %v480 = vand.u32 %v81, 4294901760
    %481 = vmatpush.msra.mxu0 %v480
    %v482 = vand.u32 %v80, 4294901760
    %483 = vmatpush.msra.mxu0 %v482
    %v484 = vand.u32 %v123, 4294901760
    %v485 = vsub.f32 %v123, %v484
    %v486 = vand.u32 %v485, 4294901760
    %487 = vmatmul.f32.gmra.mxu0 %v486
    %v488 = vpop.f32.mrf.mxu0
    %v489 = vadd.f32 %v407, %v488
    %v490 = vand.u32 %v125, 4294901760
    %v491 = vsub.f32 %v125, %v490
    %v492 = vand.u32 %v491, 4294901760
    %493 = vmatmul.f32.gmra.mxu0 %v492
    %v494 = vpop.f32.mrf.mxu0
    %v495 = vadd.f32 %v412, %v494
    %v496 = vand.u32 %v127, 4294901760
    %v497 = vsub.f32 %v127, %v496
    %v498 = vand.u32 %v497, 4294901760
    %499 = vmatmul.f32.gmra.mxu0 %v498
    %v500 = vpop.f32.mrf.mxu0
    %v501 = vadd.f32 %v417, %v500
    %v502 = vand.u32 %v129, 4294901760
    %v503 = vsub.f32 %v129, %v502
    %v504 = vand.u32 %v503, 4294901760
    %505 = vmatmul.f32.gmra.mxu0 %v504
    %v506 = vpop.f32.mrf.mxu0
    %v507 = vadd.f32 %v422, %v506
    %v508 = vand.u32 %v131, 4294901760
    %v509 = vsub.f32 %v131, %v508
    %v510 = vand.u32 %v509, 4294901760
    %511 = vmatmul.f32.gmra.mxu0 %v510
    %v512 = vpop.f32.mrf.mxu0
    %v513 = vadd.f32 %v427, %v512
    %v514 = vand.u32 %v133, 4294901760
    %v515 = vsub.f32 %v133, %v514
    %v516 = vand.u32 %v515, 4294901760
    %517 = vmatmul.f32.gmra.mxu0 %v516
    %v518 = vpop.f32.mrf.mxu0
    %v519 = vadd.f32 %v432, %v518
    %v520 = vand.u32 %v135, 4294901760
    %v521 = vsub.f32 %v135, %v520
    %v522 = vand.u32 %v521, 4294901760
    %523 = vmatmul.f32.gmra.mxu0 %v522
    %v524 = vpop.f32.mrf.mxu0
    %v525 = vadd.f32 %v437, %v524
    %v526 = vand.u32 %v137, 4294901760
    %v527 = vsub.f32 %v137, %v526
    %v528 = vand.u32 %v527, 4294901760
    %529 = vmatmul.f32.gmra.mxu0 %v528
    %v530 = vpop.f32.mrf.mxu0
    %v531 = vadd.f32 %v442, %v530
    %v532 = vand.u32 %v139, 4294901760
    %v533 = vsub.f32 %v139, %v532
    %v534 = vand.u32 %v533, 4294901760
    %535 = vmatmul.f32.gmra.mxu0 %v534
    %v536 = vpop.f32.mrf.mxu0
    %v537 = vadd.f32 %v447, %v536
    %v538 = vand.u32 %v141, 4294901760
    %v539 = vsub.f32 %v141, %v538
    %v540 = vand.u32 %v539, 4294901760
    %541 = vmatmul.f32.gmra.mxu0 %v540
    %v542 = vpop.f32.mrf.mxu0
    %v543 = vadd.f32 %v452, %v542
    %v544 = vand.u32 %v143, 4294901760
    %v545 = vsub.f32 %v143, %v544
    %v546 = vand.u32 %v545, 4294901760
    %547 = vmatmul.f32.gmra.mxu0 %v546
    %v548 = vpop.f32.mrf.mxu0
    %v549 = vadd.f32 %v457, %v548
    %550 = vdwg.mxu0
    %551 = vmatpush.msra.mxu0 0.0
    %552 = vmatpush.msra.mxu0 0.0
    %553 = vmatpush.msra.mxu0 0.0
    %554 = vmatpush.msra.mxu0 0.0
    %555 = vmatpush.msra.mxu0 0.0
    %556 = vmatpush.msra.mxu0 0.0
    %557 = vmatpush.msra.mxu0 0.0
    %v558 = vand.u32 %v147, 4294901760
    %v559 = vsub.f32 %v147, %v558
    %v560 = vand.u32 %v559, 4294901760
    %561 = vmatpush.msra.mxu0 %v560
    %v562 = vand.u32 %v87, 4294901760
    %v563 = vsub.f32 %v87, %v562
    %v564 = vand.u32 %v563, 4294901760
    %565 = vmatpush.msra.mxu0 %v564
    %v566 = vand.u32 %v86, 4294901760
    %v567 = vsub.f32 %v86, %v566
    %v568 = vand.u32 %v567, 4294901760
    %569 = vmatpush.msra.mxu0 %v568
    %v570 = vand.u32 %v85, 4294901760
    %v571 = vsub.f32 %v85, %v570
    %v572 = vand.u32 %v571, 4294901760
    %573 = vmatpush.msra.mxu0 %v572
    %v574 = vand.u32 %v84, 4294901760
    %v575 = vsub.f32 %v84, %v574
    %v576 = vand.u32 %v575, 4294901760
    %577 = vmatpush.msra.mxu0 %v576
    %v578 = vand.u32 %v83, 4294901760
    %v579 = vsub.f32 %v83, %v578
    %v580 = vand.u32 %v579, 4294901760
    %581 = vmatpush.msra.mxu0 %v580
    %v582 = vand.u32 %v82, 4294901760
    %v583 = vsub.f32 %v82, %v582
    %v584 = vand.u32 %v583, 4294901760
    %585 = vmatpush.msra.mxu0 %v584
    %v586 = vand.u32 %v81, 4294901760
    %v587 = vsub.f32 %v81, %v586
    %v588 = vand.u32 %v587, 4294901760
    %589 = vmatpush.msra.mxu0 %v588
    %v590 = vand.u32 %v80, 4294901760
    %v591 = vsub.f32 %v80, %v590
    %v592 = vand.u32 %v591, 4294901760
    %593 = vmatpush.msra.mxu0 %v592
    %v594 = vand.u32 %v123, 4294901760
    %595 = vmatmul.f32.gmra.mxu0 %v594
    %v596 = vpop.f32.mrf.mxu0
    %v597 = vadd.f32 %v489, %v596
    %v598 = vand.u32 %v125, 4294901760
    %599 = vmatmul.f32.gmra.mxu0 %v598
    %v600 = vpop.f32.mrf.mxu0
    %v601 = vadd.f32 %v495, %v600
    %v602 = vand.u32 %v127, 4294901760
    %603 = vmatmul.f32.gmra.mxu0 %v602
    %v604 = vpop.f32.mrf.mxu0
    %v605 = vadd.f32 %v501, %v604
    %v606 = vand.u32 %v129, 4294901760
    %607 = vmatmul.f32.gmra.mxu0 %v606
    %v608 = vpop.f32.mrf.mxu0
    %v609 = vadd.f32 %v507, %v608
    %v610 = vand.u32 %v131, 4294901760
    %611 = vmatmul.f32.gmra.mxu0 %v610
    %v612 = vpop.f32.mrf.mxu0
    %v613 = vadd.f32 %v513, %v612
    %v614 = vand.u32 %v133, 4294901760
    %615 = vmatmul.f32.gmra.mxu0 %v614
    %v616 = vpop.f32.mrf.mxu0
    %v617 = vadd.f32 %v519, %v616
    %v618 = vand.u32 %v135, 4294901760
    %619 = vmatmul.f32.gmra.mxu0 %v618
    %v620 = vpop.f32.mrf.mxu0
    %v621 = vadd.f32 %v525, %v620
    %v622 = vand.u32 %v137, 4294901760
    %623 = vmatmul.f32.gmra.mxu0 %v622
    %v624 = vpop.f32.mrf.mxu0
    %v625 = vadd.f32 %v531, %v624
    %v626 = vand.u32 %v139, 4294901760
    %627 = vmatmul.f32.gmra.mxu0 %v626
    %v628 = vpop.f32.mrf.mxu0
    %v629 = vadd.f32 %v537, %v628
    %v630 = vand.u32 %v141, 4294901760
    %631 = vmatmul.f32.gmra.mxu0 %v630
    %v632 = vpop.f32.mrf.mxu0
    %v633 = vadd.f32 %v543, %v632
    %v634 = vand.u32 %v143, 4294901760
    %635 = vmatmul.f32.gmra.mxu0 %v634
    %v636 = vpop.f32.mrf.mxu0
    %v637 = vadd.f32 %v549, %v636
    %638 = vdwg.mxu0
    %639 = vmatpush.msra.mxu0 0.0
    %640 = vmatpush.msra.mxu0 0.0
    %641 = vmatpush.msra.mxu0 0.0
    %642 = vmatpush.msra.mxu0 0.0
    %643 = vmatpush.msra.mxu0 0.0
    %644 = vmatpush.msra.mxu0 0.0
    %645 = vmatpush.msra.mxu0 0.0
    %v646 = vand.u32 %v147, 4294901760
    %647 = vmatpush.msra.mxu0 %v646
    %v648 = vand.u32 %v87, 4294901760
    %649 = vmatpush.msra.mxu0 %v648
    %v650 = vand.u32 %v86, 4294901760
    %651 = vmatpush.msra.mxu0 %v650
    %v652 = vand.u32 %v85, 4294901760
    %653 = vmatpush.msra.mxu0 %v652
    %v654 = vand.u32 %v84, 4294901760
    %655 = vmatpush.msra.mxu0 %v654
    %v656 = vand.u32 %v83, 4294901760
    %657 = vmatpush.msra.mxu0 %v656
    %v658 = vand.u32 %v82, 4294901760
    %659 = vmatpush.msra.mxu0 %v658
    %v660 = vand.u32 %v81, 4294901760
    %661 = vmatpush.msra.mxu0 %v660
    %v662 = vand.u32 %v80, 4294901760
    %663 = vmatpush.msra.mxu0 %v662
    %v664 = vand.u32 %v123, 4294901760
    %665 = vmatmul.f32.gmra.mxu0 %v664
    %v666 = vpop.f32.mrf.mxu0
    %v667 = vadd.f32 %v597, %v666
    %v668 = vand.u32 %v125, 4294901760
    %669 = vmatmul.f32.gmra.mxu0 %v668
    %v670 = vpop.f32.mrf.mxu0
    %v671 = vadd.f32 %v601, %v670
    %v672 = vand.u32 %v127, 4294901760
    %673 = vmatmul.f32.gmra.mxu0 %v672
    %v674 = vpop.f32.mrf.mxu0
    %v675 = vadd.f32 %v605, %v674
    %v676 = vand.u32 %v129, 4294901760
    %677 = vmatmul.f32.gmra.mxu0 %v676
    %v678 = vpop.f32.mrf.mxu0
    %v679 = vadd.f32 %v609, %v678
    %v680 = vand.u32 %v131, 4294901760
    %681 = vmatmul.f32.gmra.mxu0 %v680
    %v682 = vpop.f32.mrf.mxu0
    %v683 = vadd.f32 %v613, %v682
    %v684 = vand.u32 %v133, 4294901760
    %685 = vmatmul.f32.gmra.mxu0 %v684
    %v686 = vpop.f32.mrf.mxu0
    %v687 = vadd.f32 %v617, %v686
    %v688 = vand.u32 %v135, 4294901760
    %689 = vmatmul.f32.gmra.mxu0 %v688
    %v690 = vpop.f32.mrf.mxu0
    %v691 = vadd.f32 %v621, %v690
    %v692 = vand.u32 %v137, 4294901760
    %693 = vmatmul.f32.gmra.mxu0 %v692
    %v694 = vpop.f32.mrf.mxu0
    %v695 = vadd.f32 %v625, %v694
    %v696 = vand.u32 %v139, 4294901760
    %697 = vmatmul.f32.gmra.mxu0 %v696
    %v698 = vpop.f32.mrf.mxu0
    %v699 = vadd.f32 %v629, %v698
    %v700 = vand.u32 %v141, 4294901760
    %701 = vmatmul.f32.gmra.mxu0 %v700
    %v702 = vpop.f32.mrf.mxu0
    %v703 = vadd.f32 %v633, %v702
    %v704 = vand.u32 %v143, 4294901760
    %705 = vmatmul.f32.gmra.mxu0 %v704
    %v706 = vpop.f32.mrf.mxu0
    %v707 = vadd.f32 %v637, %v706
    %708 = vdwg.mxu0
    %v709 = vsel %vm122, %v58, 0
    %v711 = vsel %vm122, %v59, 0
    %v713 = vsel %vm122, %v60, 0
    %v715 = vsel %vm122, %v61, 0
    %v717 = vsel %vm122, %v62, 0
    %v719 = vsel %vm122, %v63, 0
    %v721 = vsel %vm122, %v64, 0
    %v723 = vsel %vm122, %v65, 0
    %v725 = vsel %vm122, %v66, 0
    %v727 = vsel %vm122, %v67, 0
    %v729 = vsel %vm122, %v68, 0
    %v732 = vsel %vm145, %v78, 0
    %734 = vmatpush.msra.mxu0 0.0
    %735 = vmatpush.msra.mxu0 0.0
    %736 = vmatpush.msra.mxu0 0.0
    %737 = vmatpush.msra.mxu0 0.0
    %738 = vmatpush.msra.mxu0 0.0
    %739 = vmatpush.msra.mxu0 0.0
    %740 = vmatpush.msra.mxu0 0.0
    %v741 = vand.u32 %v732, 4294901760
    %742 = vmatpush.msra.mxu0 %v741
    %v743 = vand.u32 %v77, 4294901760
    %744 = vmatpush.msra.mxu0 %v743
    %v745 = vand.u32 %v76, 4294901760
    %746 = vmatpush.msra.mxu0 %v745
    %v747 = vand.u32 %v75, 4294901760
    %748 = vmatpush.msra.mxu0 %v747
    %v749 = vand.u32 %v74, 4294901760
    %750 = vmatpush.msra.mxu0 %v749
    %v751 = vand.u32 %v73, 4294901760
    %752 = vmatpush.msra.mxu0 %v751
    %v753 = vand.u32 %v72, 4294901760
    %754 = vmatpush.msra.mxu0 %v753
    %v755 = vand.u32 %v71, 4294901760
    %756 = vmatpush.msra.mxu0 %v755
    %v757 = vand.u32 %v70, 4294901760
    %758 = vmatpush.msra.mxu0 %v757
    %v759 = vand.u32 %v709, 4294901760
    %v760 = vsub.f32 %v709, %v759
    %v761 = vand.u32 %v760, 4294901760
    %v762 = vsub.f32 %v760, %v761
    %v763 = vand.u32 %v762, 4294901760
    %764 = vmatmul.f32.gmra.mxu0 %v763
    %v765 = vpop.f32.mrf.mxu0
    %v766 = vadd.f32 %v667, %v765
    %v767 = vand.u32 %v711, 4294901760
    %v768 = vsub.f32 %v711, %v767
    %v769 = vand.u32 %v768, 4294901760
    %v770 = vsub.f32 %v768, %v769
    %v771 = vand.u32 %v770, 4294901760
    %772 = vmatmul.f32.gmra.mxu0 %v771
    %v773 = vpop.f32.mrf.mxu0
    %v774 = vadd.f32 %v671, %v773
    %v775 = vand.u32 %v713, 4294901760
    %v776 = vsub.f32 %v713, %v775
    %v777 = vand.u32 %v776, 4294901760
    %v778 = vsub.f32 %v776, %v777
    %v779 = vand.u32 %v778, 4294901760
    %780 = vmatmul.f32.gmra.mxu0 %v779
    %v781 = vpop.f32.mrf.mxu0
    %v782 = vadd.f32 %v675, %v781
    %v783 = vand.u32 %v715, 4294901760
    %v784 = vsub.f32 %v715, %v783
    %v785 = vand.u32 %v784, 4294901760
    %v786 = vsub.f32 %v784, %v785
    %v787 = vand.u32 %v786, 4294901760
    %788 = vmatmul.f32.gmra.mxu0 %v787
    %v789 = vpop.f32.mrf.mxu0
    %v790 = vadd.f32 %v679, %v789
    %v791 = vand.u32 %v717, 4294901760
    %v792 = vsub.f32 %v717, %v791
    %v793 = vand.u32 %v792, 4294901760
    %v794 = vsub.f32 %v792, %v793
    %v795 = vand.u32 %v794, 4294901760
    %796 = vmatmul.f32.gmra.mxu0 %v795
    %v797 = vpop.f32.mrf.mxu0
    %v798 = vadd.f32 %v683, %v797
    %v799 = vand.u32 %v719, 4294901760
    %v800 = vsub.f32 %v719, %v799
    %v801 = vand.u32 %v800, 4294901760
    %v802 = vsub.f32 %v800, %v801
    %v803 = vand.u32 %v802, 4294901760
    %804 = vmatmul.f32.gmra.mxu0 %v803
    %v805 = vpop.f32.mrf.mxu0
    %v806 = vadd.f32 %v687, %v805
    %v807 = vand.u32 %v721, 4294901760
    %v808 = vsub.f32 %v721, %v807
    %v809 = vand.u32 %v808, 4294901760
    %v810 = vsub.f32 %v808, %v809
    %v811 = vand.u32 %v810, 4294901760
    %812 = vmatmul.f32.gmra.mxu0 %v811
    %v813 = vpop.f32.mrf.mxu0
    %v814 = vadd.f32 %v691, %v813
    %v815 = vand.u32 %v723, 4294901760
    %v816 = vsub.f32 %v723, %v815
    %v817 = vand.u32 %v816, 4294901760
    %v818 = vsub.f32 %v816, %v817
    %v819 = vand.u32 %v818, 4294901760
    %820 = vmatmul.f32.gmra.mxu0 %v819
    %v821 = vpop.f32.mrf.mxu0
    %v822 = vadd.f32 %v695, %v821
    %v823 = vand.u32 %v725, 4294901760
    %v824 = vsub.f32 %v725, %v823
    %v825 = vand.u32 %v824, 4294901760
    %v826 = vsub.f32 %v824, %v825
    %v827 = vand.u32 %v826, 4294901760
    %828 = vmatmul.f32.gmra.mxu0 %v827
    %v829 = vpop.f32.mrf.mxu0
    %v830 = vadd.f32 %v699, %v829
    %v831 = vand.u32 %v727, 4294901760
    %v832 = vsub.f32 %v727, %v831
    %v833 = vand.u32 %v832, 4294901760
    %v834 = vsub.f32 %v832, %v833
    %v835 = vand.u32 %v834, 4294901760
    %836 = vmatmul.f32.gmra.mxu0 %v835
    %v837 = vpop.f32.mrf.mxu0
    %v838 = vadd.f32 %v703, %v837
    %v839 = vand.u32 %v729, 4294901760
    %v840 = vsub.f32 %v729, %v839
    %v841 = vand.u32 %v840, 4294901760
    %v842 = vsub.f32 %v840, %v841
    %v843 = vand.u32 %v842, 4294901760
    %844 = vmatmul.f32.gmra.mxu0 %v843
    %v845 = vpop.f32.mrf.mxu0
    %v846 = vadd.f32 %v707, %v845
    %847 = vdwg.mxu0
    %848 = vmatpush.msra.mxu0 0.0
    %849 = vmatpush.msra.mxu0 0.0
    %850 = vmatpush.msra.mxu0 0.0
    %851 = vmatpush.msra.mxu0 0.0
    %852 = vmatpush.msra.mxu0 0.0
    %853 = vmatpush.msra.mxu0 0.0
    %854 = vmatpush.msra.mxu0 0.0
    %v855 = vand.u32 %v732, 4294901760
    %v856 = vsub.f32 %v732, %v855
    %v857 = vand.u32 %v856, 4294901760
    %v858 = vsub.f32 %v856, %v857
    %v859 = vand.u32 %v858, 4294901760
    %860 = vmatpush.msra.mxu0 %v859
    %v861 = vand.u32 %v77, 4294901760
    %v862 = vsub.f32 %v77, %v861
    %v863 = vand.u32 %v862, 4294901760
    %v864 = vsub.f32 %v862, %v863
    %v865 = vand.u32 %v864, 4294901760
    %866 = vmatpush.msra.mxu0 %v865
    %v867 = vand.u32 %v76, 4294901760
    %v868 = vsub.f32 %v76, %v867
    %v869 = vand.u32 %v868, 4294901760
    %v870 = vsub.f32 %v868, %v869
    %v871 = vand.u32 %v870, 4294901760
    %872 = vmatpush.msra.mxu0 %v871
    %v873 = vand.u32 %v75, 4294901760
    %v874 = vsub.f32 %v75, %v873
    %v875 = vand.u32 %v874, 4294901760
    %v876 = vsub.f32 %v874, %v875
    %v877 = vand.u32 %v876, 4294901760
    %878 = vmatpush.msra.mxu0 %v877
    %v879 = vand.u32 %v74, 4294901760
    %v880 = vsub.f32 %v74, %v879
    %v881 = vand.u32 %v880, 4294901760
    %v882 = vsub.f32 %v880, %v881
    %v883 = vand.u32 %v882, 4294901760
    %884 = vmatpush.msra.mxu0 %v883
    %v885 = vand.u32 %v73, 4294901760
    %v886 = vsub.f32 %v73, %v885
    %v887 = vand.u32 %v886, 4294901760
    %v888 = vsub.f32 %v886, %v887
    %v889 = vand.u32 %v888, 4294901760
    %890 = vmatpush.msra.mxu0 %v889
    %v891 = vand.u32 %v72, 4294901760
    %v892 = vsub.f32 %v72, %v891
    %v893 = vand.u32 %v892, 4294901760
    %v894 = vsub.f32 %v892, %v893
    %v895 = vand.u32 %v894, 4294901760
    %896 = vmatpush.msra.mxu0 %v895
    %v897 = vand.u32 %v71, 4294901760
    %v898 = vsub.f32 %v71, %v897
    %v899 = vand.u32 %v898, 4294901760
    %v900 = vsub.f32 %v898, %v899
    %v901 = vand.u32 %v900, 4294901760
    %902 = vmatpush.msra.mxu0 %v901
    %v903 = vand.u32 %v70, 4294901760
    %v904 = vsub.f32 %v70, %v903
    %v905 = vand.u32 %v904, 4294901760
    %v906 = vsub.f32 %v904, %v905
    %v907 = vand.u32 %v906, 4294901760
    %908 = vmatpush.msra.mxu0 %v907
    %v909 = vand.u32 %v709, 4294901760
    %910 = vmatmul.f32.gmra.mxu0 %v909
    %v911 = vpop.f32.mrf.mxu0
    %v912 = vadd.f32 %v766, %v911
    %v913 = vand.u32 %v711, 4294901760
    %914 = vmatmul.f32.gmra.mxu0 %v913
    %v915 = vpop.f32.mrf.mxu0
    %v916 = vadd.f32 %v774, %v915
    %v917 = vand.u32 %v713, 4294901760
    %918 = vmatmul.f32.gmra.mxu0 %v917
    %v919 = vpop.f32.mrf.mxu0
    %v920 = vadd.f32 %v782, %v919
    %v921 = vand.u32 %v715, 4294901760
    %922 = vmatmul.f32.gmra.mxu0 %v921
    %v923 = vpop.f32.mrf.mxu0
    %v924 = vadd.f32 %v790, %v923
    %v925 = vand.u32 %v717, 4294901760
    %926 = vmatmul.f32.gmra.mxu0 %v925
    %v927 = vpop.f32.mrf.mxu0
    %v928 = vadd.f32 %v798, %v927
    %v929 = vand.u32 %v719, 4294901760
    %930 = vmatmul.f32.gmra.mxu0 %v929
    %v931 = vpop.f32.mrf.mxu0
    %v932 = vadd.f32 %v806, %v931
    %v933 = vand.u32 %v721, 4294901760
    %934 = vmatmul.f32.gmra.mxu0 %v933
    %v935 = vpop.f32.mrf.mxu0
    %v936 = vadd.f32 %v814, %v935
    %v937 = vand.u32 %v723, 4294901760
    %938 = vmatmul.f32.gmra.mxu0 %v937
    %v939 = vpop.f32.mrf.mxu0
    %v940 = vadd.f32 %v822, %v939
    %v941 = vand.u32 %v725, 4294901760
    %942 = vmatmul.f32.gmra.mxu0 %v941
    %v943 = vpop.f32.mrf.mxu0
    %v944 = vadd.f32 %v830, %v943
    %v945 = vand.u32 %v727, 4294901760
    %946 = vmatmul.f32.gmra.mxu0 %v945
    %v947 = vpop.f32.mrf.mxu0
    %v948 = vadd.f32 %v838, %v947
    %v949 = vand.u32 %v729, 4294901760
    %950 = vmatmul.f32.gmra.mxu0 %v949
    %v951 = vpop.f32.mrf.mxu0
    %v952 = vadd.f32 %v846, %v951
    %953 = vdwg.mxu0
    %954 = vmatpush.msra.mxu0 0.0
    %955 = vmatpush.msra.mxu0 0.0
    %956 = vmatpush.msra.mxu0 0.0
    %957 = vmatpush.msra.mxu0 0.0
    %958 = vmatpush.msra.mxu0 0.0
    %959 = vmatpush.msra.mxu0 0.0
    %960 = vmatpush.msra.mxu0 0.0
    %v961 = vand.u32 %v732, 4294901760
    %v962 = vsub.f32 %v732, %v961
    %963 = vmatpush.msra.mxu0 %v962
    %v964 = vand.u32 %v77, 4294901760
    %v965 = vsub.f32 %v77, %v964
    %966 = vmatpush.msra.mxu0 %v965
    %v967 = vand.u32 %v76, 4294901760
    %v968 = vsub.f32 %v76, %v967
    %969 = vmatpush.msra.mxu0 %v968
    %v970 = vand.u32 %v75, 4294901760
    %v971 = vsub.f32 %v75, %v970
    %972 = vmatpush.msra.mxu0 %v971
    %v973 = vand.u32 %v74, 4294901760
    %v974 = vsub.f32 %v74, %v973
    %975 = vmatpush.msra.mxu0 %v974
    %v976 = vand.u32 %v73, 4294901760
    %v977 = vsub.f32 %v73, %v976
    %978 = vmatpush.msra.mxu0 %v977
    %v979 = vand.u32 %v72, 4294901760
    %v980 = vsub.f32 %v72, %v979
    %981 = vmatpush.msra.mxu0 %v980
    %v982 = vand.u32 %v71, 4294901760
    %v983 = vsub.f32 %v71, %v982
    %984 = vmatpush.msra.mxu0 %v983
    %v985 = vand.u32 %v70, 4294901760
    %v986 = vsub.f32 %v70, %v985
    %987 = vmatpush.msra.mxu0 %v986
    %v988 = vand.u32 %v709, 4294901760
    %v989 = vsub.f32 %v709, %v988
    %990 = vmatmul.f32.gmra.mxu0 %v989
    %v991 = vpop.f32.mrf.mxu0
    %v992 = vadd.f32 %v912, %v991
    %v993 = vand.u32 %v711, 4294901760
    %v994 = vsub.f32 %v711, %v993
    %995 = vmatmul.f32.gmra.mxu0 %v994
    %v996 = vpop.f32.mrf.mxu0
    %v997 = vadd.f32 %v916, %v996
    %v998 = vand.u32 %v713, 4294901760
    %v999 = vsub.f32 %v713, %v998
    %1000 = vmatmul.f32.gmra.mxu0 %v999
    %v1001 = vpop.f32.mrf.mxu0
    %v1002 = vadd.f32 %v920, %v1001
    %v1003 = vand.u32 %v715, 4294901760
    %v1004 = vsub.f32 %v715, %v1003
    %1005 = vmatmul.f32.gmra.mxu0 %v1004
    %v1006 = vpop.f32.mrf.mxu0
    %v1007 = vadd.f32 %v924, %v1006
    %v1008 = vand.u32 %v717, 4294901760
    %v1009 = vsub.f32 %v717, %v1008
    %1010 = vmatmul.f32.gmra.mxu0 %v1009
    %v1011 = vpop.f32.mrf.mxu0
    %v1012 = vadd.f32 %v928, %v1011
    %v1013 = vand.u32 %v719, 4294901760
    %v1014 = vsub.f32 %v719, %v1013
    %1015 = vmatmul.f32.gmra.mxu0 %v1014
    %v1016 = vpop.f32.mrf.mxu0
    %v1017 = vadd.f32 %v932, %v1016
    %v1018 = vand.u32 %v721, 4294901760
    %v1019 = vsub.f32 %v721, %v1018
    %1020 = vmatmul.f32.gmra.mxu0 %v1019
    %v1021 = vpop.f32.mrf.mxu0
    %v1022 = vadd.f32 %v936, %v1021
    %v1023 = vand.u32 %v723, 4294901760
    %v1024 = vsub.f32 %v723, %v1023
    %1025 = vmatmul.f32.gmra.mxu0 %v1024
    %v1026 = vpop.f32.mrf.mxu0
    %v1027 = vadd.f32 %v940, %v1026
    %v1028 = vand.u32 %v725, 4294901760
    %v1029 = vsub.f32 %v725, %v1028
    %1030 = vmatmul.f32.gmra.mxu0 %v1029
    %v1031 = vpop.f32.mrf.mxu0
    %v1032 = vadd.f32 %v944, %v1031
    %v1033 = vand.u32 %v727, 4294901760
    %v1034 = vsub.f32 %v727, %v1033
    %1035 = vmatmul.f32.gmra.mxu0 %v1034
    %v1036 = vpop.f32.mrf.mxu0
    %v1037 = vadd.f32 %v948, %v1036
    %v1038 = vand.u32 %v729, 4294901760
    %v1039 = vsub.f32 %v729, %v1038
    %1040 = vmatmul.f32.gmra.mxu0 %v1039
    %v1041 = vpop.f32.mrf.mxu0
    %v1042 = vadd.f32 %v952, %v1041
    %1043 = vdwg.mxu0
    %1044 = vmatpush.msra.mxu0 0.0
    %1045 = vmatpush.msra.mxu0 0.0
    %1046 = vmatpush.msra.mxu0 0.0
    %1047 = vmatpush.msra.mxu0 0.0
    %1048 = vmatpush.msra.mxu0 0.0
    %1049 = vmatpush.msra.mxu0 0.0
    %1050 = vmatpush.msra.mxu0 0.0
    %v1051 = vand.u32 %v732, 4294901760
    %1052 = vmatpush.msra.mxu0 %v1051
    %v1053 = vand.u32 %v77, 4294901760
    %1054 = vmatpush.msra.mxu0 %v1053
    %v1055 = vand.u32 %v76, 4294901760
    %1056 = vmatpush.msra.mxu0 %v1055
    %v1057 = vand.u32 %v75, 4294901760
    %1058 = vmatpush.msra.mxu0 %v1057
    %v1059 = vand.u32 %v74, 4294901760
    %1060 = vmatpush.msra.mxu0 %v1059
    %v1061 = vand.u32 %v73, 4294901760
    %1062 = vmatpush.msra.mxu0 %v1061
    %v1063 = vand.u32 %v72, 4294901760
    %1064 = vmatpush.msra.mxu0 %v1063
    %v1065 = vand.u32 %v71, 4294901760
    %1066 = vmatpush.msra.mxu0 %v1065
    %v1067 = vand.u32 %v70, 4294901760
    %1068 = vmatpush.msra.mxu0 %v1067
    %v1069 = vand.u32 %v709, 4294901760
    %v1070 = vsub.f32 %v709, %v1069
    %v1071 = vand.u32 %v1070, 4294901760
    %1072 = vmatmul.f32.gmra.mxu0 %v1071
    %v1073 = vpop.f32.mrf.mxu0
    %v1074 = vadd.f32 %v992, %v1073
    %v1075 = vand.u32 %v711, 4294901760
    %v1076 = vsub.f32 %v711, %v1075
    %v1077 = vand.u32 %v1076, 4294901760
    %1078 = vmatmul.f32.gmra.mxu0 %v1077
    %v1079 = vpop.f32.mrf.mxu0
    %v1080 = vadd.f32 %v997, %v1079
    %v1081 = vand.u32 %v713, 4294901760
    %v1082 = vsub.f32 %v713, %v1081
    %v1083 = vand.u32 %v1082, 4294901760
    %1084 = vmatmul.f32.gmra.mxu0 %v1083
    %v1085 = vpop.f32.mrf.mxu0
    %v1086 = vadd.f32 %v1002, %v1085
    %v1087 = vand.u32 %v715, 4294901760
    %v1088 = vsub.f32 %v715, %v1087
    %v1089 = vand.u32 %v1088, 4294901760
    %1090 = vmatmul.f32.gmra.mxu0 %v1089
    %v1091 = vpop.f32.mrf.mxu0
    %v1092 = vadd.f32 %v1007, %v1091
    %v1093 = vand.u32 %v717, 4294901760
    %v1094 = vsub.f32 %v717, %v1093
    %v1095 = vand.u32 %v1094, 4294901760
    %1096 = vmatmul.f32.gmra.mxu0 %v1095
    %v1097 = vpop.f32.mrf.mxu0
    %v1098 = vadd.f32 %v1012, %v1097
    %v1099 = vand.u32 %v719, 4294901760
    %v1100 = vsub.f32 %v719, %v1099
    %v1101 = vand.u32 %v1100, 4294901760
    %1102 = vmatmul.f32.gmra.mxu0 %v1101
    %v1103 = vpop.f32.mrf.mxu0
    %v1104 = vadd.f32 %v1017, %v1103
    %v1105 = vand.u32 %v721, 4294901760
    %v1106 = vsub.f32 %v721, %v1105
    %v1107 = vand.u32 %v1106, 4294901760
    %1108 = vmatmul.f32.gmra.mxu0 %v1107
    %v1109 = vpop.f32.mrf.mxu0
    %v1110 = vadd.f32 %v1022, %v1109
    %v1111 = vand.u32 %v723, 4294901760
    %v1112 = vsub.f32 %v723, %v1111
    %v1113 = vand.u32 %v1112, 4294901760
    %1114 = vmatmul.f32.gmra.mxu0 %v1113
    %v1115 = vpop.f32.mrf.mxu0
    %v1116 = vadd.f32 %v1027, %v1115
    %v1117 = vand.u32 %v725, 4294901760
    %v1118 = vsub.f32 %v725, %v1117
    %v1119 = vand.u32 %v1118, 4294901760
    %1120 = vmatmul.f32.gmra.mxu0 %v1119
    %v1121 = vpop.f32.mrf.mxu0
    %v1122 = vadd.f32 %v1032, %v1121
    %v1123 = vand.u32 %v727, 4294901760
    %v1124 = vsub.f32 %v727, %v1123
    %v1125 = vand.u32 %v1124, 4294901760
    %1126 = vmatmul.f32.gmra.mxu0 %v1125
    %v1127 = vpop.f32.mrf.mxu0
    %v1128 = vadd.f32 %v1037, %v1127
    %v1129 = vand.u32 %v729, 4294901760
    %v1130 = vsub.f32 %v729, %v1129
    %v1131 = vand.u32 %v1130, 4294901760
    %1132 = vmatmul.f32.gmra.mxu0 %v1131
    %v1133 = vpop.f32.mrf.mxu0
    %v1134 = vadd.f32 %v1042, %v1133
    %1135 = vdwg.mxu0
    %1136 = vmatpush.msra.mxu0 0.0
    %1137 = vmatpush.msra.mxu0 0.0
    %1138 = vmatpush.msra.mxu0 0.0
    %1139 = vmatpush.msra.mxu0 0.0
    %1140 = vmatpush.msra.mxu0 0.0
    %1141 = vmatpush.msra.mxu0 0.0
    %1142 = vmatpush.msra.mxu0 0.0
    %v1143 = vand.u32 %v732, 4294901760
    %v1144 = vsub.f32 %v732, %v1143
    %v1145 = vand.u32 %v1144, 4294901760
    %1146 = vmatpush.msra.mxu0 %v1145
    %v1147 = vand.u32 %v77, 4294901760
    %v1148 = vsub.f32 %v77, %v1147
    %v1149 = vand.u32 %v1148, 4294901760
    %1150 = vmatpush.msra.mxu0 %v1149
    %v1151 = vand.u32 %v76, 4294901760
    %v1152 = vsub.f32 %v76, %v1151
    %v1153 = vand.u32 %v1152, 4294901760
    %1154 = vmatpush.msra.mxu0 %v1153
    %v1155 = vand.u32 %v75, 4294901760
    %v1156 = vsub.f32 %v75, %v1155
    %v1157 = vand.u32 %v1156, 4294901760
    %1158 = vmatpush.msra.mxu0 %v1157
    %v1159 = vand.u32 %v74, 4294901760
    %v1160 = vsub.f32 %v74, %v1159
    %v1161 = vand.u32 %v1160, 4294901760
    %1162 = vmatpush.msra.mxu0 %v1161
    %v1163 = vand.u32 %v73, 4294901760
    %v1164 = vsub.f32 %v73, %v1163
    %v1165 = vand.u32 %v1164, 4294901760
    %1166 = vmatpush.msra.mxu0 %v1165
    %v1167 = vand.u32 %v72, 4294901760
    %v1168 = vsub.f32 %v72, %v1167
    %v1169 = vand.u32 %v1168, 4294901760
    %1170 = vmatpush.msra.mxu0 %v1169
    %v1171 = vand.u32 %v71, 4294901760
    %v1172 = vsub.f32 %v71, %v1171
    %v1173 = vand.u32 %v1172, 4294901760
    %1174 = vmatpush.msra.mxu0 %v1173
    %v1175 = vand.u32 %v70, 4294901760
    %v1176 = vsub.f32 %v70, %v1175
    %v1177 = vand.u32 %v1176, 4294901760
    %1178 = vmatpush.msra.mxu0 %v1177
    %v1179 = vand.u32 %v709, 4294901760
    %1180 = vmatmul.f32.gmra.mxu0 %v1179
    %v1181 = vpop.f32.mrf.mxu0
    %v1182 = vadd.f32 %v1074, %v1181
    %v1183 = vand.u32 %v711, 4294901760
    %1184 = vmatmul.f32.gmra.mxu0 %v1183
    %v1185 = vpop.f32.mrf.mxu0
    %v1186 = vadd.f32 %v1080, %v1185
    %v1187 = vand.u32 %v713, 4294901760
    %1188 = vmatmul.f32.gmra.mxu0 %v1187
    %v1189 = vpop.f32.mrf.mxu0
    %v1190 = vadd.f32 %v1086, %v1189
    %v1191 = vand.u32 %v715, 4294901760
    %1192 = vmatmul.f32.gmra.mxu0 %v1191
    %v1193 = vpop.f32.mrf.mxu0
    %v1194 = vadd.f32 %v1092, %v1193
    %v1195 = vand.u32 %v717, 4294901760
    %1196 = vmatmul.f32.gmra.mxu0 %v1195
    %v1197 = vpop.f32.mrf.mxu0
    %v1198 = vadd.f32 %v1098, %v1197
    %v1199 = vand.u32 %v719, 4294901760
    %1200 = vmatmul.f32.gmra.mxu0 %v1199
    %v1201 = vpop.f32.mrf.mxu0
    %v1202 = vadd.f32 %v1104, %v1201
    %v1203 = vand.u32 %v721, 4294901760
    %1204 = vmatmul.f32.gmra.mxu0 %v1203
    %v1205 = vpop.f32.mrf.mxu0
    %v1206 = vadd.f32 %v1110, %v1205
    %v1207 = vand.u32 %v723, 4294901760
    %1208 = vmatmul.f32.gmra.mxu0 %v1207
    %v1209 = vpop.f32.mrf.mxu0
    %v1210 = vadd.f32 %v1116, %v1209
    %v1211 = vand.u32 %v725, 4294901760
    %1212 = vmatmul.f32.gmra.mxu0 %v1211
    %v1213 = vpop.f32.mrf.mxu0
    %v1214 = vadd.f32 %v1122, %v1213
    %v1215 = vand.u32 %v727, 4294901760
    %1216 = vmatmul.f32.gmra.mxu0 %v1215
    %v1217 = vpop.f32.mrf.mxu0
    %v1218 = vadd.f32 %v1128, %v1217
    %v1219 = vand.u32 %v729, 4294901760
    %1220 = vmatmul.f32.gmra.mxu0 %v1219
    %v1221 = vpop.f32.mrf.mxu0
    %v1222 = vadd.f32 %v1134, %v1221
    %1223 = vdwg.mxu0
    %1224 = vmatpush.msra.mxu0 0.0
    %1225 = vmatpush.msra.mxu0 0.0
    %1226 = vmatpush.msra.mxu0 0.0
    %1227 = vmatpush.msra.mxu0 0.0
    %1228 = vmatpush.msra.mxu0 0.0
    %1229 = vmatpush.msra.mxu0 0.0
    %1230 = vmatpush.msra.mxu0 0.0
    %v1231 = vand.u32 %v732, 4294901760
    %1232 = vmatpush.msra.mxu0 %v1231
    %v1233 = vand.u32 %v77, 4294901760
    %1234 = vmatpush.msra.mxu0 %v1233
    %v1235 = vand.u32 %v76, 4294901760
    %1236 = vmatpush.msra.mxu0 %v1235
    %v1237 = vand.u32 %v75, 4294901760
    %1238 = vmatpush.msra.mxu0 %v1237
    %v1239 = vand.u32 %v74, 4294901760
    %1240 = vmatpush.msra.mxu0 %v1239
    %v1241 = vand.u32 %v73, 4294901760
    %1242 = vmatpush.msra.mxu0 %v1241
    %v1243 = vand.u32 %v72, 4294901760
    %1244 = vmatpush.msra.mxu0 %v1243
    %v1245 = vand.u32 %v71, 4294901760
    %1246 = vmatpush.msra.mxu0 %v1245
    %v1247 = vand.u32 %v70, 4294901760
    %1248 = vmatpush.msra.mxu0 %v1247
    %v1249 = vand.u32 %v709, 4294901760
    %1250 = vmatmul.f32.gmra.mxu0 %v1249
    %v1251 = vpop.f32.mrf.mxu0
    %v1252 = vadd.f32 %v1182, %v1251
    %v1253 = vand.u32 %v711, 4294901760
    %1254 = vmatmul.f32.gmra.mxu0 %v1253
    %v1255 = vpop.f32.mrf.mxu0
    %v1256 = vadd.f32 %v1186, %v1255
    %v1257 = vand.u32 %v713, 4294901760
    %1258 = vmatmul.f32.gmra.mxu0 %v1257
    %v1259 = vpop.f32.mrf.mxu0
    %v1260 = vadd.f32 %v1190, %v1259
    %v1261 = vand.u32 %v715, 4294901760
    %1262 = vmatmul.f32.gmra.mxu0 %v1261
    %v1263 = vpop.f32.mrf.mxu0
    %v1264 = vadd.f32 %v1194, %v1263
    %v1265 = vand.u32 %v717, 4294901760
    %1266 = vmatmul.f32.gmra.mxu0 %v1265
    %v1267 = vpop.f32.mrf.mxu0
    %v1268 = vadd.f32 %v1198, %v1267
    %v1269 = vand.u32 %v719, 4294901760
    %1270 = vmatmul.f32.gmra.mxu0 %v1269
    %v1271 = vpop.f32.mrf.mxu0
    %v1272 = vadd.f32 %v1202, %v1271
    %v1273 = vand.u32 %v721, 4294901760
    %1274 = vmatmul.f32.gmra.mxu0 %v1273
    %v1275 = vpop.f32.mrf.mxu0
    %v1276 = vadd.f32 %v1206, %v1275
    %v1277 = vand.u32 %v723, 4294901760
    %1278 = vmatmul.f32.gmra.mxu0 %v1277
    %v1279 = vpop.f32.mrf.mxu0
    %v1280 = vadd.f32 %v1210, %v1279
    %v1281 = vand.u32 %v725, 4294901760
    %1282 = vmatmul.f32.gmra.mxu0 %v1281
    %v1283 = vpop.f32.mrf.mxu0
    %v1284 = vadd.f32 %v1214, %v1283
    %v1285 = vand.u32 %v727, 4294901760
    %1286 = vmatmul.f32.gmra.mxu0 %v1285
    %v1287 = vpop.f32.mrf.mxu0
    %v1288 = vadd.f32 %v1218, %v1287
    %v1289 = vand.u32 %v729, 4294901760
    %1290 = vmatmul.f32.gmra.mxu0 %v1289
    %v1291 = vpop.f32.mrf.mxu0
    %v1292 = vadd.f32 %v1222, %v1291
    %1293 = vdwg.mxu0
    %s1294 = scalar_lea.vmem %s1, 144
    %v1295 = vld [vmem:[%s1294] sm:$0xff]
    %v1296 = vld [vmem:[%s1294 + $0x8] sm:$0xff]
    %v1297 = vld [vmem:[%s1294 + $0x10] sm:$0xff]
    %v1298 = vld [vmem:[%s1294 + $0x18] sm:$0xff]
    %v1299 = vld [vmem:[%s1294 + $0x20] sm:$0xff]
    %v1300 = vld [vmem:[%s1294 + $0x28] sm:$0xff]
    %v1301 = vld [vmem:[%s1294 + $0x30] sm:$0xff]
    %v1302 = vld [vmem:[%s1294 + $0x38] sm:$0xff]
    %v1303 = vld [vmem:[%s1294 + $0x40] sm:$0x3]
    %vm1304 = vcmask 1045504
    %v1305 = vrot.slane %v58, 2
    %v1306 = vrot.slane %v59, 2
    %v1307 = vsel %vm1304, %v1305, %v1306
    %v1308 = vrot.slane %v60, 2
    %v1309 = vsel %vm1304, %v1306, %v1308
    %v1310 = vrot.slane %v61, 2
    %v1311 = vsel %vm1304, %v1308, %v1310
    %v1312 = vrot.slane %v62, 2
    %v1313 = vsel %vm1304, %v1310, %v1312
    %v1314 = vrot.slane %v63, 2
    %v1315 = vsel %vm1304, %v1312, %v1314
    %v1316 = vrot.slane %v64, 2
    %v1317 = vsel %vm1304, %v1314, %v1316
    %v1318 = vrot.slane %v65, 2
    %v1319 = vsel %vm1304, %v1316, %v1318
    %v1320 = vrot.slane %v66, 2
    %v1321 = vsel %vm1304, %v1318, %v1320
    %v1322 = vrot.slane %v67, 2
    %v1323 = vsel %vm1304, %v1320, %v1322
    %v1324 = vrot.slane %v68, 2
    %v1325 = vsel %vm1304, %v1322, %v1324
    %v1326 = vsel %vm122, %v1307, 0
    %v1328 = vsel %vm122, %v1309, 0
    %v1330 = vsel %vm122, %v1311, 0
    %v1332 = vsel %vm122, %v1313, 0
    %v1334 = vsel %vm122, %v1315, 0
    %v1336 = vsel %vm122, %v1317, 0
    %v1338 = vsel %vm122, %v1319, 0
    %v1340 = vsel %vm122, %v1321, 0
    %v1342 = vsel %vm122, %v1323, 0
    %v1344 = vsel %vm122, %v1325, 0
    %v1346 = vsel %vm122, %v1324, 0
    %v1349 = vsel %vm145, %v1303, 0
    %1351 = vmatpush.msra.mxu0 0.0
    %1352 = vmatpush.msra.mxu0 0.0
    %1353 = vmatpush.msra.mxu0 0.0
    %1354 = vmatpush.msra.mxu0 0.0
    %1355 = vmatpush.msra.mxu0 0.0
    %1356 = vmatpush.msra.mxu0 0.0
    %1357 = vmatpush.msra.mxu0 0.0
    %v1358 = vand.u32 %v1349, 4294901760
    %1359 = vmatpush.msra.mxu0 %v1358
    %v1360 = vand.u32 %v1302, 4294901760
    %1361 = vmatpush.msra.mxu0 %v1360
    %v1362 = vand.u32 %v1301, 4294901760
    %1363 = vmatpush.msra.mxu0 %v1362
    %v1364 = vand.u32 %v1300, 4294901760
    %1365 = vmatpush.msra.mxu0 %v1364
    %v1366 = vand.u32 %v1299, 4294901760
    %1367 = vmatpush.msra.mxu0 %v1366
    %v1368 = vand.u32 %v1298, 4294901760
    %1369 = vmatpush.msra.mxu0 %v1368
    %v1370 = vand.u32 %v1297, 4294901760
    %1371 = vmatpush.msra.mxu0 %v1370
    %v1372 = vand.u32 %v1296, 4294901760
    %1373 = vmatpush.msra.mxu0 %v1372
    %v1374 = vand.u32 %v1295, 4294901760
    %1375 = vmatpush.msra.mxu0 %v1374
    %v1376 = vand.u32 %v1326, 4294901760
    %v1377 = vsub.f32 %v1326, %v1376
    %v1378 = vand.u32 %v1377, 4294901760
    %v1379 = vsub.f32 %v1377, %v1378
    %v1380 = vand.u32 %v1379, 4294901760
    %1381 = vmatmul.f32.gmra.mxu0 %v1380
    %v1382 = vpop.f32.mrf.mxu0
    %v1383 = vadd.f32 0.0, %v1382
    %v1384 = vand.u32 %v1328, 4294901760
    %v1385 = vsub.f32 %v1328, %v1384
    %v1386 = vand.u32 %v1385, 4294901760
    %v1387 = vsub.f32 %v1385, %v1386
    %v1388 = vand.u32 %v1387, 4294901760
    %1389 = vmatmul.f32.gmra.mxu0 %v1388
    %v1390 = vpop.f32.mrf.mxu0
    %v1391 = vadd.f32 0.0, %v1390
    %v1392 = vand.u32 %v1330, 4294901760
    %v1393 = vsub.f32 %v1330, %v1392
    %v1394 = vand.u32 %v1393, 4294901760
    %v1395 = vsub.f32 %v1393, %v1394
    %v1396 = vand.u32 %v1395, 4294901760
    %1397 = vmatmul.f32.gmra.mxu0 %v1396
    %v1398 = vpop.f32.mrf.mxu0
    %v1399 = vadd.f32 0.0, %v1398
    %v1400 = vand.u32 %v1332, 4294901760
    %v1401 = vsub.f32 %v1332, %v1400
    %v1402 = vand.u32 %v1401, 4294901760
    %v1403 = vsub.f32 %v1401, %v1402
    %v1404 = vand.u32 %v1403, 4294901760
    %1405 = vmatmul.f32.gmra.mxu0 %v1404
    %v1406 = vpop.f32.mrf.mxu0
    %v1407 = vadd.f32 0.0, %v1406
    %v1408 = vand.u32 %v1334, 4294901760
    %v1409 = vsub.f32 %v1334, %v1408
    %v1410 = vand.u32 %v1409, 4294901760
    %v1411 = vsub.f32 %v1409, %v1410
    %v1412 = vand.u32 %v1411, 4294901760
    %1413 = vmatmul.f32.gmra.mxu0 %v1412
    %v1414 = vpop.f32.mrf.mxu0
    %v1415 = vadd.f32 0.0, %v1414
    %v1416 = vand.u32 %v1336, 4294901760
    %v1417 = vsub.f32 %v1336, %v1416
    %v1418 = vand.u32 %v1417, 4294901760
    %v1419 = vsub.f32 %v1417, %v1418
    %v1420 = vand.u32 %v1419, 4294901760
    %1421 = vmatmul.f32.gmra.mxu0 %v1420
    %v1422 = vpop.f32.mrf.mxu0
    %v1423 = vadd.f32 0.0, %v1422
    %v1424 = vand.u32 %v1338, 4294901760
    %v1425 = vsub.f32 %v1338, %v1424
    %v1426 = vand.u32 %v1425, 4294901760
    %v1427 = vsub.f32 %v1425, %v1426
    %v1428 = vand.u32 %v1427, 4294901760
    %1429 = vmatmul.f32.gmra.mxu0 %v1428
    %v1430 = vpop.f32.mrf.mxu0
    %v1431 = vadd.f32 0.0, %v1430
    %v1432 = vand.u32 %v1340, 4294901760
    %v1433 = vsub.f32 %v1340, %v1432
    %v1434 = vand.u32 %v1433, 4294901760
    %v1435 = vsub.f32 %v1433, %v1434
    %v1436 = vand.u32 %v1435, 4294901760
    %1437 = vmatmul.f32.gmra.mxu0 %v1436
    %v1438 = vpop.f32.mrf.mxu0
    %v1439 = vadd.f32 0.0, %v1438
    %v1440 = vand.u32 %v1342, 4294901760
    %v1441 = vsub.f32 %v1342, %v1440
    %v1442 = vand.u32 %v1441, 4294901760
    %v1443 = vsub.f32 %v1441, %v1442
    %v1444 = vand.u32 %v1443, 4294901760
    %1445 = vmatmul.f32.gmra.mxu0 %v1444
    %v1446 = vpop.f32.mrf.mxu0
    %v1447 = vadd.f32 0.0, %v1446
    %v1448 = vand.u32 %v1344, 4294901760
    %v1449 = vsub.f32 %v1344, %v1448
    %v1450 = vand.u32 %v1449, 4294901760
    %v1451 = vsub.f32 %v1449, %v1450
    %v1452 = vand.u32 %v1451, 4294901760
    %1453 = vmatmul.f32.gmra.mxu0 %v1452
    %v1454 = vpop.f32.mrf.mxu0
    %v1455 = vadd.f32 0.0, %v1454
    %v1456 = vand.u32 %v1346, 4294901760
    %v1457 = vsub.f32 %v1346, %v1456
    %v1458 = vand.u32 %v1457, 4294901760
    %v1459 = vsub.f32 %v1457, %v1458
    %v1460 = vand.u32 %v1459, 4294901760
    %1461 = vmatmul.f32.gmra.mxu0 %v1460
    %v1462 = vpop.f32.mrf.mxu0
    %v1463 = vadd.f32 0.0, %v1462
    %1464 = vdwg.mxu0
    %1465 = vmatpush.msra.mxu0 0.0
    %1466 = vmatpush.msra.mxu0 0.0
    %1467 = vmatpush.msra.mxu0 0.0
    %1468 = vmatpush.msra.mxu0 0.0
    %1469 = vmatpush.msra.mxu0 0.0
    %1470 = vmatpush.msra.mxu0 0.0
    %1471 = vmatpush.msra.mxu0 0.0
    %v1472 = vand.u32 %v1349, 4294901760
    %v1473 = vsub.f32 %v1349, %v1472
    %v1474 = vand.u32 %v1473, 4294901760
    %v1475 = vsub.f32 %v1473, %v1474
    %v1476 = vand.u32 %v1475, 4294901760
    %1477 = vmatpush.msra.mxu0 %v1476
    %v1478 = vand.u32 %v1302, 4294901760
    %v1479 = vsub.f32 %v1302, %v1478
    %v1480 = vand.u32 %v1479, 4294901760
    %v1481 = vsub.f32 %v1479, %v1480
    %v1482 = vand.u32 %v1481, 4294901760
    %1483 = vmatpush.msra.mxu0 %v1482
    %v1484 = vand.u32 %v1301, 4294901760
    %v1485 = vsub.f32 %v1301, %v1484
    %v1486 = vand.u32 %v1485, 4294901760
    %v1487 = vsub.f32 %v1485, %v1486
    %v1488 = vand.u32 %v1487, 4294901760
    %1489 = vmatpush.msra.mxu0 %v1488
    %v1490 = vand.u32 %v1300, 4294901760
    %v1491 = vsub.f32 %v1300, %v1490
    %v1492 = vand.u32 %v1491, 4294901760
    %v1493 = vsub.f32 %v1491, %v1492
    %v1494 = vand.u32 %v1493, 4294901760
    %1495 = vmatpush.msra.mxu0 %v1494
    %v1496 = vand.u32 %v1299, 4294901760
    %v1497 = vsub.f32 %v1299, %v1496
    %v1498 = vand.u32 %v1497, 4294901760
    %v1499 = vsub.f32 %v1497, %v1498
    %v1500 = vand.u32 %v1499, 4294901760
    %1501 = vmatpush.msra.mxu0 %v1500
    %v1502 = vand.u32 %v1298, 4294901760
    %v1503 = vsub.f32 %v1298, %v1502
    %v1504 = vand.u32 %v1503, 4294901760
    %v1505 = vsub.f32 %v1503, %v1504
    %v1506 = vand.u32 %v1505, 4294901760
    %1507 = vmatpush.msra.mxu0 %v1506
    %v1508 = vand.u32 %v1297, 4294901760
    %v1509 = vsub.f32 %v1297, %v1508
    %v1510 = vand.u32 %v1509, 4294901760
    %v1511 = vsub.f32 %v1509, %v1510
    %v1512 = vand.u32 %v1511, 4294901760
    %1513 = vmatpush.msra.mxu0 %v1512
    %v1514 = vand.u32 %v1296, 4294901760
    %v1515 = vsub.f32 %v1296, %v1514
    %v1516 = vand.u32 %v1515, 4294901760
    %v1517 = vsub.f32 %v1515, %v1516
    %v1518 = vand.u32 %v1517, 4294901760
    %1519 = vmatpush.msra.mxu0 %v1518
    %v1520 = vand.u32 %v1295, 4294901760
    %v1521 = vsub.f32 %v1295, %v1520
    %v1522 = vand.u32 %v1521, 4294901760
    %v1523 = vsub.f32 %v1521, %v1522
    %v1524 = vand.u32 %v1523, 4294901760
    %1525 = vmatpush.msra.mxu0 %v1524
    %v1526 = vand.u32 %v1326, 4294901760
    %1527 = vmatmul.f32.gmra.mxu0 %v1526
    %v1528 = vpop.f32.mrf.mxu0
    %v1529 = vadd.f32 %v1383, %v1528
    %v1530 = vand.u32 %v1328, 4294901760
    %1531 = vmatmul.f32.gmra.mxu0 %v1530
    %v1532 = vpop.f32.mrf.mxu0
    %v1533 = vadd.f32 %v1391, %v1532
    %v1534 = vand.u32 %v1330, 4294901760
    %1535 = vmatmul.f32.gmra.mxu0 %v1534
    %v1536 = vpop.f32.mrf.mxu0
    %v1537 = vadd.f32 %v1399, %v1536
    %v1538 = vand.u32 %v1332, 4294901760
    %1539 = vmatmul.f32.gmra.mxu0 %v1538
    %v1540 = vpop.f32.mrf.mxu0
    %v1541 = vadd.f32 %v1407, %v1540
    %v1542 = vand.u32 %v1334, 4294901760
    %1543 = vmatmul.f32.gmra.mxu0 %v1542
    %v1544 = vpop.f32.mrf.mxu0
    %v1545 = vadd.f32 %v1415, %v1544
    %v1546 = vand.u32 %v1336, 4294901760
    %1547 = vmatmul.f32.gmra.mxu0 %v1546
    %v1548 = vpop.f32.mrf.mxu0
    %v1549 = vadd.f32 %v1423, %v1548
    %v1550 = vand.u32 %v1338, 4294901760
    %1551 = vmatmul.f32.gmra.mxu0 %v1550
    %v1552 = vpop.f32.mrf.mxu0
    %v1553 = vadd.f32 %v1431, %v1552
    %v1554 = vand.u32 %v1340, 4294901760
    %1555 = vmatmul.f32.gmra.mxu0 %v1554
    %v1556 = vpop.f32.mrf.mxu0
    %v1557 = vadd.f32 %v1439, %v1556
    %v1558 = vand.u32 %v1342, 4294901760
    %1559 = vmatmul.f32.gmra.mxu0 %v1558
    %v1560 = vpop.f32.mrf.mxu0
    %v1561 = vadd.f32 %v1447, %v1560
    %v1562 = vand.u32 %v1344, 4294901760
    %1563 = vmatmul.f32.gmra.mxu0 %v1562
    %v1564 = vpop.f32.mrf.mxu0
    %v1565 = vadd.f32 %v1455, %v1564
    %v1566 = vand.u32 %v1346, 4294901760
    %1567 = vmatmul.f32.gmra.mxu0 %v1566
    %v1568 = vpop.f32.mrf.mxu0
    %v1569 = vadd.f32 %v1463, %v1568
    %1570 = vdwg.mxu0
    %1571 = vmatpush.msra.mxu0 0.0
    %1572 = vmatpush.msra.mxu0 0.0
    %1573 = vmatpush.msra.mxu0 0.0
    %1574 = vmatpush.msra.mxu0 0.0
    %1575 = vmatpush.msra.mxu0 0.0
    %1576 = vmatpush.msra.mxu0 0.0
    %1577 = vmatpush.msra.mxu0 0.0
    %v1578 = vand.u32 %v1349, 4294901760
    %v1579 = vsub.f32 %v1349, %v1578
    %1580 = vmatpush.msra.mxu0 %v1579
    %v1581 = vand.u32 %v1302, 4294901760
    %v1582 = vsub.f32 %v1302, %v1581
    %1583 = vmatpush.msra.mxu0 %v1582
    %v1584 = vand.u32 %v1301, 4294901760
    %v1585 = vsub.f32 %v1301, %v1584
    %1586 = vmatpush.msra.mxu0 %v1585
    %v1587 = vand.u32 %v1300, 4294901760
    %v1588 = vsub.f32 %v1300, %v1587
    %1589 = vmatpush.msra.mxu0 %v1588
    %v1590 = vand.u32 %v1299, 4294901760
    %v1591 = vsub.f32 %v1299, %v1590
    %1592 = vmatpush.msra.mxu0 %v1591
    %v1593 = vand.u32 %v1298, 4294901760
    %v1594 = vsub.f32 %v1298, %v1593
    %1595 = vmatpush.msra.mxu0 %v1594
    %v1596 = vand.u32 %v1297, 4294901760
    %v1597 = vsub.f32 %v1297, %v1596
    %1598 = vmatpush.msra.mxu0 %v1597
    %v1599 = vand.u32 %v1296, 4294901760
    %v1600 = vsub.f32 %v1296, %v1599
    %1601 = vmatpush.msra.mxu0 %v1600
    %v1602 = vand.u32 %v1295, 4294901760
    %v1603 = vsub.f32 %v1295, %v1602
    %1604 = vmatpush.msra.mxu0 %v1603
    %v1605 = vand.u32 %v1326, 4294901760
    %v1606 = vsub.f32 %v1326, %v1605
    %1607 = vmatmul.f32.gmra.mxu0 %v1606
    %v1608 = vpop.f32.mrf.mxu0
    %v1609 = vadd.f32 %v1529, %v1608
    %v1610 = vand.u32 %v1328, 4294901760
    %v1611 = vsub.f32 %v1328, %v1610
    %1612 = vmatmul.f32.gmra.mxu0 %v1611
    %v1613 = vpop.f32.mrf.mxu0
    %v1614 = vadd.f32 %v1533, %v1613
    %v1615 = vand.u32 %v1330, 4294901760
    %v1616 = vsub.f32 %v1330, %v1615
    %1617 = vmatmul.f32.gmra.mxu0 %v1616
    %v1618 = vpop.f32.mrf.mxu0
    %v1619 = vadd.f32 %v1537, %v1618
    %v1620 = vand.u32 %v1332, 4294901760
    %v1621 = vsub.f32 %v1332, %v1620
    %1622 = vmatmul.f32.gmra.mxu0 %v1621
    %v1623 = vpop.f32.mrf.mxu0
    %v1624 = vadd.f32 %v1541, %v1623
    %v1625 = vand.u32 %v1334, 4294901760
    %v1626 = vsub.f32 %v1334, %v1625
    %1627 = vmatmul.f32.gmra.mxu0 %v1626
    %v1628 = vpop.f32.mrf.mxu0
    %v1629 = vadd.f32 %v1545, %v1628
    %v1630 = vand.u32 %v1336, 4294901760
    %v1631 = vsub.f32 %v1336, %v1630
    %1632 = vmatmul.f32.gmra.mxu0 %v1631
    %v1633 = vpop.f32.mrf.mxu0
    %v1634 = vadd.f32 %v1549, %v1633
    %v1635 = vand.u32 %v1338, 4294901760
    %v1636 = vsub.f32 %v1338, %v1635
    %1637 = vmatmul.f32.gmra.mxu0 %v1636
    %v1638 = vpop.f32.mrf.mxu0
    %v1639 = vadd.f32 %v1553, %v1638
    %v1640 = vand.u32 %v1340, 4294901760
    %v1641 = vsub.f32 %v1340, %v1640
    %1642 = vmatmul.f32.gmra.mxu0 %v1641
    %v1643 = vpop.f32.mrf.mxu0
    %v1644 = vadd.f32 %v1557, %v1643
    %v1645 = vand.u32 %v1342, 4294901760
    %v1646 = vsub.f32 %v1342, %v1645
    %1647 = vmatmul.f32.gmra.mxu0 %v1646
    %v1648 = vpop.f32.mrf.mxu0
    %v1649 = vadd.f32 %v1561, %v1648
    %v1650 = vand.u32 %v1344, 4294901760
    %v1651 = vsub.f32 %v1344, %v1650
    %1652 = vmatmul.f32.gmra.mxu0 %v1651
    %v1653 = vpop.f32.mrf.mxu0
    %v1654 = vadd.f32 %v1565, %v1653
    %v1655 = vand.u32 %v1346, 4294901760
    %v1656 = vsub.f32 %v1346, %v1655
    %1657 = vmatmul.f32.gmra.mxu0 %v1656
    %v1658 = vpop.f32.mrf.mxu0
    %v1659 = vadd.f32 %v1569, %v1658
    %1660 = vdwg.mxu0
    %1661 = vmatpush.msra.mxu0 0.0
    %1662 = vmatpush.msra.mxu0 0.0
    %1663 = vmatpush.msra.mxu0 0.0
    %1664 = vmatpush.msra.mxu0 0.0
    %1665 = vmatpush.msra.mxu0 0.0
    %1666 = vmatpush.msra.mxu0 0.0
    %1667 = vmatpush.msra.mxu0 0.0
    %v1668 = vand.u32 %v1349, 4294901760
    %1669 = vmatpush.msra.mxu0 %v1668
    %v1670 = vand.u32 %v1302, 4294901760
    %1671 = vmatpush.msra.mxu0 %v1670
    %v1672 = vand.u32 %v1301, 4294901760
    %1673 = vmatpush.msra.mxu0 %v1672
    %v1674 = vand.u32 %v1300, 4294901760
    %1675 = vmatpush.msra.mxu0 %v1674
    %v1676 = vand.u32 %v1299, 4294901760
    %1677 = vmatpush.msra.mxu0 %v1676
    %v1678 = vand.u32 %v1298, 4294901760
    %1679 = vmatpush.msra.mxu0 %v1678
    %v1680 = vand.u32 %v1297, 4294901760
    %1681 = vmatpush.msra.mxu0 %v1680
    %v1682 = vand.u32 %v1296, 4294901760
    %1683 = vmatpush.msra.mxu0 %v1682
    %v1684 = vand.u32 %v1295, 4294901760
    %1685 = vmatpush.msra.mxu0 %v1684
    %v1686 = vand.u32 %v1326, 4294901760
    %v1687 = vsub.f32 %v1326, %v1686
    %v1688 = vand.u32 %v1687, 4294901760
    %1689 = vmatmul.f32.gmra.mxu0 %v1688
    %v1690 = vpop.f32.mrf.mxu0
    %v1691 = vadd.f32 %v1609, %v1690
    %v1692 = vand.u32 %v1328, 4294901760
    %v1693 = vsub.f32 %v1328, %v1692
    %v1694 = vand.u32 %v1693, 4294901760
    %1695 = vmatmul.f32.gmra.mxu0 %v1694
    %v1696 = vpop.f32.mrf.mxu0
    %v1697 = vadd.f32 %v1614, %v1696
    %v1698 = vand.u32 %v1330, 4294901760
    %v1699 = vsub.f32 %v1330, %v1698
    %v1700 = vand.u32 %v1699, 4294901760
    %1701 = vmatmul.f32.gmra.mxu0 %v1700
    %v1702 = vpop.f32.mrf.mxu0
    %v1703 = vadd.f32 %v1619, %v1702
    %v1704 = vand.u32 %v1332, 4294901760
    %v1705 = vsub.f32 %v1332, %v1704
    %v1706 = vand.u32 %v1705, 4294901760
    %1707 = vmatmul.f32.gmra.mxu0 %v1706
    %v1708 = vpop.f32.mrf.mxu0
    %v1709 = vadd.f32 %v1624, %v1708
    %v1710 = vand.u32 %v1334, 4294901760
    %v1711 = vsub.f32 %v1334, %v1710
    %v1712 = vand.u32 %v1711, 4294901760
    %1713 = vmatmul.f32.gmra.mxu0 %v1712
    %v1714 = vpop.f32.mrf.mxu0
    %v1715 = vadd.f32 %v1629, %v1714
    %v1716 = vand.u32 %v1336, 4294901760
    %v1717 = vsub.f32 %v1336, %v1716
    %v1718 = vand.u32 %v1717, 4294901760
    %1719 = vmatmul.f32.gmra.mxu0 %v1718
    %v1720 = vpop.f32.mrf.mxu0
    %v1721 = vadd.f32 %v1634, %v1720
    %v1722 = vand.u32 %v1338, 4294901760
    %v1723 = vsub.f32 %v1338, %v1722
    %v1724 = vand.u32 %v1723, 4294901760
    %1725 = vmatmul.f32.gmra.mxu0 %v1724
    %v1726 = vpop.f32.mrf.mxu0
    %v1727 = vadd.f32 %v1639, %v1726
    %v1728 = vand.u32 %v1340, 4294901760
    %v1729 = vsub.f32 %v1340, %v1728
    %v1730 = vand.u32 %v1729, 4294901760
    %1731 = vmatmul.f32.gmra.mxu0 %v1730
    %v1732 = vpop.f32.mrf.mxu0
    %v1733 = vadd.f32 %v1644, %v1732
    %v1734 = vand.u32 %v1342, 4294901760
    %v1735 = vsub.f32 %v1342, %v1734
    %v1736 = vand.u32 %v1735, 4294901760
    %1737 = vmatmul.f32.gmra.mxu0 %v1736
    %v1738 = vpop.f32.mrf.mxu0
    %v1739 = vadd.f32 %v1649, %v1738
    %v1740 = vand.u32 %v1344, 4294901760
    %v1741 = vsub.f32 %v1344, %v1740
    %v1742 = vand.u32 %v1741, 4294901760
    %1743 = vmatmul.f32.gmra.mxu0 %v1742
    %v1744 = vpop.f32.mrf.mxu0
    %v1745 = vadd.f32 %v1654, %v1744
    %v1746 = vand.u32 %v1346, 4294901760
    %v1747 = vsub.f32 %v1346, %v1746
    %v1748 = vand.u32 %v1747, 4294901760
    %1749 = vmatmul.f32.gmra.mxu0 %v1748
    %v1750 = vpop.f32.mrf.mxu0
    %v1751 = vadd.f32 %v1659, %v1750
    %1752 = vdwg.mxu0
    %1753 = vmatpush.msra.mxu0 0.0
    %1754 = vmatpush.msra.mxu0 0.0
    %1755 = vmatpush.msra.mxu0 0.0
    %1756 = vmatpush.msra.mxu0 0.0
    %1757 = vmatpush.msra.mxu0 0.0
    %1758 = vmatpush.msra.mxu0 0.0
    %1759 = vmatpush.msra.mxu0 0.0
    %v1760 = vand.u32 %v1349, 4294901760
    %v1761 = vsub.f32 %v1349, %v1760
    %v1762 = vand.u32 %v1761, 4294901760
    %1763 = vmatpush.msra.mxu0 %v1762
    %v1764 = vand.u32 %v1302, 4294901760
    %v1765 = vsub.f32 %v1302, %v1764
    %v1766 = vand.u32 %v1765, 4294901760
    %1767 = vmatpush.msra.mxu0 %v1766
    %v1768 = vand.u32 %v1301, 4294901760
    %v1769 = vsub.f32 %v1301, %v1768
    %v1770 = vand.u32 %v1769, 4294901760
    %1771 = vmatpush.msra.mxu0 %v1770
    %v1772 = vand.u32 %v1300, 4294901760
    %v1773 = vsub.f32 %v1300, %v1772
    %v1774 = vand.u32 %v1773, 4294901760
    %1775 = vmatpush.msra.mxu0 %v1774
    %v1776 = vand.u32 %v1299, 4294901760
    %v1777 = vsub.f32 %v1299, %v1776
    %v1778 = vand.u32 %v1777, 4294901760
    %1779 = vmatpush.msra.mxu0 %v1778
    %v1780 = vand.u32 %v1298, 4294901760
    %v1781 = vsub.f32 %v1298, %v1780
    %v1782 = vand.u32 %v1781, 4294901760
    %1783 = vmatpush.msra.mxu0 %v1782
    %v1784 = vand.u32 %v1297, 4294901760
    %v1785 = vsub.f32 %v1297, %v1784
    %v1786 = vand.u32 %v1785, 4294901760
    %1787 = vmatpush.msra.mxu0 %v1786
    %v1788 = vand.u32 %v1296, 4294901760
    %v1789 = vsub.f32 %v1296, %v1788
    %v1790 = vand.u32 %v1789, 4294901760
    %1791 = vmatpush.msra.mxu0 %v1790
    %v1792 = vand.u32 %v1295, 4294901760
    %v1793 = vsub.f32 %v1295, %v1792
    %v1794 = vand.u32 %v1793, 4294901760
    %1795 = vmatpush.msra.mxu0 %v1794
    %v1796 = vand.u32 %v1326, 4294901760
    %1797 = vmatmul.f32.gmra.mxu0 %v1796
    %v1798 = vpop.f32.mrf.mxu0
    %v1799 = vadd.f32 %v1691, %v1798
    %v1800 = vand.u32 %v1328, 4294901760
    %1801 = vmatmul.f32.gmra.mxu0 %v1800
    %v1802 = vpop.f32.mrf.mxu0
    %v1803 = vadd.f32 %v1697, %v1802
    %v1804 = vand.u32 %v1330, 4294901760
    %1805 = vmatmul.f32.gmra.mxu0 %v1804
    %v1806 = vpop.f32.mrf.mxu0
    %v1807 = vadd.f32 %v1703, %v1806
    %v1808 = vand.u32 %v1332, 4294901760
    %1809 = vmatmul.f32.gmra.mxu0 %v1808
    %v1810 = vpop.f32.mrf.mxu0
    %v1811 = vadd.f32 %v1709, %v1810
    %v1812 = vand.u32 %v1334, 4294901760
    %1813 = vmatmul.f32.gmra.mxu0 %v1812
    %v1814 = vpop.f32.mrf.mxu0
    %v1815 = vadd.f32 %v1715, %v1814
    %v1816 = vand.u32 %v1336, 4294901760
    %1817 = vmatmul.f32.gmra.mxu0 %v1816
    %v1818 = vpop.f32.mrf.mxu0
    %v1819 = vadd.f32 %v1721, %v1818
    %v1820 = vand.u32 %v1338, 4294901760
    %1821 = vmatmul.f32.gmra.mxu0 %v1820
    %v1822 = vpop.f32.mrf.mxu0
    %v1823 = vadd.f32 %v1727, %v1822
    %v1824 = vand.u32 %v1340, 4294901760
    %1825 = vmatmul.f32.gmra.mxu0 %v1824
    %v1826 = vpop.f32.mrf.mxu0
    %v1827 = vadd.f32 %v1733, %v1826
    %v1828 = vand.u32 %v1342, 4294901760
    %1829 = vmatmul.f32.gmra.mxu0 %v1828
    %v1830 = vpop.f32.mrf.mxu0
    %v1831 = vadd.f32 %v1739, %v1830
    %v1832 = vand.u32 %v1344, 4294901760
    %1833 = vmatmul.f32.gmra.mxu0 %v1832
    %v1834 = vpop.f32.mrf.mxu0
    %v1835 = vadd.f32 %v1745, %v1834
    %v1836 = vand.u32 %v1346, 4294901760
    %1837 = vmatmul.f32.gmra.mxu0 %v1836
    %v1838 = vpop.f32.mrf.mxu0
    %v1839 = vadd.f32 %v1751, %v1838
    %1840 = vdwg.mxu0
    %1841 = vmatpush.msra.mxu0 0.0
    %1842 = vmatpush.msra.mxu0 0.0
    %1843 = vmatpush.msra.mxu0 0.0
    %1844 = vmatpush.msra.mxu0 0.0
    %1845 = vmatpush.msra.mxu0 0.0
    %1846 = vmatpush.msra.mxu0 0.0
    %1847 = vmatpush.msra.mxu0 0.0
    %v1848 = vand.u32 %v1349, 4294901760
    %1849 = vmatpush.msra.mxu0 %v1848
    %v1850 = vand.u32 %v1302, 4294901760
    %1851 = vmatpush.msra.mxu0 %v1850
    %v1852 = vand.u32 %v1301, 4294901760
    %1853 = vmatpush.msra.mxu0 %v1852
    %v1854 = vand.u32 %v1300, 4294901760
    %1855 = vmatpush.msra.mxu0 %v1854
    %v1856 = vand.u32 %v1299, 4294901760
    %1857 = vmatpush.msra.mxu0 %v1856
    %v1858 = vand.u32 %v1298, 4294901760
    %1859 = vmatpush.msra.mxu0 %v1858
    %v1860 = vand.u32 %v1297, 4294901760
    %1861 = vmatpush.msra.mxu0 %v1860
    %v1862 = vand.u32 %v1296, 4294901760
    %1863 = vmatpush.msra.mxu0 %v1862
    %v1864 = vand.u32 %v1295, 4294901760
    %1865 = vmatpush.msra.mxu0 %v1864
    %v1866 = vand.u32 %v1326, 4294901760
    %1867 = vmatmul.f32.gmra.mxu0 %v1866
    %v1868 = vpop.f32.mrf.mxu0
    %v1869 = vadd.f32 %v1799, %v1868
    %v1870 = vand.u32 %v1328, 4294901760
    %1871 = vmatmul.f32.gmra.mxu0 %v1870
    %v1872 = vpop.f32.mrf.mxu0
    %v1873 = vadd.f32 %v1803, %v1872
    %v1874 = vand.u32 %v1330, 4294901760
    %1875 = vmatmul.f32.gmra.mxu0 %v1874
    %v1876 = vpop.f32.mrf.mxu0
    %v1877 = vadd.f32 %v1807, %v1876
    %v1878 = vand.u32 %v1332, 4294901760
    %1879 = vmatmul.f32.gmra.mxu0 %v1878
    %v1880 = vpop.f32.mrf.mxu0
    %v1881 = vadd.f32 %v1811, %v1880
    %v1882 = vand.u32 %v1334, 4294901760
    %1883 = vmatmul.f32.gmra.mxu0 %v1882
    %v1884 = vpop.f32.mrf.mxu0
    %v1885 = vadd.f32 %v1815, %v1884
    %v1886 = vand.u32 %v1336, 4294901760
    %1887 = vmatmul.f32.gmra.mxu0 %v1886
    %v1888 = vpop.f32.mrf.mxu0
    %v1889 = vadd.f32 %v1819, %v1888
    %v1890 = vand.u32 %v1338, 4294901760
    %1891 = vmatmul.f32.gmra.mxu0 %v1890
    %v1892 = vpop.f32.mrf.mxu0
    %v1893 = vadd.f32 %v1823, %v1892
    %v1894 = vand.u32 %v1340, 4294901760
    %1895 = vmatmul.f32.gmra.mxu0 %v1894
    %v1896 = vpop.f32.mrf.mxu0
    %v1897 = vadd.f32 %v1827, %v1896
    %v1898 = vand.u32 %v1342, 4294901760
    %1899 = vmatmul.f32.gmra.mxu0 %v1898
    %v1900 = vpop.f32.mrf.mxu0
    %v1901 = vadd.f32 %v1831, %v1900
    %v1902 = vand.u32 %v1344, 4294901760
    %1903 = vmatmul.f32.gmra.mxu0 %v1902
    %v1904 = vpop.f32.mrf.mxu0
    %v1905 = vadd.f32 %v1835, %v1904
    %v1906 = vand.u32 %v1346, 4294901760
    %1907 = vmatmul.f32.gmra.mxu0 %v1906
    %v1908 = vpop.f32.mrf.mxu0
    %v1909 = vadd.f32 %v1839, %v1908
    %1910 = vdwg.mxu0
    %v1911 = vadd.f32 %v1252, %v1869
    %v1912 = vadd.f32 %v1256, %v1873
    %v1913 = vadd.f32 %v1260, %v1877
    %v1914 = vadd.f32 %v1264, %v1881
    %v1915 = vadd.f32 %v1268, %v1885
    %v1916 = vadd.f32 %v1272, %v1889
    %v1917 = vadd.f32 %v1276, %v1893
    %v1918 = vadd.f32 %v1280, %v1897
    %v1919 = vadd.f32 %v1284, %v1901
    %v1920 = vadd.f32 %v1288, %v1905
    %v1921 = vadd.f32 %v1292, %v1909
    %v1923 = vperm.slane %v69, 0
    %v1925 = vadd.f32 %v1911, %v1923
    %v1926 = vadd.f32 %v1912, %v1923
    %v1927 = vadd.f32 %v1913, %v1923
    %v1928 = vadd.f32 %v1914, %v1923
    %v1929 = vadd.f32 %v1915, %v1923
    %v1930 = vadd.f32 %v1916, %v1923
    %v1931 = vadd.f32 %v1917, %v1923
    %v1932 = vadd.f32 %v1918, %v1923
    %v1933 = vadd.f32 %v1919, %v1923
    %v1934 = vadd.f32 %v1920, %v1923
    %v1935 = vadd.f32 %v1921, %v1923
    %v1936 = vld [vmem:[%s3] sm:$0xff]
    %v1937 = vld [vmem:[%s3 + $0x8] sm:$0xff]
    %v1938 = vld [vmem:[%s3 + $0x10] sm:$0xff]
    %v1939 = vld [vmem:[%s3 + $0x18] sm:$0xff]
    %v1940 = vld [vmem:[%s3 + $0x20] sm:$0xff]
    %v1941 = vld [vmem:[%s4] sm:$0xff]
    %v1942 = vld [vmem:[%s4 + $0x8] sm:$0xff]
    %v1943 = vld [vmem:[%s4 + $0x10] sm:$0xff]
    %v1944 = vld [vmem:[%s4 + $0x18] sm:$0xff]
    %v1945 = vld [vmem:[%s4 + $0x20] sm:$0xff]
    %v1946 = vld [vmem:[%s4 + $0x28] sm:$0xff]
    %v1947 = vld [vmem:[%s4 + $0x30] sm:$0xff]
    %v1948 = vld [vmem:[%s4 + $0x38] sm:$0xff]
    %v1949 = vld [vmem:[%s4 + $0x40] sm:$0xff]
    %v1950 = vld [vmem:[%s4 + $0x48] sm:$0xf]
    %v1962 = vrot.slane %v1925, 1
    %v1963 = vrot.slane %v1926, 1
    %v1964 = vsel %vm100, %v1962, %v1963
    %v1965 = vrot.slane %v1927, 1
    %v1966 = vsel %vm100, %v1963, %v1965
    %v1967 = vrot.slane %v1928, 1
    %v1968 = vsel %vm100, %v1965, %v1967
    %v1969 = vrot.slane %v1929, 1
    %v1970 = vsel %vm100, %v1967, %v1969
    %v1971 = vrot.slane %v1930, 1
    %v1972 = vsel %vm100, %v1969, %v1971
    %v1973 = vrot.slane %v1931, 1
    %v1974 = vsel %vm100, %v1971, %v1973
    %v1975 = vrot.slane %v1932, 1
    %v1976 = vsel %vm100, %v1973, %v1975
    %v1977 = vrot.slane %v1933, 1
    %v1978 = vsel %vm100, %v1975, %v1977
    %v1979 = vrot.slane %v1934, 1
    %v1980 = vsel %vm100, %v1977, %v1979
    %v1981 = vrot.slane %v1935, 1
    %v1982 = vsel %vm100, %v1979, %v1981
    %v1994 = vmax.f32 %v1925, %v1964
    %v1995 = vmax.f32 %v1926, %v1966
    %v1996 = vmax.f32 %v1927, %v1968
    %v1997 = vmax.f32 %v1928, %v1970
    %v1998 = vmax.f32 %v1929, %v1972
    %v1999 = vmax.f32 %v1930, %v1974
    %v2000 = vmax.f32 %v1931, %v1976
    %v2001 = vmax.f32 %v1932, %v1978
    %v2002 = vmax.f32 %v1933, %v1980
    %v2003 = vmax.f32 %v1934, %v1982
    %v2004 = vmax.f32 %v1935, %v1981
    %vm2005 = vcmask 695296
    %v2007 = vsel %vm2005, %v1936, 0
    %v2010 = vsel %vm2005, %v1937, 0
    %v2013 = vsel %vm2005, %v1938, 0
    %v2016 = vsel %vm2005, %v1939, 0
    %v2019 = vsel %vm2005, %v1940, 0
    %vm2021 = vcmask 1044480
    %v2023 = vsel %vm2021, %v2004, 0
    %2025 = vmatpush.msra.mxu0 0.0
    %2026 = vmatpush.msra.mxu0 0.0
    %2027 = vmatpush.msra.mxu0 0.0
    %2028 = vmatpush.msra.mxu0 0.0
    %2029 = vmatpush.msra.mxu0 0.0
    %v2030 = vand.u32 %v2023, 4294901760
    %2031 = vmatpush.msra.mxu0 %v2030
    %v2032 = vand.u32 %v2003, 4294901760
    %2033 = vmatpush.msra.mxu0 %v2032
    %v2034 = vand.u32 %v2002, 4294901760
    %2035 = vmatpush.msra.mxu0 %v2034
    %v2036 = vand.u32 %v2001, 4294901760
    %2037 = vmatpush.msra.mxu0 %v2036
    %v2038 = vand.u32 %v2000, 4294901760
    %2039 = vmatpush.msra.mxu0 %v2038
    %v2040 = vand.u32 %v1999, 4294901760
    %2041 = vmatpush.msra.mxu0 %v2040
    %v2042 = vand.u32 %v1998, 4294901760
    %2043 = vmatpush.msra.mxu0 %v2042
    %v2044 = vand.u32 %v1997, 4294901760
    %2045 = vmatpush.msra.mxu0 %v2044
    %v2046 = vand.u32 %v1996, 4294901760
    %2047 = vmatpush.msra.mxu0 %v2046
    %v2048 = vand.u32 %v1995, 4294901760
    %2049 = vmatpush.msra.mxu0 %v2048
    %v2050 = vand.u32 %v1994, 4294901760
    %2051 = vmatpush.msra.mxu0 %v2050
    %v2052 = vand.u32 %v2007, 4294901760
    %v2053 = vsub.f32 %v2007, %v2052
    %v2054 = vand.u32 %v2053, 4294901760
    %v2055 = vsub.f32 %v2053, %v2054
    %v2056 = vand.u32 %v2055, 4294901760
    %2057 = vmatmul.f32.gmra.mxu0 %v2056
    %v2058 = vpop.f32.mrf.mxu0
    %v2059 = vadd.f32 0.0, %v2058
    %v2060 = vand.u32 %v2010, 4294901760
    %v2061 = vsub.f32 %v2010, %v2060
    %v2062 = vand.u32 %v2061, 4294901760
    %v2063 = vsub.f32 %v2061, %v2062
    %v2064 = vand.u32 %v2063, 4294901760
    %2065 = vmatmul.f32.gmra.mxu0 %v2064
    %v2066 = vpop.f32.mrf.mxu0
    %v2067 = vadd.f32 0.0, %v2066
    %v2068 = vand.u32 %v2013, 4294901760
    %v2069 = vsub.f32 %v2013, %v2068
    %v2070 = vand.u32 %v2069, 4294901760
    %v2071 = vsub.f32 %v2069, %v2070
    %v2072 = vand.u32 %v2071, 4294901760
    %2073 = vmatmul.f32.gmra.mxu0 %v2072
    %v2074 = vpop.f32.mrf.mxu0
    %v2075 = vadd.f32 0.0, %v2074
    %v2076 = vand.u32 %v2016, 4294901760
    %v2077 = vsub.f32 %v2016, %v2076
    %v2078 = vand.u32 %v2077, 4294901760
    %v2079 = vsub.f32 %v2077, %v2078
    %v2080 = vand.u32 %v2079, 4294901760
    %2081 = vmatmul.f32.gmra.mxu0 %v2080
    %v2082 = vpop.f32.mrf.mxu0
    %v2083 = vadd.f32 0.0, %v2082
    %v2084 = vand.u32 %v2019, 4294901760
    %v2085 = vsub.f32 %v2019, %v2084
    %v2086 = vand.u32 %v2085, 4294901760
    %v2087 = vsub.f32 %v2085, %v2086
    %v2088 = vand.u32 %v2087, 4294901760
    %2089 = vmatmul.f32.gmra.mxu0 %v2088
    %v2090 = vpop.f32.mrf.mxu0
    %v2091 = vadd.f32 0.0, %v2090
    %2092 = vdwg.mxu0
    %2093 = vmatpush.msra.mxu0 0.0
    %2094 = vmatpush.msra.mxu0 0.0
    %2095 = vmatpush.msra.mxu0 0.0
    %2096 = vmatpush.msra.mxu0 0.0
    %2097 = vmatpush.msra.mxu0 0.0
    %v2098 = vand.u32 %v2023, 4294901760
    %v2099 = vsub.f32 %v2023, %v2098
    %v2100 = vand.u32 %v2099, 4294901760
    %v2101 = vsub.f32 %v2099, %v2100
    %v2102 = vand.u32 %v2101, 4294901760
    %2103 = vmatpush.msra.mxu0 %v2102
    %v2104 = vand.u32 %v2003, 4294901760
    %v2105 = vsub.f32 %v2003, %v2104
    %v2106 = vand.u32 %v2105, 4294901760
    %v2107 = vsub.f32 %v2105, %v2106
    %v2108 = vand.u32 %v2107, 4294901760
    %2109 = vmatpush.msra.mxu0 %v2108
    %v2110 = vand.u32 %v2002, 4294901760
    %v2111 = vsub.f32 %v2002, %v2110
    %v2112 = vand.u32 %v2111, 4294901760
    %v2113 = vsub.f32 %v2111, %v2112
    %v2114 = vand.u32 %v2113, 4294901760
    %2115 = vmatpush.msra.mxu0 %v2114
    %v2116 = vand.u32 %v2001, 4294901760
    %v2117 = vsub.f32 %v2001, %v2116
    %v2118 = vand.u32 %v2117, 4294901760
    %v2119 = vsub.f32 %v2117, %v2118
    %v2120 = vand.u32 %v2119, 4294901760
    %2121 = vmatpush.msra.mxu0 %v2120
    %v2122 = vand.u32 %v2000, 4294901760
    %v2123 = vsub.f32 %v2000, %v2122
    %v2124 = vand.u32 %v2123, 4294901760
    %v2125 = vsub.f32 %v2123, %v2124
    %v2126 = vand.u32 %v2125, 4294901760
    %2127 = vmatpush.msra.mxu0 %v2126
    %v2128 = vand.u32 %v1999, 4294901760
    %v2129 = vsub.f32 %v1999, %v2128
    %v2130 = vand.u32 %v2129, 4294901760
    %v2131 = vsub.f32 %v2129, %v2130
    %v2132 = vand.u32 %v2131, 4294901760
    %2133 = vmatpush.msra.mxu0 %v2132
    %v2134 = vand.u32 %v1998, 4294901760
    %v2135 = vsub.f32 %v1998, %v2134
    %v2136 = vand.u32 %v2135, 4294901760
    %v2137 = vsub.f32 %v2135, %v2136
    %v2138 = vand.u32 %v2137, 4294901760
    %2139 = vmatpush.msra.mxu0 %v2138
    %v2140 = vand.u32 %v1997, 4294901760
    %v2141 = vsub.f32 %v1997, %v2140
    %v2142 = vand.u32 %v2141, 4294901760
    %v2143 = vsub.f32 %v2141, %v2142
    %v2144 = vand.u32 %v2143, 4294901760
    %2145 = vmatpush.msra.mxu0 %v2144
    %v2146 = vand.u32 %v1996, 4294901760
    %v2147 = vsub.f32 %v1996, %v2146
    %v2148 = vand.u32 %v2147, 4294901760
    %v2149 = vsub.f32 %v2147, %v2148
    %v2150 = vand.u32 %v2149, 4294901760
    %2151 = vmatpush.msra.mxu0 %v2150
    %v2152 = vand.u32 %v1995, 4294901760
    %v2153 = vsub.f32 %v1995, %v2152
    %v2154 = vand.u32 %v2153, 4294901760
    %v2155 = vsub.f32 %v2153, %v2154
    %v2156 = vand.u32 %v2155, 4294901760
    %2157 = vmatpush.msra.mxu0 %v2156
    %v2158 = vand.u32 %v1994, 4294901760
    %v2159 = vsub.f32 %v1994, %v2158
    %v2160 = vand.u32 %v2159, 4294901760
    %v2161 = vsub.f32 %v2159, %v2160
    %v2162 = vand.u32 %v2161, 4294901760
    %2163 = vmatpush.msra.mxu0 %v2162
    %v2164 = vand.u32 %v2007, 4294901760
    %2165 = vmatmul.f32.gmra.mxu0 %v2164
    %v2166 = vpop.f32.mrf.mxu0
    %v2167 = vadd.f32 %v2059, %v2166
    %v2168 = vand.u32 %v2010, 4294901760
    %2169 = vmatmul.f32.gmra.mxu0 %v2168
    %v2170 = vpop.f32.mrf.mxu0
    %v2171 = vadd.f32 %v2067, %v2170
    %v2172 = vand.u32 %v2013, 4294901760
    %2173 = vmatmul.f32.gmra.mxu0 %v2172
    %v2174 = vpop.f32.mrf.mxu0
    %v2175 = vadd.f32 %v2075, %v2174
    %v2176 = vand.u32 %v2016, 4294901760
    %2177 = vmatmul.f32.gmra.mxu0 %v2176
    %v2178 = vpop.f32.mrf.mxu0
    %v2179 = vadd.f32 %v2083, %v2178
    %v2180 = vand.u32 %v2019, 4294901760
    %2181 = vmatmul.f32.gmra.mxu0 %v2180
    %v2182 = vpop.f32.mrf.mxu0
    %v2183 = vadd.f32 %v2091, %v2182
    %2184 = vdwg.mxu0
    %2185 = vmatpush.msra.mxu0 0.0
    %2186 = vmatpush.msra.mxu0 0.0
    %2187 = vmatpush.msra.mxu0 0.0
    %2188 = vmatpush.msra.mxu0 0.0
    %2189 = vmatpush.msra.mxu0 0.0
    %v2190 = vand.u32 %v2023, 4294901760
    %v2191 = vsub.f32 %v2023, %v2190
    %2192 = vmatpush.msra.mxu0 %v2191
    %v2193 = vand.u32 %v2003, 4294901760
    %v2194 = vsub.f32 %v2003, %v2193
    %2195 = vmatpush.msra.mxu0 %v2194
    %v2196 = vand.u32 %v2002, 4294901760
    %v2197 = vsub.f32 %v2002, %v2196
    %2198 = vmatpush.msra.mxu0 %v2197
    %v2199 = vand.u32 %v2001, 4294901760
    %v2200 = vsub.f32 %v2001, %v2199
    %2201 = vmatpush.msra.mxu0 %v2200
    %v2202 = vand.u32 %v2000, 4294901760
    %v2203 = vsub.f32 %v2000, %v2202
    %2204 = vmatpush.msra.mxu0 %v2203
    %v2205 = vand.u32 %v1999, 4294901760
    %v2206 = vsub.f32 %v1999, %v2205
    %2207 = vmatpush.msra.mxu0 %v2206
    %v2208 = vand.u32 %v1998, 4294901760
    %v2209 = vsub.f32 %v1998, %v2208
    %2210 = vmatpush.msra.mxu0 %v2209
    %v2211 = vand.u32 %v1997, 4294901760
    %v2212 = vsub.f32 %v1997, %v2211
    %2213 = vmatpush.msra.mxu0 %v2212
    %v2214 = vand.u32 %v1996, 4294901760
    %v2215 = vsub.f32 %v1996, %v2214
    %2216 = vmatpush.msra.mxu0 %v2215
    %v2217 = vand.u32 %v1995, 4294901760
    %v2218 = vsub.f32 %v1995, %v2217
    %2219 = vmatpush.msra.mxu0 %v2218
    %v2220 = vand.u32 %v1994, 4294901760
    %v2221 = vsub.f32 %v1994, %v2220
    %2222 = vmatpush.msra.mxu0 %v2221
    %v2223 = vand.u32 %v2007, 4294901760
    %v2224 = vsub.f32 %v2007, %v2223
    %2225 = vmatmul.f32.gmra.mxu0 %v2224
    %v2226 = vpop.f32.mrf.mxu0
    %v2227 = vadd.f32 %v2167, %v2226
    %v2228 = vand.u32 %v2010, 4294901760
    %v2229 = vsub.f32 %v2010, %v2228
    %2230 = vmatmul.f32.gmra.mxu0 %v2229
    %v2231 = vpop.f32.mrf.mxu0
    %v2232 = vadd.f32 %v2171, %v2231
    %v2233 = vand.u32 %v2013, 4294901760
    %v2234 = vsub.f32 %v2013, %v2233
    %2235 = vmatmul.f32.gmra.mxu0 %v2234
    %v2236 = vpop.f32.mrf.mxu0
    %v2237 = vadd.f32 %v2175, %v2236
    %v2238 = vand.u32 %v2016, 4294901760
    %v2239 = vsub.f32 %v2016, %v2238
    %2240 = vmatmul.f32.gmra.mxu0 %v2239
    %v2241 = vpop.f32.mrf.mxu0
    %v2242 = vadd.f32 %v2179, %v2241
    %v2243 = vand.u32 %v2019, 4294901760
    %v2244 = vsub.f32 %v2019, %v2243
    %2245 = vmatmul.f32.gmra.mxu0 %v2244
    %v2246 = vpop.f32.mrf.mxu0
    %v2247 = vadd.f32 %v2183, %v2246
    %2248 = vdwg.mxu0
    %2249 = vmatpush.msra.mxu0 0.0
    %2250 = vmatpush.msra.mxu0 0.0
    %2251 = vmatpush.msra.mxu0 0.0
    %2252 = vmatpush.msra.mxu0 0.0
    %2253 = vmatpush.msra.mxu0 0.0
    %v2254 = vand.u32 %v2023, 4294901760
    %2255 = vmatpush.msra.mxu0 %v2254
    %v2256 = vand.u32 %v2003, 4294901760
    %2257 = vmatpush.msra.mxu0 %v2256
    %v2258 = vand.u32 %v2002, 4294901760
    %2259 = vmatpush.msra.mxu0 %v2258
    %v2260 = vand.u32 %v2001, 4294901760
    %2261 = vmatpush.msra.mxu0 %v2260
    %v2262 = vand.u32 %v2000, 4294901760
    %2263 = vmatpush.msra.mxu0 %v2262
    %v2264 = vand.u32 %v1999, 4294901760
    %2265 = vmatpush.msra.mxu0 %v2264
    %v2266 = vand.u32 %v1998, 4294901760
    %2267 = vmatpush.msra.mxu0 %v2266
    %v2268 = vand.u32 %v1997, 4294901760
    %2269 = vmatpush.msra.mxu0 %v2268
    %v2270 = vand.u32 %v1996, 4294901760
    %2271 = vmatpush.msra.mxu0 %v2270
    %v2272 = vand.u32 %v1995, 4294901760
    %2273 = vmatpush.msra.mxu0 %v2272
    %v2274 = vand.u32 %v1994, 4294901760
    %2275 = vmatpush.msra.mxu0 %v2274
    %v2276 = vand.u32 %v2007, 4294901760
    %v2277 = vsub.f32 %v2007, %v2276
    %v2278 = vand.u32 %v2277, 4294901760
    %2279 = vmatmul.f32.gmra.mxu0 %v2278
    %v2280 = vpop.f32.mrf.mxu0
    %v2281 = vadd.f32 %v2227, %v2280
    %v2282 = vand.u32 %v2010, 4294901760
    %v2283 = vsub.f32 %v2010, %v2282
    %v2284 = vand.u32 %v2283, 4294901760
    %2285 = vmatmul.f32.gmra.mxu0 %v2284
    %v2286 = vpop.f32.mrf.mxu0
    %v2287 = vadd.f32 %v2232, %v2286
    %v2288 = vand.u32 %v2013, 4294901760
    %v2289 = vsub.f32 %v2013, %v2288
    %v2290 = vand.u32 %v2289, 4294901760
    %2291 = vmatmul.f32.gmra.mxu0 %v2290
    %v2292 = vpop.f32.mrf.mxu0
    %v2293 = vadd.f32 %v2237, %v2292
    %v2294 = vand.u32 %v2016, 4294901760
    %v2295 = vsub.f32 %v2016, %v2294
    %v2296 = vand.u32 %v2295, 4294901760
    %2297 = vmatmul.f32.gmra.mxu0 %v2296
    %v2298 = vpop.f32.mrf.mxu0
    %v2299 = vadd.f32 %v2242, %v2298
    %v2300 = vand.u32 %v2019, 4294901760
    %v2301 = vsub.f32 %v2019, %v2300
    %v2302 = vand.u32 %v2301, 4294901760
    %2303 = vmatmul.f32.gmra.mxu0 %v2302
    %v2304 = vpop.f32.mrf.mxu0
    %v2305 = vadd.f32 %v2247, %v2304
    %2306 = vdwg.mxu0
    %2307 = vmatpush.msra.mxu0 0.0
    %2308 = vmatpush.msra.mxu0 0.0
    %2309 = vmatpush.msra.mxu0 0.0
    %2310 = vmatpush.msra.mxu0 0.0
    %2311 = vmatpush.msra.mxu0 0.0
    %v2312 = vand.u32 %v2023, 4294901760
    %v2313 = vsub.f32 %v2023, %v2312
    %v2314 = vand.u32 %v2313, 4294901760
    %2315 = vmatpush.msra.mxu0 %v2314
    %v2316 = vand.u32 %v2003, 4294901760
    %v2317 = vsub.f32 %v2003, %v2316
    %v2318 = vand.u32 %v2317, 4294901760
    %2319 = vmatpush.msra.mxu0 %v2318
    %v2320 = vand.u32 %v2002, 4294901760
    %v2321 = vsub.f32 %v2002, %v2320
    %v2322 = vand.u32 %v2321, 4294901760
    %2323 = vmatpush.msra.mxu0 %v2322
    %v2324 = vand.u32 %v2001, 4294901760
    %v2325 = vsub.f32 %v2001, %v2324
    %v2326 = vand.u32 %v2325, 4294901760
    %2327 = vmatpush.msra.mxu0 %v2326
    %v2328 = vand.u32 %v2000, 4294901760
    %v2329 = vsub.f32 %v2000, %v2328
    %v2330 = vand.u32 %v2329, 4294901760
    %2331 = vmatpush.msra.mxu0 %v2330
    %v2332 = vand.u32 %v1999, 4294901760
    %v2333 = vsub.f32 %v1999, %v2332
    %v2334 = vand.u32 %v2333, 4294901760
    %2335 = vmatpush.msra.mxu0 %v2334
    %v2336 = vand.u32 %v1998, 4294901760
    %v2337 = vsub.f32 %v1998, %v2336
    %v2338 = vand.u32 %v2337, 4294901760
    %2339 = vmatpush.msra.mxu0 %v2338
    %v2340 = vand.u32 %v1997, 4294901760
    %v2341 = vsub.f32 %v1997, %v2340
    %v2342 = vand.u32 %v2341, 4294901760
    %2343 = vmatpush.msra.mxu0 %v2342
    %v2344 = vand.u32 %v1996, 4294901760
    %v2345 = vsub.f32 %v1996, %v2344
    %v2346 = vand.u32 %v2345, 4294901760
    %2347 = vmatpush.msra.mxu0 %v2346
    %v2348 = vand.u32 %v1995, 4294901760
    %v2349 = vsub.f32 %v1995, %v2348
    %v2350 = vand.u32 %v2349, 4294901760
    %2351 = vmatpush.msra.mxu0 %v2350
    %v2352 = vand.u32 %v1994, 4294901760
    %v2353 = vsub.f32 %v1994, %v2352
    %v2354 = vand.u32 %v2353, 4294901760
    %2355 = vmatpush.msra.mxu0 %v2354
    %v2356 = vand.u32 %v2007, 4294901760
    %2357 = vmatmul.f32.gmra.mxu0 %v2356
    %v2358 = vpop.f32.mrf.mxu0
    %v2359 = vadd.f32 %v2281, %v2358
    %v2360 = vand.u32 %v2010, 4294901760
    %2361 = vmatmul.f32.gmra.mxu0 %v2360
    %v2362 = vpop.f32.mrf.mxu0
    %v2363 = vadd.f32 %v2287, %v2362
    %v2364 = vand.u32 %v2013, 4294901760
    %2365 = vmatmul.f32.gmra.mxu0 %v2364
    %v2366 = vpop.f32.mrf.mxu0
    %v2367 = vadd.f32 %v2293, %v2366
    %v2368 = vand.u32 %v2016, 4294901760
    %2369 = vmatmul.f32.gmra.mxu0 %v2368
    %v2370 = vpop.f32.mrf.mxu0
    %v2371 = vadd.f32 %v2299, %v2370
    %v2372 = vand.u32 %v2019, 4294901760
    %2373 = vmatmul.f32.gmra.mxu0 %v2372
    %v2374 = vpop.f32.mrf.mxu0
    %v2375 = vadd.f32 %v2305, %v2374
    %2376 = vdwg.mxu0
    %2377 = vmatpush.msra.mxu0 0.0
    %2378 = vmatpush.msra.mxu0 0.0
    %2379 = vmatpush.msra.mxu0 0.0
    %2380 = vmatpush.msra.mxu0 0.0
    %2381 = vmatpush.msra.mxu0 0.0
    %v2382 = vand.u32 %v2023, 4294901760
    %2383 = vmatpush.msra.mxu0 %v2382
    %v2384 = vand.u32 %v2003, 4294901760
    %2385 = vmatpush.msra.mxu0 %v2384
    %v2386 = vand.u32 %v2002, 4294901760
    %2387 = vmatpush.msra.mxu0 %v2386
    %v2388 = vand.u32 %v2001, 4294901760
    %2389 = vmatpush.msra.mxu0 %v2388
    %v2390 = vand.u32 %v2000, 4294901760
    %2391 = vmatpush.msra.mxu0 %v2390
    %v2392 = vand.u32 %v1999, 4294901760
    %2393 = vmatpush.msra.mxu0 %v2392
    %v2394 = vand.u32 %v1998, 4294901760
    %2395 = vmatpush.msra.mxu0 %v2394
    %v2396 = vand.u32 %v1997, 4294901760
    %2397 = vmatpush.msra.mxu0 %v2396
    %v2398 = vand.u32 %v1996, 4294901760
    %2399 = vmatpush.msra.mxu0 %v2398
    %v2400 = vand.u32 %v1995, 4294901760
    %2401 = vmatpush.msra.mxu0 %v2400
    %v2402 = vand.u32 %v1994, 4294901760
    %2403 = vmatpush.msra.mxu0 %v2402
    %v2404 = vand.u32 %v2007, 4294901760
    %2405 = vmatmul.f32.gmra.mxu0 %v2404
    %v2406 = vpop.f32.mrf.mxu0
    %v2407 = vadd.f32 %v2359, %v2406
    %v2408 = vand.u32 %v2010, 4294901760
    %2409 = vmatmul.f32.gmra.mxu0 %v2408
    %v2410 = vpop.f32.mrf.mxu0
    %v2411 = vadd.f32 %v2363, %v2410
    %v2412 = vand.u32 %v2013, 4294901760
    %2413 = vmatmul.f32.gmra.mxu0 %v2412
    %v2414 = vpop.f32.mrf.mxu0
    %v2415 = vadd.f32 %v2367, %v2414
    %v2416 = vand.u32 %v2016, 4294901760
    %2417 = vmatmul.f32.gmra.mxu0 %v2416
    %v2418 = vpop.f32.mrf.mxu0
    %v2419 = vadd.f32 %v2371, %v2418
    %v2420 = vand.u32 %v2019, 4294901760
    %2421 = vmatmul.f32.gmra.mxu0 %v2420
    %v2422 = vpop.f32.mrf.mxu0
    %v2423 = vadd.f32 %v2375, %v2422
    %2424 = vdwg.mxu0
    %2430 = vrot.lane.b32.xlu0 %v2407, 124
    %v2431 = vpop.permute.xlu0 %2430
    %2432 = vrot.lane.b32.xlu0 %v2411, 124
    %v2433 = vpop.permute.xlu0 %2432
    %2434 = vrot.lane.b32.xlu0 %v2415, 124
    %v2435 = vpop.permute.xlu0 %2434
    %2436 = vrot.lane.b32.xlu0 %v2419, 124
    %v2437 = vpop.permute.xlu0 %2436
    %2438 = vrot.lane.b32.xlu0 %v2423, 124
    %v2439 = vpop.permute.xlu0 %2438
    %v2445 = vmax.f32 %v2407, %v2431
    %v2446 = vmax.f32 %v2411, %v2433
    %v2447 = vmax.f32 %v2415, %v2435
    %v2448 = vmax.f32 %v2419, %v2437
    %v2449 = vmax.f32 %v2423, %v2439
    %vm2450 = vcmask 621568
    %v2452 = vsel %vm2450, %v2445, 0
    %v2455 = vsel %vm2450, %v2446, 0
    %v2458 = vsel %vm2450, %v2447, 0
    %v2461 = vsel %vm2450, %v2448, 0
    %v2464 = vsel %vm2450, %v2449, 0
    %vm2466 = vcmask 1043456
    %v2468 = vsel %vm2466, %v1950, 0
    %2470 = vmatpush.msra.mxu0 0.0
    %2471 = vmatpush.msra.mxu0 0.0
    %2472 = vmatpush.msra.mxu0 0.0
    %2473 = vmatpush.msra.mxu0 0.0
    %2474 = vmatpush.msra.mxu0 0.0
    %2475 = vmatpush.msra.mxu0 0.0
    %v2476 = vand.u32 %v2468, 4294901760
    %2477 = vmatpush.msra.mxu0 %v2476
    %v2478 = vand.u32 %v1949, 4294901760
    %2479 = vmatpush.msra.mxu0 %v2478
    %v2480 = vand.u32 %v1948, 4294901760
    %2481 = vmatpush.msra.mxu0 %v2480
    %v2482 = vand.u32 %v1947, 4294901760
    %2483 = vmatpush.msra.mxu0 %v2482
    %v2484 = vand.u32 %v1946, 4294901760
    %2485 = vmatpush.msra.mxu0 %v2484
    %v2486 = vand.u32 %v1945, 4294901760
    %2487 = vmatpush.msra.mxu0 %v2486
    %v2488 = vand.u32 %v1944, 4294901760
    %2489 = vmatpush.msra.mxu0 %v2488
    %v2490 = vand.u32 %v1943, 4294901760
    %2491 = vmatpush.msra.mxu0 %v2490
    %v2492 = vand.u32 %v1942, 4294901760
    %2493 = vmatpush.msra.mxu0 %v2492
    %v2494 = vand.u32 %v1941, 4294901760
    %2495 = vmatpush.msra.mxu0 %v2494
    %v2496 = vand.u32 %v2452, 4294901760
    %v2497 = vsub.f32 %v2452, %v2496
    %v2498 = vand.u32 %v2497, 4294901760
    %v2499 = vsub.f32 %v2497, %v2498
    %v2500 = vand.u32 %v2499, 4294901760
    %2501 = vmatmul.f32.gmra.mxu0 %v2500
    %v2502 = vpop.f32.mrf.mxu0
    %v2503 = vadd.f32 0.0, %v2502
    %v2504 = vand.u32 %v2455, 4294901760
    %v2505 = vsub.f32 %v2455, %v2504
    %v2506 = vand.u32 %v2505, 4294901760
    %v2507 = vsub.f32 %v2505, %v2506
    %v2508 = vand.u32 %v2507, 4294901760
    %2509 = vmatmul.f32.gmra.mxu0 %v2508
    %v2510 = vpop.f32.mrf.mxu0
    %v2511 = vadd.f32 0.0, %v2510
    %v2512 = vand.u32 %v2458, 4294901760
    %v2513 = vsub.f32 %v2458, %v2512
    %v2514 = vand.u32 %v2513, 4294901760
    %v2515 = vsub.f32 %v2513, %v2514
    %v2516 = vand.u32 %v2515, 4294901760
    %2517 = vmatmul.f32.gmra.mxu0 %v2516
    %v2518 = vpop.f32.mrf.mxu0
    %v2519 = vadd.f32 0.0, %v2518
    %v2520 = vand.u32 %v2461, 4294901760
    %v2521 = vsub.f32 %v2461, %v2520
    %v2522 = vand.u32 %v2521, 4294901760
    %v2523 = vsub.f32 %v2521, %v2522
    %v2524 = vand.u32 %v2523, 4294901760
    %2525 = vmatmul.f32.gmra.mxu0 %v2524
    %v2526 = vpop.f32.mrf.mxu0
    %v2527 = vadd.f32 0.0, %v2526
    %v2528 = vand.u32 %v2464, 4294901760
    %v2529 = vsub.f32 %v2464, %v2528
    %v2530 = vand.u32 %v2529, 4294901760
    %v2531 = vsub.f32 %v2529, %v2530
    %v2532 = vand.u32 %v2531, 4294901760
    %2533 = vmatmul.f32.gmra.mxu0 %v2532
    %v2534 = vpop.f32.mrf.mxu0
    %v2535 = vadd.f32 0.0, %v2534
    %2536 = vdwg.mxu0
    %2537 = vmatpush.msra.mxu0 0.0
    %2538 = vmatpush.msra.mxu0 0.0
    %2539 = vmatpush.msra.mxu0 0.0
    %2540 = vmatpush.msra.mxu0 0.0
    %2541 = vmatpush.msra.mxu0 0.0
    %2542 = vmatpush.msra.mxu0 0.0
    %v2543 = vand.u32 %v2468, 4294901760
    %v2544 = vsub.f32 %v2468, %v2543
    %v2545 = vand.u32 %v2544, 4294901760
    %v2546 = vsub.f32 %v2544, %v2545
    %v2547 = vand.u32 %v2546, 4294901760
    %2548 = vmatpush.msra.mxu0 %v2547
    %v2549 = vand.u32 %v1949, 4294901760
    %v2550 = vsub.f32 %v1949, %v2549
    %v2551 = vand.u32 %v2550, 4294901760
    %v2552 = vsub.f32 %v2550, %v2551
    %v2553 = vand.u32 %v2552, 4294901760
    %2554 = vmatpush.msra.mxu0 %v2553
    %v2555 = vand.u32 %v1948, 4294901760
    %v2556 = vsub.f32 %v1948, %v2555
    %v2557 = vand.u32 %v2556, 4294901760
    %v2558 = vsub.f32 %v2556, %v2557
    %v2559 = vand.u32 %v2558, 4294901760
    %2560 = vmatpush.msra.mxu0 %v2559
    %v2561 = vand.u32 %v1947, 4294901760
    %v2562 = vsub.f32 %v1947, %v2561
    %v2563 = vand.u32 %v2562, 4294901760
    %v2564 = vsub.f32 %v2562, %v2563
    %v2565 = vand.u32 %v2564, 4294901760
    %2566 = vmatpush.msra.mxu0 %v2565
    %v2567 = vand.u32 %v1946, 4294901760
    %v2568 = vsub.f32 %v1946, %v2567
    %v2569 = vand.u32 %v2568, 4294901760
    %v2570 = vsub.f32 %v2568, %v2569
    %v2571 = vand.u32 %v2570, 4294901760
    %2572 = vmatpush.msra.mxu0 %v2571
    %v2573 = vand.u32 %v1945, 4294901760
    %v2574 = vsub.f32 %v1945, %v2573
    %v2575 = vand.u32 %v2574, 4294901760
    %v2576 = vsub.f32 %v2574, %v2575
    %v2577 = vand.u32 %v2576, 4294901760
    %2578 = vmatpush.msra.mxu0 %v2577
    %v2579 = vand.u32 %v1944, 4294901760
    %v2580 = vsub.f32 %v1944, %v2579
    %v2581 = vand.u32 %v2580, 4294901760
    %v2582 = vsub.f32 %v2580, %v2581
    %v2583 = vand.u32 %v2582, 4294901760
    %2584 = vmatpush.msra.mxu0 %v2583
    %v2585 = vand.u32 %v1943, 4294901760
    %v2586 = vsub.f32 %v1943, %v2585
    %v2587 = vand.u32 %v2586, 4294901760
    %v2588 = vsub.f32 %v2586, %v2587
    %v2589 = vand.u32 %v2588, 4294901760
    %2590 = vmatpush.msra.mxu0 %v2589
    %v2591 = vand.u32 %v1942, 4294901760
    %v2592 = vsub.f32 %v1942, %v2591
    %v2593 = vand.u32 %v2592, 4294901760
    %v2594 = vsub.f32 %v2592, %v2593
    %v2595 = vand.u32 %v2594, 4294901760
    %2596 = vmatpush.msra.mxu0 %v2595
    %v2597 = vand.u32 %v1941, 4294901760
    %v2598 = vsub.f32 %v1941, %v2597
    %v2599 = vand.u32 %v2598, 4294901760
    %v2600 = vsub.f32 %v2598, %v2599
    %v2601 = vand.u32 %v2600, 4294901760
    %2602 = vmatpush.msra.mxu0 %v2601
    %v2603 = vand.u32 %v2452, 4294901760
    %2604 = vmatmul.f32.gmra.mxu0 %v2603
    %v2605 = vpop.f32.mrf.mxu0
    %v2606 = vadd.f32 %v2503, %v2605
    %v2607 = vand.u32 %v2455, 4294901760
    %2608 = vmatmul.f32.gmra.mxu0 %v2607
    %v2609 = vpop.f32.mrf.mxu0
    %v2610 = vadd.f32 %v2511, %v2609
    %v2611 = vand.u32 %v2458, 4294901760
    %2612 = vmatmul.f32.gmra.mxu0 %v2611
    %v2613 = vpop.f32.mrf.mxu0
    %v2614 = vadd.f32 %v2519, %v2613
    %v2615 = vand.u32 %v2461, 4294901760
    %2616 = vmatmul.f32.gmra.mxu0 %v2615
    %v2617 = vpop.f32.mrf.mxu0
    %v2618 = vadd.f32 %v2527, %v2617
    %v2619 = vand.u32 %v2464, 4294901760
    %2620 = vmatmul.f32.gmra.mxu0 %v2619
    %v2621 = vpop.f32.mrf.mxu0
    %v2622 = vadd.f32 %v2535, %v2621
    %2623 = vdwg.mxu0
    %2624 = vmatpush.msra.mxu0 0.0
    %2625 = vmatpush.msra.mxu0 0.0
    %2626 = vmatpush.msra.mxu0 0.0
    %2627 = vmatpush.msra.mxu0 0.0
    %2628 = vmatpush.msra.mxu0 0.0
    %2629 = vmatpush.msra.mxu0 0.0
    %v2630 = vand.u32 %v2468, 4294901760
    %v2631 = vsub.f32 %v2468, %v2630
    %2632 = vmatpush.msra.mxu0 %v2631
    %v2633 = vand.u32 %v1949, 4294901760
    %v2634 = vsub.f32 %v1949, %v2633
    %2635 = vmatpush.msra.mxu0 %v2634
    %v2636 = vand.u32 %v1948, 4294901760
    %v2637 = vsub.f32 %v1948, %v2636
    %2638 = vmatpush.msra.mxu0 %v2637
    %v2639 = vand.u32 %v1947, 4294901760
    %v2640 = vsub.f32 %v1947, %v2639
    %2641 = vmatpush.msra.mxu0 %v2640
    %v2642 = vand.u32 %v1946, 4294901760
    %v2643 = vsub.f32 %v1946, %v2642
    %2644 = vmatpush.msra.mxu0 %v2643
    %v2645 = vand.u32 %v1945, 4294901760
    %v2646 = vsub.f32 %v1945, %v2645
    %2647 = vmatpush.msra.mxu0 %v2646
    %v2648 = vand.u32 %v1944, 4294901760
    %v2649 = vsub.f32 %v1944, %v2648
    %2650 = vmatpush.msra.mxu0 %v2649
    %v2651 = vand.u32 %v1943, 4294901760
    %v2652 = vsub.f32 %v1943, %v2651
    %2653 = vmatpush.msra.mxu0 %v2652
    %v2654 = vand.u32 %v1942, 4294901760
    %v2655 = vsub.f32 %v1942, %v2654
    %2656 = vmatpush.msra.mxu0 %v2655
    %v2657 = vand.u32 %v1941, 4294901760
    %v2658 = vsub.f32 %v1941, %v2657
    %2659 = vmatpush.msra.mxu0 %v2658
    %v2660 = vand.u32 %v2452, 4294901760
    %v2661 = vsub.f32 %v2452, %v2660
    %2662 = vmatmul.f32.gmra.mxu0 %v2661
    %v2663 = vpop.f32.mrf.mxu0
    %v2664 = vadd.f32 %v2606, %v2663
    %v2665 = vand.u32 %v2455, 4294901760
    %v2666 = vsub.f32 %v2455, %v2665
    %2667 = vmatmul.f32.gmra.mxu0 %v2666
    %v2668 = vpop.f32.mrf.mxu0
    %v2669 = vadd.f32 %v2610, %v2668
    %v2670 = vand.u32 %v2458, 4294901760
    %v2671 = vsub.f32 %v2458, %v2670
    %2672 = vmatmul.f32.gmra.mxu0 %v2671
    %v2673 = vpop.f32.mrf.mxu0
    %v2674 = vadd.f32 %v2614, %v2673
    %v2675 = vand.u32 %v2461, 4294901760
    %v2676 = vsub.f32 %v2461, %v2675
    %2677 = vmatmul.f32.gmra.mxu0 %v2676
    %v2678 = vpop.f32.mrf.mxu0
    %v2679 = vadd.f32 %v2618, %v2678
    %v2680 = vand.u32 %v2464, 4294901760
    %v2681 = vsub.f32 %v2464, %v2680
    %2682 = vmatmul.f32.gmra.mxu0 %v2681
    %v2683 = vpop.f32.mrf.mxu0
    %v2684 = vadd.f32 %v2622, %v2683
    %2685 = vdwg.mxu0
    %2686 = vmatpush.msra.mxu0 0.0
    %2687 = vmatpush.msra.mxu0 0.0
    %2688 = vmatpush.msra.mxu0 0.0
    %2689 = vmatpush.msra.mxu0 0.0
    %2690 = vmatpush.msra.mxu0 0.0
    %2691 = vmatpush.msra.mxu0 0.0
    %v2692 = vand.u32 %v2468, 4294901760
    %2693 = vmatpush.msra.mxu0 %v2692
    %v2694 = vand.u32 %v1949, 4294901760
    %2695 = vmatpush.msra.mxu0 %v2694
    %v2696 = vand.u32 %v1948, 4294901760
    %2697 = vmatpush.msra.mxu0 %v2696
    %v2698 = vand.u32 %v1947, 4294901760
    %2699 = vmatpush.msra.mxu0 %v2698
    %v2700 = vand.u32 %v1946, 4294901760
    %2701 = vmatpush.msra.mxu0 %v2700
    %v2702 = vand.u32 %v1945, 4294901760
    %2703 = vmatpush.msra.mxu0 %v2702
    %v2704 = vand.u32 %v1944, 4294901760
    %2705 = vmatpush.msra.mxu0 %v2704
    %v2706 = vand.u32 %v1943, 4294901760
    %2707 = vmatpush.msra.mxu0 %v2706
    %v2708 = vand.u32 %v1942, 4294901760
    %2709 = vmatpush.msra.mxu0 %v2708
    %v2710 = vand.u32 %v1941, 4294901760
    %2711 = vmatpush.msra.mxu0 %v2710
    %v2712 = vand.u32 %v2452, 4294901760
    %v2713 = vsub.f32 %v2452, %v2712
    %v2714 = vand.u32 %v2713, 4294901760
    %2715 = vmatmul.f32.gmra.mxu0 %v2714
    %v2716 = vpop.f32.mrf.mxu0
    %v2717 = vadd.f32 %v2664, %v2716
    %v2718 = vand.u32 %v2455, 4294901760
    %v2719 = vsub.f32 %v2455, %v2718
    %v2720 = vand.u32 %v2719, 4294901760
    %2721 = vmatmul.f32.gmra.mxu0 %v2720
    %v2722 = vpop.f32.mrf.mxu0
    %v2723 = vadd.f32 %v2669, %v2722
    %v2724 = vand.u32 %v2458, 4294901760
    %v2725 = vsub.f32 %v2458, %v2724
    %v2726 = vand.u32 %v2725, 4294901760
    %2727 = vmatmul.f32.gmra.mxu0 %v2726
    %v2728 = vpop.f32.mrf.mxu0
    %v2729 = vadd.f32 %v2674, %v2728
    %v2730 = vand.u32 %v2461, 4294901760
    %v2731 = vsub.f32 %v2461, %v2730
    %v2732 = vand.u32 %v2731, 4294901760
    %2733 = vmatmul.f32.gmra.mxu0 %v2732
    %v2734 = vpop.f32.mrf.mxu0
    %v2735 = vadd.f32 %v2679, %v2734
    %v2736 = vand.u32 %v2464, 4294901760
    %v2737 = vsub.f32 %v2464, %v2736
    %v2738 = vand.u32 %v2737, 4294901760
    %2739 = vmatmul.f32.gmra.mxu0 %v2738
    %v2740 = vpop.f32.mrf.mxu0
    %v2741 = vadd.f32 %v2684, %v2740
    %2742 = vdwg.mxu0
    %2743 = vmatpush.msra.mxu0 0.0
    %2744 = vmatpush.msra.mxu0 0.0
    %2745 = vmatpush.msra.mxu0 0.0
    %2746 = vmatpush.msra.mxu0 0.0
    %2747 = vmatpush.msra.mxu0 0.0
    %2748 = vmatpush.msra.mxu0 0.0
    %v2749 = vand.u32 %v2468, 4294901760
    %v2750 = vsub.f32 %v2468, %v2749
    %v2751 = vand.u32 %v2750, 4294901760
    %2752 = vmatpush.msra.mxu0 %v2751
    %v2753 = vand.u32 %v1949, 4294901760
    %v2754 = vsub.f32 %v1949, %v2753
    %v2755 = vand.u32 %v2754, 4294901760
    %2756 = vmatpush.msra.mxu0 %v2755
    %v2757 = vand.u32 %v1948, 4294901760
    %v2758 = vsub.f32 %v1948, %v2757
    %v2759 = vand.u32 %v2758, 4294901760
    %2760 = vmatpush.msra.mxu0 %v2759
    %v2761 = vand.u32 %v1947, 4294901760
    %v2762 = vsub.f32 %v1947, %v2761
    %v2763 = vand.u32 %v2762, 4294901760
    %2764 = vmatpush.msra.mxu0 %v2763
    %v2765 = vand.u32 %v1946, 4294901760
    %v2766 = vsub.f32 %v1946, %v2765
    %v2767 = vand.u32 %v2766, 4294901760
    %2768 = vmatpush.msra.mxu0 %v2767
    %v2769 = vand.u32 %v1945, 4294901760
    %v2770 = vsub.f32 %v1945, %v2769
    %v2771 = vand.u32 %v2770, 4294901760
    %2772 = vmatpush.msra.mxu0 %v2771
    %v2773 = vand.u32 %v1944, 4294901760
    %v2774 = vsub.f32 %v1944, %v2773
    %v2775 = vand.u32 %v2774, 4294901760
    %2776 = vmatpush.msra.mxu0 %v2775
    %v2777 = vand.u32 %v1943, 4294901760
    %v2778 = vsub.f32 %v1943, %v2777
    %v2779 = vand.u32 %v2778, 4294901760
    %2780 = vmatpush.msra.mxu0 %v2779
    %v2781 = vand.u32 %v1942, 4294901760
    %v2782 = vsub.f32 %v1942, %v2781
    %v2783 = vand.u32 %v2782, 4294901760
    %2784 = vmatpush.msra.mxu0 %v2783
    %v2785 = vand.u32 %v1941, 4294901760
    %v2786 = vsub.f32 %v1941, %v2785
    %v2787 = vand.u32 %v2786, 4294901760
    %2788 = vmatpush.msra.mxu0 %v2787
    %v2789 = vand.u32 %v2452, 4294901760
    %2790 = vmatmul.f32.gmra.mxu0 %v2789
    %v2791 = vpop.f32.mrf.mxu0
    %v2792 = vadd.f32 %v2717, %v2791
    %v2793 = vand.u32 %v2455, 4294901760
    %2794 = vmatmul.f32.gmra.mxu0 %v2793
    %v2795 = vpop.f32.mrf.mxu0
    %v2796 = vadd.f32 %v2723, %v2795
    %v2797 = vand.u32 %v2458, 4294901760
    %2798 = vmatmul.f32.gmra.mxu0 %v2797
    %v2799 = vpop.f32.mrf.mxu0
    %v2800 = vadd.f32 %v2729, %v2799
    %v2801 = vand.u32 %v2461, 4294901760
    %2802 = vmatmul.f32.gmra.mxu0 %v2801
    %v2803 = vpop.f32.mrf.mxu0
    %v2804 = vadd.f32 %v2735, %v2803
    %v2805 = vand.u32 %v2464, 4294901760
    %2806 = vmatmul.f32.gmra.mxu0 %v2805
    %v2807 = vpop.f32.mrf.mxu0
    %v2808 = vadd.f32 %v2741, %v2807
    %2809 = vdwg.mxu0
    %2810 = vmatpush.msra.mxu0 0.0
    %2811 = vmatpush.msra.mxu0 0.0
    %2812 = vmatpush.msra.mxu0 0.0
    %2813 = vmatpush.msra.mxu0 0.0
    %2814 = vmatpush.msra.mxu0 0.0
    %2815 = vmatpush.msra.mxu0 0.0
    %v2816 = vand.u32 %v2468, 4294901760
    %2817 = vmatpush.msra.mxu0 %v2816
    %v2818 = vand.u32 %v1949, 4294901760
    %2819 = vmatpush.msra.mxu0 %v2818
    %v2820 = vand.u32 %v1948, 4294901760
    %2821 = vmatpush.msra.mxu0 %v2820
    %v2822 = vand.u32 %v1947, 4294901760
    %2823 = vmatpush.msra.mxu0 %v2822
    %v2824 = vand.u32 %v1946, 4294901760
    %2825 = vmatpush.msra.mxu0 %v2824
    %v2826 = vand.u32 %v1945, 4294901760
    %2827 = vmatpush.msra.mxu0 %v2826
    %v2828 = vand.u32 %v1944, 4294901760
    %2829 = vmatpush.msra.mxu0 %v2828
    %v2830 = vand.u32 %v1943, 4294901760
    %2831 = vmatpush.msra.mxu0 %v2830
    %v2832 = vand.u32 %v1942, 4294901760
    %2833 = vmatpush.msra.mxu0 %v2832
    %v2834 = vand.u32 %v1941, 4294901760
    %2835 = vmatpush.msra.mxu0 %v2834
    %v2836 = vand.u32 %v2452, 4294901760
    %2837 = vmatmul.f32.gmra.mxu0 %v2836
    %v2838 = vpop.f32.mrf.mxu0
    %v2839 = vadd.f32 %v2792, %v2838
    %v2840 = vand.u32 %v2455, 4294901760
    %2841 = vmatmul.f32.gmra.mxu0 %v2840
    %v2842 = vpop.f32.mrf.mxu0
    %v2843 = vadd.f32 %v2796, %v2842
    %v2844 = vand.u32 %v2458, 4294901760
    %2845 = vmatmul.f32.gmra.mxu0 %v2844
    %v2846 = vpop.f32.mrf.mxu0
    %v2847 = vadd.f32 %v2800, %v2846
    %v2848 = vand.u32 %v2461, 4294901760
    %2849 = vmatmul.f32.gmra.mxu0 %v2848
    %v2850 = vpop.f32.mrf.mxu0
    %v2851 = vadd.f32 %v2804, %v2850
    %v2852 = vand.u32 %v2464, 4294901760
    %2853 = vmatmul.f32.gmra.mxu0 %v2852
    %v2854 = vpop.f32.mrf.mxu0
    %v2855 = vadd.f32 %v2808, %v2854
    %2856 = vdwg.mxu0
    %v2857 = vmul.f32 %v2839, 0.5
    %v2858 = vmul.f32 %v2843, 0.5
    %v2859 = vmul.f32 %v2847, 0.5
    %v2860 = vmul.f32 %v2851, 0.5
    %v2861 = vmul.f32 %v2855, 0.5
    %v2862 = vmul.f32 %v2839, 0.70710677
    %v2863 = vmul.f32 %v2843, 0.70710677
    %v2864 = vmul.f32 %v2847, 0.70710677
    %v2865 = vmul.f32 %v2851, 0.70710677
    %v2866 = vmul.f32 %v2855, 0.70710677
    %v2867 = vmul.f32 %v2862, %v2862
    %v2868 = vmin.f32 16.0, %v2867
    %v2869 = vmul.f32 %v2868, 2.1237322e-06
    %v2870 = vadd.f32 %v2869, 0.00028619796
    %v2871 = vmul.f32 %v2868, %v2870
    %v2872 = vadd.f32 %v2871, 0.0036580483
    %v2873 = vmul.f32 %v2868, %v2872
    %v2874 = vadd.f32 %v2873, 0.05243302
    %v2875 = vmul.f32 %v2868, %v2874
    %v2876 = vadd.f32 %v2875, 0.18741608
    %v2877 = vmul.f32 %v2868, %v2876
    %v2878 = vadd.f32 %v2877, 1.1283791
    %v2879 = vmul.f32 %v2862, %v2878
    %v2880 = vmul.f32 %v2868, 3.8918573e-05
    %v2881 = vadd.f32 %v2880, 0.001143296
    %v2882 = vmul.f32 %v2868, %v2881
    %v2883 = vadd.f32 %v2882, 0.014752088
    %v2884 = vmul.f32 %v2868, %v2883
    %v2885 = vadd.f32 %v2884, 0.112945676
    %v2886 = vmul.f32 %v2868, %v2885
    %v2887 = vadd.f32 %v2886, 0.4994258
    %v2888 = vmul.f32 %v2868, %v2887
    %v2889 = vadd.f32 %v2888, 1.0
    %v2890 = vrcp.pop %v2889
    %v2891 = vmul.f32 %v2889, %v2890
    %v2892 = vsub.f32 1.0, %v2891
    %v2893 = vmul.f32 %v2890, %v2892
    %v2894 = vadd.f32 %v2890, %v2893
    %vm2895 = vweird.f32 %v2889
    %vm2896 = vweird.f32 %v2890
    %vm2897 = vmor %vm2895, %vm2896
    %v2898 = vsel %vm2897, %v2890, %v2894
    %v2899 = vand.u32 2147483647, %v2889
    %vm2900 = vcmp.eq.f32.partialorder %v2899, 8.507059e+37
    %v2901 = vand.u32 %v2889, 2147483648
    %v2902 = vor.u32 1.1754944e-38, %v2901
    %v2903 = vsel %vm2900, %v2902, %v2898
    %v2904 = vmul.f32 %v2879, %v2903
    %v2905 = vmin.f32 %v2904, 1.0
    %v2906 = vmax.f32 %v2905, -1.0
    %v2907 = vmul.f32 %v2863, %v2863
    %v2908 = vmin.f32 16.0, %v2907
    %v2909 = vmul.f32 %v2908, 2.1237322e-06
    %v2910 = vadd.f32 %v2909, 0.00028619796
    %v2911 = vmul.f32 %v2908, %v2910
    %v2912 = vadd.f32 %v2911, 0.0036580483
    %v2913 = vmul.f32 %v2908, %v2912
    %v2914 = vadd.f32 %v2913, 0.05243302
    %v2915 = vmul.f32 %v2908, %v2914
    %v2916 = vadd.f32 %v2915, 0.18741608
    %v2917 = vmul.f32 %v2908, %v2916
    %v2918 = vadd.f32 %v2917, 1.1283791
    %v2919 = vmul.f32 %v2863, %v2918
    %v2920 = vmul.f32 %v2908, 3.8918573e-05
    %v2921 = vadd.f32 %v2920, 0.001143296
    %v2922 = vmul.f32 %v2908, %v2921
    %v2923 = vadd.f32 %v2922, 0.014752088
    %v2924 = vmul.f32 %v2908, %v2923
    %v2925 = vadd.f32 %v2924, 0.112945676
    %v2926 = vmul.f32 %v2908, %v2925
    %v2927 = vadd.f32 %v2926, 0.4994258
    %v2928 = vmul.f32 %v2908, %v2927
    %v2929 = vadd.f32 %v2928, 1.0
    %v2930 = vrcp.pop %v2929
    %v2931 = vmul.f32 %v2929, %v2930
    %v2932 = vsub.f32 1.0, %v2931
    %v2933 = vmul.f32 %v2930, %v2932
    %v2934 = vadd.f32 %v2930, %v2933
    %vm2935 = vweird.f32 %v2929
    %vm2936 = vweird.f32 %v2930
    %vm2937 = vmor %vm2935, %vm2936
    %v2938 = vsel %vm2937, %v2930, %v2934
    %v2939 = vand.u32 2147483647, %v2929
    %vm2940 = vcmp.eq.f32.partialorder %v2939, 8.507059e+37
    %v2941 = vand.u32 %v2929, 2147483648
    %v2942 = vor.u32 1.1754944e-38, %v2941
    %v2943 = vsel %vm2940, %v2942, %v2938
    %v2944 = vmul.f32 %v2919, %v2943
    %v2945 = vmin.f32 %v2944, 1.0
    %v2946 = vmax.f32 %v2945, -1.0
    %v2947 = vmul.f32 %v2864, %v2864
    %v2948 = vmin.f32 16.0, %v2947
    %v2949 = vmul.f32 %v2948, 2.1237322e-06
    %v2950 = vadd.f32 %v2949, 0.00028619796
    %v2951 = vmul.f32 %v2948, %v2950
    %v2952 = vadd.f32 %v2951, 0.0036580483
    %v2953 = vmul.f32 %v2948, %v2952
    %v2954 = vadd.f32 %v2953, 0.05243302
    %v2955 = vmul.f32 %v2948, %v2954
    %v2956 = vadd.f32 %v2955, 0.18741608
    %v2957 = vmul.f32 %v2948, %v2956
    %v2958 = vadd.f32 %v2957, 1.1283791
    %v2959 = vmul.f32 %v2864, %v2958
    %v2960 = vmul.f32 %v2948, 3.8918573e-05
    %v2961 = vadd.f32 %v2960, 0.001143296
    %v2962 = vmul.f32 %v2948, %v2961
    %v2963 = vadd.f32 %v2962, 0.014752088
    %v2964 = vmul.f32 %v2948, %v2963
    %v2965 = vadd.f32 %v2964, 0.112945676
    %v2966 = vmul.f32 %v2948, %v2965
    %v2967 = vadd.f32 %v2966, 0.4994258
    %v2968 = vmul.f32 %v2948, %v2967
    %v2969 = vadd.f32 %v2968, 1.0
    %v2970 = vrcp.pop %v2969
    %v2971 = vmul.f32 %v2969, %v2970
    %v2972 = vsub.f32 1.0, %v2971
    %v2973 = vmul.f32 %v2970, %v2972
    %v2974 = vadd.f32 %v2970, %v2973
    %vm2975 = vweird.f32 %v2969
    %vm2976 = vweird.f32 %v2970
    %vm2977 = vmor %vm2975, %vm2976
    %v2978 = vsel %vm2977, %v2970, %v2974
    %v2979 = vand.u32 2147483647, %v2969
    %vm2980 = vcmp.eq.f32.partialorder %v2979, 8.507059e+37
    %v2981 = vand.u32 %v2969, 2147483648
    %v2982 = vor.u32 1.1754944e-38, %v2981
    %v2983 = vsel %vm2980, %v2982, %v2978
    %v2984 = vmul.f32 %v2959, %v2983
    %v2985 = vmin.f32 %v2984, 1.0
    %v2986 = vmax.f32 %v2985, -1.0
    %v2987 = vmul.f32 %v2865, %v2865
    %v2988 = vmin.f32 16.0, %v2987
    %v2989 = vmul.f32 %v2988, 2.1237322e-06
    %v2990 = vadd.f32 %v2989, 0.00028619796
    %v2991 = vmul.f32 %v2988, %v2990
    %v2992 = vadd.f32 %v2991, 0.0036580483
    %v2993 = vmul.f32 %v2988, %v2992
    %v2994 = vadd.f32 %v2993, 0.05243302
    %v2995 = vmul.f32 %v2988, %v2994
    %v2996 = vadd.f32 %v2995, 0.18741608
    %v2997 = vmul.f32 %v2988, %v2996
    %v2998 = vadd.f32 %v2997, 1.1283791
    %v2999 = vmul.f32 %v2865, %v2998
    %v3000 = vmul.f32 %v2988, 3.8918573e-05
    %v3001 = vadd.f32 %v3000, 0.001143296
    %v3002 = vmul.f32 %v2988, %v3001
    %v3003 = vadd.f32 %v3002, 0.014752088
    %v3004 = vmul.f32 %v2988, %v3003
    %v3005 = vadd.f32 %v3004, 0.112945676
    %v3006 = vmul.f32 %v2988, %v3005
    %v3007 = vadd.f32 %v3006, 0.4994258
    %v3008 = vmul.f32 %v2988, %v3007
    %v3009 = vadd.f32 %v3008, 1.0
    %v3010 = vrcp.pop %v3009
    %v3011 = vmul.f32 %v3009, %v3010
    %v3012 = vsub.f32 1.0, %v3011
    %v3013 = vmul.f32 %v3010, %v3012
    %v3014 = vadd.f32 %v3010, %v3013
    %vm3015 = vweird.f32 %v3009
    %vm3016 = vweird.f32 %v3010
    %vm3017 = vmor %vm3015, %vm3016
    %v3018 = vsel %vm3017, %v3010, %v3014
    %v3019 = vand.u32 2147483647, %v3009
    %vm3020 = vcmp.eq.f32.partialorder %v3019, 8.507059e+37
    %v3021 = vand.u32 %v3009, 2147483648
    %v3022 = vor.u32 1.1754944e-38, %v3021
    %v3023 = vsel %vm3020, %v3022, %v3018
    %v3024 = vmul.f32 %v2999, %v3023
    %v3025 = vmin.f32 %v3024, 1.0
    %v3026 = vmax.f32 %v3025, -1.0
    %v3027 = vmul.f32 %v2866, %v2866
    %v3028 = vmin.f32 16.0, %v3027
    %v3029 = vmul.f32 %v3028, 2.1237322e-06
    %v3030 = vadd.f32 %v3029, 0.00028619796
    %v3031 = vmul.f32 %v3028, %v3030
    %v3032 = vadd.f32 %v3031, 0.0036580483
    %v3033 = vmul.f32 %v3028, %v3032
    %v3034 = vadd.f32 %v3033, 0.05243302
    %v3035 = vmul.f32 %v3028, %v3034
    %v3036 = vadd.f32 %v3035, 0.18741608
    %v3037 = vmul.f32 %v3028, %v3036
    %v3038 = vadd.f32 %v3037, 1.1283791
    %v3039 = vmul.f32 %v2866, %v3038
    %v3040 = vmul.f32 %v3028, 3.8918573e-05
    %v3041 = vadd.f32 %v3040, 0.001143296
    %v3042 = vmul.f32 %v3028, %v3041
    %v3043 = vadd.f32 %v3042, 0.014752088
    %v3044 = vmul.f32 %v3028, %v3043
    %v3045 = vadd.f32 %v3044, 0.112945676
    %v3046 = vmul.f32 %v3028, %v3045
    %v3047 = vadd.f32 %v3046, 0.4994258
    %v3048 = vmul.f32 %v3028, %v3047
    %v3049 = vadd.f32 %v3048, 1.0
    %v3050 = vrcp.pop %v3049
    %v3051 = vmul.f32 %v3049, %v3050
    %v3052 = vsub.f32 1.0, %v3051
    %v3053 = vmul.f32 %v3050, %v3052
    %v3054 = vadd.f32 %v3050, %v3053
    %vm3055 = vweird.f32 %v3049
    %vm3056 = vweird.f32 %v3050
    %vm3057 = vmor %vm3055, %vm3056
    %v3058 = vsel %vm3057, %v3050, %v3054
    %v3059 = vand.u32 2147483647, %v3049
    %vm3060 = vcmp.eq.f32.partialorder %v3059, 8.507059e+37
    %v3061 = vand.u32 %v3049, 2147483648
    %v3062 = vor.u32 1.1754944e-38, %v3061
    %v3063 = vsel %vm3060, %v3062, %v3058
    %v3064 = vmul.f32 %v3039, %v3063
    %v3065 = vmin.f32 %v3064, 1.0
    %v3066 = vmax.f32 %v3065, -1.0
    %v3067 = vadd.f32 %v2906, 1.0
    %v3068 = vadd.f32 %v2946, 1.0
    %v3069 = vadd.f32 %v2986, 1.0
    %v3070 = vadd.f32 %v3026, 1.0
    %v3071 = vadd.f32 %v3066, 1.0
    %v3072 = vmul.f32 %v2857, %v3067
    %v3073 = vmul.f32 %v2858, %v3068
    %v3074 = vmul.f32 %v2859, %v3069
    %v3075 = vmul.f32 %v2860, %v3070
    %v3076 = vmul.f32 %v2861, %v3071
    %v3077 = vld [vmem:[%s6] sm:$0x1]
    %v3078 = vld [vmem:[#allocation2] sm:$0xff]
    %v3079 = vld [vmem:[#allocation2 + $0x8] sm:$0xff]
    %v3080 = vld [vmem:[#allocation2 + $0x10] sm:$0xff]
    %v3081 = vld [vmem:[#allocation2 + $0x18] sm:$0xff]
    %v3082 = vld [vmem:[#allocation2 + $0x20] sm:$0xff]
    %s3083 = scalar_lea.vmem [#allocation2], 40
    %v3084 = vld [vmem:[%s3083] sm:$0xff]
    %v3085 = vld [vmem:[%s3083 + $0x8] sm:$0xff]
    %v3086 = vld [vmem:[%s3083 + $0x10] sm:$0xff]
    %v3087 = vld [vmem:[%s3083 + $0x18] sm:$0xff]
    %v3088 = vld [vmem:[%s3083 + $0x20] sm:$0xff]
    %v3094 = vrot.slane %v3072, 1
    %v3095 = vrot.slane %v3073, 1
    %v3096 = vsel %vm100, %v3094, %v3095
    %v3097 = vrot.slane %v3074, 1
    %v3098 = vsel %vm100, %v3095, %v3097
    %v3099 = vrot.slane %v3075, 1
    %v3100 = vsel %vm100, %v3097, %v3099
    %v3101 = vrot.slane %v3076, 1
    %v3102 = vsel %vm100, %v3099, %v3101
    %vm3103 = vcmask 326656
    %v3104 = vsel %vm3103, %v3096, 0
    %v3106 = vsel %vm3103, %v3098, 0
    %v3108 = vsel %vm3103, %v3100, 0
    %v3110 = vsel %vm3103, %v3102, 0
    %v3112 = vsel %vm3103, %v3101, 0
    %3114 = vmatpush.msra.mxu0 0.0
    %3115 = vmatpush.msra.mxu0 0.0
    %3116 = vmatpush.msra.mxu0 0.0
    %3117 = vmatpush.msra.mxu0 0.0
    %3118 = vmatpush.msra.mxu0 0.0
    %3119 = vmatpush.msra.mxu0 0.0
    %3120 = vmatpush.msra.mxu0 0.0
    %3121 = vmatpush.msra.mxu0 0.0
    %3122 = vmatpush.msra.mxu0 0.0
    %3123 = vmatpush.msra.mxu0 0.0
    %3124 = vmatpush.msra.mxu0 0.0
    %v3125 = vand.u32 %v3088, 4294901760
    %3126 = vmatpush.msra.mxu0 %v3125
    %v3127 = vand.u32 %v3087, 4294901760
    %3128 = vmatpush.msra.mxu0 %v3127
    %v3129 = vand.u32 %v3086, 4294901760
    %3130 = vmatpush.msra.mxu0 %v3129
    %v3131 = vand.u32 %v3085, 4294901760
    %3132 = vmatpush.msra.mxu0 %v3131
    %v3133 = vand.u32 %v3084, 4294901760
    %3134 = vmatpush.msra.mxu0 %v3133
    %v3135 = vand.u32 %v3104, 4294901760
    %v3136 = vsub.f32 %v3104, %v3135
    %v3137 = vand.u32 %v3136, 4294901760
    %v3138 = vsub.f32 %v3136, %v3137
    %v3139 = vand.u32 %v3138, 4294901760
    %3140 = vmatmul.f32.gmra.mxu0 %v3139
    %v3141 = vpop.f32.mrf.mxu0
    %v3142 = vadd.f32 0.0, %v3141
    %v3143 = vand.u32 %v3106, 4294901760
    %v3144 = vsub.f32 %v3106, %v3143
    %v3145 = vand.u32 %v3144, 4294901760
    %v3146 = vsub.f32 %v3144, %v3145
    %v3147 = vand.u32 %v3146, 4294901760
    %3148 = vmatmul.f32.gmra.mxu0 %v3147
    %v3149 = vpop.f32.mrf.mxu0
    %v3150 = vadd.f32 0.0, %v3149
    %v3151 = vand.u32 %v3108, 4294901760
    %v3152 = vsub.f32 %v3108, %v3151
    %v3153 = vand.u32 %v3152, 4294901760
    %v3154 = vsub.f32 %v3152, %v3153
    %v3155 = vand.u32 %v3154, 4294901760
    %3156 = vmatmul.f32.gmra.mxu0 %v3155
    %v3157 = vpop.f32.mrf.mxu0
    %v3158 = vadd.f32 0.0, %v3157
    %v3159 = vand.u32 %v3110, 4294901760
    %v3160 = vsub.f32 %v3110, %v3159
    %v3161 = vand.u32 %v3160, 4294901760
    %v3162 = vsub.f32 %v3160, %v3161
    %v3163 = vand.u32 %v3162, 4294901760
    %3164 = vmatmul.f32.gmra.mxu0 %v3163
    %v3165 = vpop.f32.mrf.mxu0
    %v3166 = vadd.f32 0.0, %v3165
    %v3167 = vand.u32 %v3112, 4294901760
    %v3168 = vsub.f32 %v3112, %v3167
    %v3169 = vand.u32 %v3168, 4294901760
    %v3170 = vsub.f32 %v3168, %v3169
    %v3171 = vand.u32 %v3170, 4294901760
    %3172 = vmatmul.f32.gmra.mxu0 %v3171
    %v3173 = vpop.f32.mrf.mxu0
    %v3174 = vadd.f32 0.0, %v3173
    %3175 = vdwg.mxu0
    %3176 = vmatpush.msra.mxu0 0.0
    %3177 = vmatpush.msra.mxu0 0.0
    %3178 = vmatpush.msra.mxu0 0.0
    %3179 = vmatpush.msra.mxu0 0.0
    %3180 = vmatpush.msra.mxu0 0.0
    %3181 = vmatpush.msra.mxu0 0.0
    %3182 = vmatpush.msra.mxu0 0.0
    %3183 = vmatpush.msra.mxu0 0.0
    %3184 = vmatpush.msra.mxu0 0.0
    %3185 = vmatpush.msra.mxu0 0.0
    %3186 = vmatpush.msra.mxu0 0.0
    %v3187 = vand.u32 %v3088, 4294901760
    %v3188 = vsub.f32 %v3088, %v3187
    %v3189 = vand.u32 %v3188, 4294901760
    %v3190 = vsub.f32 %v3188, %v3189
    %v3191 = vand.u32 %v3190, 4294901760
    %3192 = vmatpush.msra.mxu0 %v3191
    %v3193 = vand.u32 %v3087, 4294901760
    %v3194 = vsub.f32 %v3087, %v3193
    %v3195 = vand.u32 %v3194, 4294901760
    %v3196 = vsub.f32 %v3194, %v3195
    %v3197 = vand.u32 %v3196, 4294901760
    %3198 = vmatpush.msra.mxu0 %v3197
    %v3199 = vand.u32 %v3086, 4294901760
    %v3200 = vsub.f32 %v3086, %v3199
    %v3201 = vand.u32 %v3200, 4294901760
    %v3202 = vsub.f32 %v3200, %v3201
    %v3203 = vand.u32 %v3202, 4294901760
    %3204 = vmatpush.msra.mxu0 %v3203
    %v3205 = vand.u32 %v3085, 4294901760
    %v3206 = vsub.f32 %v3085, %v3205
    %v3207 = vand.u32 %v3206, 4294901760
    %v3208 = vsub.f32 %v3206, %v3207
    %v3209 = vand.u32 %v3208, 4294901760
    %3210 = vmatpush.msra.mxu0 %v3209
    %v3211 = vand.u32 %v3084, 4294901760
    %v3212 = vsub.f32 %v3084, %v3211
    %v3213 = vand.u32 %v3212, 4294901760
    %v3214 = vsub.f32 %v3212, %v3213
    %v3215 = vand.u32 %v3214, 4294901760
    %3216 = vmatpush.msra.mxu0 %v3215
    %v3217 = vand.u32 %v3104, 4294901760
    %3218 = vmatmul.f32.gmra.mxu0 %v3217
    %v3219 = vpop.f32.mrf.mxu0
    %v3220 = vadd.f32 %v3142, %v3219
    %v3221 = vand.u32 %v3106, 4294901760
    %3222 = vmatmul.f32.gmra.mxu0 %v3221
    %v3223 = vpop.f32.mrf.mxu0
    %v3224 = vadd.f32 %v3150, %v3223
    %v3225 = vand.u32 %v3108, 4294901760
    %3226 = vmatmul.f32.gmra.mxu0 %v3225
    %v3227 = vpop.f32.mrf.mxu0
    %v3228 = vadd.f32 %v3158, %v3227
    %v3229 = vand.u32 %v3110, 4294901760
    %3230 = vmatmul.f32.gmra.mxu0 %v3229
    %v3231 = vpop.f32.mrf.mxu0
    %v3232 = vadd.f32 %v3166, %v3231
    %v3233 = vand.u32 %v3112, 4294901760
    %3234 = vmatmul.f32.gmra.mxu0 %v3233
    %v3235 = vpop.f32.mrf.mxu0
    %v3236 = vadd.f32 %v3174, %v3235
    %3237 = vdwg.mxu0
    %3238 = vmatpush.msra.mxu0 0.0
    %3239 = vmatpush.msra.mxu0 0.0
    %3240 = vmatpush.msra.mxu0 0.0
    %3241 = vmatpush.msra.mxu0 0.0
    %3242 = vmatpush.msra.mxu0 0.0
    %3243 = vmatpush.msra.mxu0 0.0
    %3244 = vmatpush.msra.mxu0 0.0
    %3245 = vmatpush.msra.mxu0 0.0
    %3246 = vmatpush.msra.mxu0 0.0
    %3247 = vmatpush.msra.mxu0 0.0
    %3248 = vmatpush.msra.mxu0 0.0
    %v3249 = vand.u32 %v3088, 4294901760
    %v3250 = vsub.f32 %v3088, %v3249
    %3251 = vmatpush.msra.mxu0 %v3250
    %v3252 = vand.u32 %v3087, 4294901760
    %v3253 = vsub.f32 %v3087, %v3252
    %3254 = vmatpush.msra.mxu0 %v3253
    %v3255 = vand.u32 %v3086, 4294901760
    %v3256 = vsub.f32 %v3086, %v3255
    %3257 = vmatpush.msra.mxu0 %v3256
    %v3258 = vand.u32 %v3085, 4294901760
    %v3259 = vsub.f32 %v3085, %v3258
    %3260 = vmatpush.msra.mxu0 %v3259
    %v3261 = vand.u32 %v3084, 4294901760
    %v3262 = vsub.f32 %v3084, %v3261
    %3263 = vmatpush.msra.mxu0 %v3262
    %v3264 = vand.u32 %v3104, 4294901760
    %v3265 = vsub.f32 %v3104, %v3264
    %3266 = vmatmul.f32.gmra.mxu0 %v3265
    %v3267 = vpop.f32.mrf.mxu0
    %v3268 = vadd.f32 %v3220, %v3267
    %v3269 = vand.u32 %v3106, 4294901760
    %v3270 = vsub.f32 %v3106, %v3269
    %3271 = vmatmul.f32.gmra.mxu0 %v3270
    %v3272 = vpop.f32.mrf.mxu0
    %v3273 = vadd.f32 %v3224, %v3272
    %v3274 = vand.u32 %v3108, 4294901760
    %v3275 = vsub.f32 %v3108, %v3274
    %3276 = vmatmul.f32.gmra.mxu0 %v3275
    %v3277 = vpop.f32.mrf.mxu0
    %v3278 = vadd.f32 %v3228, %v3277
    %v3279 = vand.u32 %v3110, 4294901760
    %v3280 = vsub.f32 %v3110, %v3279
    %3281 = vmatmul.f32.gmra.mxu0 %v3280
    %v3282 = vpop.f32.mrf.mxu0
    %v3283 = vadd.f32 %v3232, %v3282
    %v3284 = vand.u32 %v3112, 4294901760
    %v3285 = vsub.f32 %v3112, %v3284
    %3286 = vmatmul.f32.gmra.mxu0 %v3285
    %v3287 = vpop.f32.mrf.mxu0
    %v3288 = vadd.f32 %v3236, %v3287
    %3289 = vdwg.mxu0
    %3290 = vmatpush.msra.mxu0 0.0
    %3291 = vmatpush.msra.mxu0 0.0
    %3292 = vmatpush.msra.mxu0 0.0
    %3293 = vmatpush.msra.mxu0 0.0
    %3294 = vmatpush.msra.mxu0 0.0
    %3295 = vmatpush.msra.mxu0 0.0
    %3296 = vmatpush.msra.mxu0 0.0
    %3297 = vmatpush.msra.mxu0 0.0
    %3298 = vmatpush.msra.mxu0 0.0
    %3299 = vmatpush.msra.mxu0 0.0
    %3300 = vmatpush.msra.mxu0 0.0
    %v3301 = vand.u32 %v3088, 4294901760
    %3302 = vmatpush.msra.mxu0 %v3301
    %v3303 = vand.u32 %v3087, 4294901760
    %3304 = vmatpush.msra.mxu0 %v3303
    %v3305 = vand.u32 %v3086, 4294901760
    %3306 = vmatpush.msra.mxu0 %v3305
    %v3307 = vand.u32 %v3085, 4294901760
    %3308 = vmatpush.msra.mxu0 %v3307
    %v3309 = vand.u32 %v3084, 4294901760
    %3310 = vmatpush.msra.mxu0 %v3309
    %v3311 = vand.u32 %v3104, 4294901760
    %v3312 = vsub.f32 %v3104, %v3311
    %v3313 = vand.u32 %v3312, 4294901760
    %3314 = vmatmul.f32.gmra.mxu0 %v3313
    %v3315 = vpop.f32.mrf.mxu0
    %v3316 = vadd.f32 %v3268, %v3315
    %v3317 = vand.u32 %v3106, 4294901760
    %v3318 = vsub.f32 %v3106, %v3317
    %v3319 = vand.u32 %v3318, 4294901760
    %3320 = vmatmul.f32.gmra.mxu0 %v3319
    %v3321 = vpop.f32.mrf.mxu0
    %v3322 = vadd.f32 %v3273, %v3321
    %v3323 = vand.u32 %v3108, 4294901760
    %v3324 = vsub.f32 %v3108, %v3323
    %v3325 = vand.u32 %v3324, 4294901760
    %3326 = vmatmul.f32.gmra.mxu0 %v3325
    %v3327 = vpop.f32.mrf.mxu0
    %v3328 = vadd.f32 %v3278, %v3327
    %v3329 = vand.u32 %v3110, 4294901760
    %v3330 = vsub.f32 %v3110, %v3329
    %v3331 = vand.u32 %v3330, 4294901760
    %3332 = vmatmul.f32.gmra.mxu0 %v3331
    %v3333 = vpop.f32.mrf.mxu0
    %v3334 = vadd.f32 %v3283, %v3333
    %v3335 = vand.u32 %v3112, 4294901760
    %v3336 = vsub.f32 %v3112, %v3335
    %v3337 = vand.u32 %v3336, 4294901760
    %3338 = vmatmul.f32.gmra.mxu0 %v3337
    %v3339 = vpop.f32.mrf.mxu0
    %v3340 = vadd.f32 %v3288, %v3339
    %3341 = vdwg.mxu0
    %3342 = vmatpush.msra.mxu0 0.0
    %3343 = vmatpush.msra.mxu0 0.0
    %3344 = vmatpush.msra.mxu0 0.0
    %3345 = vmatpush.msra.mxu0 0.0
    %3346 = vmatpush.msra.mxu0 0.0
    %3347 = vmatpush.msra.mxu0 0.0
    %3348 = vmatpush.msra.mxu0 0.0
    %3349 = vmatpush.msra.mxu0 0.0
    %3350 = vmatpush.msra.mxu0 0.0
    %3351 = vmatpush.msra.mxu0 0.0
    %3352 = vmatpush.msra.mxu0 0.0
    %v3353 = vand.u32 %v3088, 4294901760
    %v3354 = vsub.f32 %v3088, %v3353
    %v3355 = vand.u32 %v3354, 4294901760
    %3356 = vmatpush.msra.mxu0 %v3355
    %v3357 = vand.u32 %v3087, 4294901760
    %v3358 = vsub.f32 %v3087, %v3357
    %v3359 = vand.u32 %v3358, 4294901760
    %3360 = vmatpush.msra.mxu0 %v3359
    %v3361 = vand.u32 %v3086, 4294901760
    %v3362 = vsub.f32 %v3086, %v3361
    %v3363 = vand.u32 %v3362, 4294901760
    %3364 = vmatpush.msra.mxu0 %v3363
    %v3365 = vand.u32 %v3085, 4294901760
    %v3366 = vsub.f32 %v3085, %v3365
    %v3367 = vand.u32 %v3366, 4294901760
    %3368 = vmatpush.msra.mxu0 %v3367
    %v3369 = vand.u32 %v3084, 4294901760
    %v3370 = vsub.f32 %v3084, %v3369
    %v3371 = vand.u32 %v3370, 4294901760
    %3372 = vmatpush.msra.mxu0 %v3371
    %v3373 = vand.u32 %v3104, 4294901760
    %3374 = vmatmul.f32.gmra.mxu0 %v3373
    %v3375 = vpop.f32.mrf.mxu0
    %v3376 = vadd.f32 %v3316, %v3375
    %v3377 = vand.u32 %v3106, 4294901760
    %3378 = vmatmul.f32.gmra.mxu0 %v3377
    %v3379 = vpop.f32.mrf.mxu0
    %v3380 = vadd.f32 %v3322, %v3379
    %v3381 = vand.u32 %v3108, 4294901760
    %3382 = vmatmul.f32.gmra.mxu0 %v3381
    %v3383 = vpop.f32.mrf.mxu0
    %v3384 = vadd.f32 %v3328, %v3383
    %v3385 = vand.u32 %v3110, 4294901760
    %3386 = vmatmul.f32.gmra.mxu0 %v3385
    %v3387 = vpop.f32.mrf.mxu0
    %v3388 = vadd.f32 %v3334, %v3387
    %v3389 = vand.u32 %v3112, 4294901760
    %3390 = vmatmul.f32.gmra.mxu0 %v3389
    %v3391 = vpop.f32.mrf.mxu0
    %v3392 = vadd.f32 %v3340, %v3391
    %3393 = vdwg.mxu0
    %3394 = vmatpush.msra.mxu0 0.0
    %3395 = vmatpush.msra.mxu0 0.0
    %3396 = vmatpush.msra.mxu0 0.0
    %3397 = vmatpush.msra.mxu0 0.0
    %3398 = vmatpush.msra.mxu0 0.0
    %3399 = vmatpush.msra.mxu0 0.0
    %3400 = vmatpush.msra.mxu0 0.0
    %3401 = vmatpush.msra.mxu0 0.0
    %3402 = vmatpush.msra.mxu0 0.0
    %3403 = vmatpush.msra.mxu0 0.0
    %3404 = vmatpush.msra.mxu0 0.0
    %v3405 = vand.u32 %v3088, 4294901760
    %3406 = vmatpush.msra.mxu0 %v3405
    %v3407 = vand.u32 %v3087, 4294901760
    %3408 = vmatpush.msra.mxu0 %v3407
    %v3409 = vand.u32 %v3086, 4294901760
    %3410 = vmatpush.msra.mxu0 %v3409
    %v3411 = vand.u32 %v3085, 4294901760
    %3412 = vmatpush.msra.mxu0 %v3411
    %v3413 = vand.u32 %v3084, 4294901760
    %3414 = vmatpush.msra.mxu0 %v3413
    %v3415 = vand.u32 %v3104, 4294901760
    %3416 = vmatmul.f32.gmra.mxu0 %v3415
    %v3417 = vpop.f32.mrf.mxu0
    %v3418 = vadd.f32 %v3376, %v3417
    %v3419 = vand.u32 %v3106, 4294901760
    %3420 = vmatmul.f32.gmra.mxu0 %v3419
    %v3421 = vpop.f32.mrf.mxu0
    %v3422 = vadd.f32 %v3380, %v3421
    %v3423 = vand.u32 %v3108, 4294901760
    %3424 = vmatmul.f32.gmra.mxu0 %v3423
    %v3425 = vpop.f32.mrf.mxu0
    %v3426 = vadd.f32 %v3384, %v3425
    %v3427 = vand.u32 %v3110, 4294901760
    %3428 = vmatmul.f32.gmra.mxu0 %v3427
    %v3429 = vpop.f32.mrf.mxu0
    %v3430 = vadd.f32 %v3388, %v3429
    %v3431 = vand.u32 %v3112, 4294901760
    %3432 = vmatmul.f32.gmra.mxu0 %v3431
    %v3433 = vpop.f32.mrf.mxu0
    %v3434 = vadd.f32 %v3392, %v3433
    %3435 = vdwg.mxu0
    %v3436 = vsel %vm3103, %v3072, 0
    %v3438 = vsel %vm3103, %v3073, 0
    %v3440 = vsel %vm3103, %v3074, 0
    %v3442 = vsel %vm3103, %v3075, 0
    %v3444 = vsel %vm3103, %v3076, 0
    %3446 = vmatpush.msra.mxu0 0.0
    %3447 = vmatpush.msra.mxu0 0.0
    %3448 = vmatpush.msra.mxu0 0.0
    %3449 = vmatpush.msra.mxu0 0.0
    %3450 = vmatpush.msra.mxu0 0.0
    %3451 = vmatpush.msra.mxu0 0.0
    %3452 = vmatpush.msra.mxu0 0.0
    %3453 = vmatpush.msra.mxu0 0.0
    %3454 = vmatpush.msra.mxu0 0.0
    %3455 = vmatpush.msra.mxu0 0.0
    %3456 = vmatpush.msra.mxu0 0.0
    %v3457 = vand.u32 %v3082, 4294901760
    %3458 = vmatpush.msra.mxu0 %v3457
    %v3459 = vand.u32 %v3081, 4294901760
    %3460 = vmatpush.msra.mxu0 %v3459
    %v3461 = vand.u32 %v3080, 4294901760
    %3462 = vmatpush.msra.mxu0 %v3461
    %v3463 = vand.u32 %v3079, 4294901760
    %3464 = vmatpush.msra.mxu0 %v3463
    %v3465 = vand.u32 %v3078, 4294901760
    %3466 = vmatpush.msra.mxu0 %v3465
    %v3467 = vand.u32 %v3436, 4294901760
    %v3468 = vsub.f32 %v3436, %v3467
    %v3469 = vand.u32 %v3468, 4294901760
    %v3470 = vsub.f32 %v3468, %v3469
    %v3471 = vand.u32 %v3470, 4294901760
    %3472 = vmatmul.f32.gmra.mxu0 %v3471
    %v3473 = vpop.f32.mrf.mxu0
    %v3474 = vadd.f32 %v3418, %v3473
    %v3475 = vand.u32 %v3438, 4294901760
    %v3476 = vsub.f32 %v3438, %v3475
    %v3477 = vand.u32 %v3476, 4294901760
    %v3478 = vsub.f32 %v3476, %v3477
    %v3479 = vand.u32 %v3478, 4294901760
    %3480 = vmatmul.f32.gmra.mxu0 %v3479
    %v3481 = vpop.f32.mrf.mxu0
    %v3482 = vadd.f32 %v3422, %v3481
    %v3483 = vand.u32 %v3440, 4294901760
    %v3484 = vsub.f32 %v3440, %v3483
    %v3485 = vand.u32 %v3484, 4294901760
    %v3486 = vsub.f32 %v3484, %v3485
    %v3487 = vand.u32 %v3486, 4294901760
    %3488 = vmatmul.f32.gmra.mxu0 %v3487
    %v3489 = vpop.f32.mrf.mxu0
    %v3490 = vadd.f32 %v3426, %v3489
    %v3491 = vand.u32 %v3442, 4294901760
    %v3492 = vsub.f32 %v3442, %v3491
    %v3493 = vand.u32 %v3492, 4294901760
    %v3494 = vsub.f32 %v3492, %v3493
    %v3495 = vand.u32 %v3494, 4294901760
    %3496 = vmatmul.f32.gmra.mxu0 %v3495
    %v3497 = vpop.f32.mrf.mxu0
    %v3498 = vadd.f32 %v3430, %v3497
    %v3499 = vand.u32 %v3444, 4294901760
    %v3500 = vsub.f32 %v3444, %v3499
    %v3501 = vand.u32 %v3500, 4294901760
    %v3502 = vsub.f32 %v3500, %v3501
    %v3503 = vand.u32 %v3502, 4294901760
    %3504 = vmatmul.f32.gmra.mxu0 %v3503
    %v3505 = vpop.f32.mrf.mxu0
    %v3506 = vadd.f32 %v3434, %v3505
    %3507 = vdwg.mxu0
    %3508 = vmatpush.msra.mxu0 0.0
    %3509 = vmatpush.msra.mxu0 0.0
    %3510 = vmatpush.msra.mxu0 0.0
    %3511 = vmatpush.msra.mxu0 0.0
    %3512 = vmatpush.msra.mxu0 0.0
    %3513 = vmatpush.msra.mxu0 0.0
    %3514 = vmatpush.msra.mxu0 0.0
    %3515 = vmatpush.msra.mxu0 0.0
    %3516 = vmatpush.msra.mxu0 0.0
    %3517 = vmatpush.msra.mxu0 0.0
    %3518 = vmatpush.msra.mxu0 0.0
    %v3519 = vand.u32 %v3082, 4294901760
    %v3520 = vsub.f32 %v3082, %v3519
    %v3521 = vand.u32 %v3520, 4294901760
    %v3522 = vsub.f32 %v3520, %v3521
    %v3523 = vand.u32 %v3522, 4294901760
    %3524 = vmatpush.msra.mxu0 %v3523
    %v3525 = vand.u32 %v3081, 4294901760
    %v3526 = vsub.f32 %v3081, %v3525
    %v3527 = vand.u32 %v3526, 4294901760
    %v3528 = vsub.f32 %v3526, %v3527
    %v3529 = vand.u32 %v3528, 4294901760
    %3530 = vmatpush.msra.mxu0 %v3529
    %v3531 = vand.u32 %v3080, 4294901760
    %v3532 = vsub.f32 %v3080, %v3531
    %v3533 = vand.u32 %v3532, 4294901760
    %v3534 = vsub.f32 %v3532, %v3533
    %v3535 = vand.u32 %v3534, 4294901760
    %3536 = vmatpush.msra.mxu0 %v3535
    %v3537 = vand.u32 %v3079, 4294901760
    %v3538 = vsub.f32 %v3079, %v3537
    %v3539 = vand.u32 %v3538, 4294901760
    %v3540 = vsub.f32 %v3538, %v3539
    %v3541 = vand.u32 %v3540, 4294901760
    %3542 = vmatpush.msra.mxu0 %v3541
    %v3543 = vand.u32 %v3078, 4294901760
    %v3544 = vsub.f32 %v3078, %v3543
    %v3545 = vand.u32 %v3544, 4294901760
    %v3546 = vsub.f32 %v3544, %v3545
    %v3547 = vand.u32 %v3546, 4294901760
    %3548 = vmatpush.msra.mxu0 %v3547
    %v3549 = vand.u32 %v3436, 4294901760
    %3550 = vmatmul.f32.gmra.mxu0 %v3549
    %v3551 = vpop.f32.mrf.mxu0
    %v3552 = vadd.f32 %v3474, %v3551
    %v3553 = vand.u32 %v3438, 4294901760
    %3554 = vmatmul.f32.gmra.mxu0 %v3553
    %v3555 = vpop.f32.mrf.mxu0
    %v3556 = vadd.f32 %v3482, %v3555
    %v3557 = vand.u32 %v3440, 4294901760
    %3558 = vmatmul.f32.gmra.mxu0 %v3557
    %v3559 = vpop.f32.mrf.mxu0
    %v3560 = vadd.f32 %v3490, %v3559
    %v3561 = vand.u32 %v3442, 4294901760
    %3562 = vmatmul.f32.gmra.mxu0 %v3561
    %v3563 = vpop.f32.mrf.mxu0
    %v3564 = vadd.f32 %v3498, %v3563
    %v3565 = vand.u32 %v3444, 4294901760
    %3566 = vmatmul.f32.gmra.mxu0 %v3565
    %v3567 = vpop.f32.mrf.mxu0
    %v3568 = vadd.f32 %v3506, %v3567
    %3569 = vdwg.mxu0
    %3570 = vmatpush.msra.mxu0 0.0
    %3571 = vmatpush.msra.mxu0 0.0
    %3572 = vmatpush.msra.mxu0 0.0
    %3573 = vmatpush.msra.mxu0 0.0
    %3574 = vmatpush.msra.mxu0 0.0
    %3575 = vmatpush.msra.mxu0 0.0
    %3576 = vmatpush.msra.mxu0 0.0
    %3577 = vmatpush.msra.mxu0 0.0
    %3578 = vmatpush.msra.mxu0 0.0
    %3579 = vmatpush.msra.mxu0 0.0
    %3580 = vmatpush.msra.mxu0 0.0
    %v3581 = vand.u32 %v3082, 4294901760
    %v3582 = vsub.f32 %v3082, %v3581
    %3583 = vmatpush.msra.mxu0 %v3582
    %v3584 = vand.u32 %v3081, 4294901760
    %v3585 = vsub.f32 %v3081, %v3584
    %3586 = vmatpush.msra.mxu0 %v3585
    %v3587 = vand.u32 %v3080, 4294901760
    %v3588 = vsub.f32 %v3080, %v3587
    %3589 = vmatpush.msra.mxu0 %v3588
    %v3590 = vand.u32 %v3079, 4294901760
    %v3591 = vsub.f32 %v3079, %v3590
    %3592 = vmatpush.msra.mxu0 %v3591
    %v3593 = vand.u32 %v3078, 4294901760
    %v3594 = vsub.f32 %v3078, %v3593
    %3595 = vmatpush.msra.mxu0 %v3594
    %v3596 = vand.u32 %v3436, 4294901760
    %v3597 = vsub.f32 %v3436, %v3596
    %3598 = vmatmul.f32.gmra.mxu0 %v3597
    %v3599 = vpop.f32.mrf.mxu0
    %v3600 = vadd.f32 %v3552, %v3599
    %v3601 = vand.u32 %v3438, 4294901760
    %v3602 = vsub.f32 %v3438, %v3601
    %3603 = vmatmul.f32.gmra.mxu0 %v3602
    %v3604 = vpop.f32.mrf.mxu0
    %v3605 = vadd.f32 %v3556, %v3604
    %v3606 = vand.u32 %v3440, 4294901760
    %v3607 = vsub.f32 %v3440, %v3606
    %3608 = vmatmul.f32.gmra.mxu0 %v3607
    %v3609 = vpop.f32.mrf.mxu0
    %v3610 = vadd.f32 %v3560, %v3609
    %v3611 = vand.u32 %v3442, 4294901760
    %v3612 = vsub.f32 %v3442, %v3611
    %3613 = vmatmul.f32.gmra.mxu0 %v3612
    %v3614 = vpop.f32.mrf.mxu0
    %v3615 = vadd.f32 %v3564, %v3614
    %v3616 = vand.u32 %v3444, 4294901760
    %v3617 = vsub.f32 %v3444, %v3616
    %3618 = vmatmul.f32.gmra.mxu0 %v3617
    %v3619 = vpop.f32.mrf.mxu0
    %v3620 = vadd.f32 %v3568, %v3619
    %3621 = vdwg.mxu0
    %3622 = vmatpush.msra.mxu0 0.0
    %3623 = vmatpush.msra.mxu0 0.0
    %3624 = vmatpush.msra.mxu0 0.0
    %3625 = vmatpush.msra.mxu0 0.0
    %3626 = vmatpush.msra.mxu0 0.0
    %3627 = vmatpush.msra.mxu0 0.0
    %3628 = vmatpush.msra.mxu0 0.0
    %3629 = vmatpush.msra.mxu0 0.0
    %3630 = vmatpush.msra.mxu0 0.0
    %3631 = vmatpush.msra.mxu0 0.0
    %3632 = vmatpush.msra.mxu0 0.0
    %v3633 = vand.u32 %v3082, 4294901760
    %3634 = vmatpush.msra.mxu0 %v3633
    %v3635 = vand.u32 %v3081, 4294901760
    %3636 = vmatpush.msra.mxu0 %v3635
    %v3637 = vand.u32 %v3080, 4294901760
    %3638 = vmatpush.msra.mxu0 %v3637
    %v3639 = vand.u32 %v3079, 4294901760
    %3640 = vmatpush.msra.mxu0 %v3639
    %v3641 = vand.u32 %v3078, 4294901760
    %3642 = vmatpush.msra.mxu0 %v3641
    %v3643 = vand.u32 %v3436, 4294901760
    %v3644 = vsub.f32 %v3436, %v3643
    %v3645 = vand.u32 %v3644, 4294901760
    %3646 = vmatmul.f32.gmra.mxu0 %v3645
    %v3647 = vpop.f32.mrf.mxu0
    %v3648 = vadd.f32 %v3600, %v3647
    %v3649 = vand.u32 %v3438, 4294901760
    %v3650 = vsub.f32 %v3438, %v3649
    %v3651 = vand.u32 %v3650, 4294901760
    %3652 = vmatmul.f32.gmra.mxu0 %v3651
    %v3653 = vpop.f32.mrf.mxu0
    %v3654 = vadd.f32 %v3605, %v3653
    %v3655 = vand.u32 %v3440, 4294901760
    %v3656 = vsub.f32 %v3440, %v3655
    %v3657 = vand.u32 %v3656, 4294901760
    %3658 = vmatmul.f32.gmra.mxu0 %v3657
    %v3659 = vpop.f32.mrf.mxu0
    %v3660 = vadd.f32 %v3610, %v3659
    %v3661 = vand.u32 %v3442, 4294901760
    %v3662 = vsub.f32 %v3442, %v3661
    %v3663 = vand.u32 %v3662, 4294901760
    %3664 = vmatmul.f32.gmra.mxu0 %v3663
    %v3665 = vpop.f32.mrf.mxu0
    %v3666 = vadd.f32 %v3615, %v3665
    %v3667 = vand.u32 %v3444, 4294901760
    %v3668 = vsub.f32 %v3444, %v3667
    %v3669 = vand.u32 %v3668, 4294901760
    %3670 = vmatmul.f32.gmra.mxu0 %v3669
    %v3671 = vpop.f32.mrf.mxu0
    %v3672 = vadd.f32 %v3620, %v3671
    %3673 = vdwg.mxu0
    %3674 = vmatpush.msra.mxu0 0.0
    %3675 = vmatpush.msra.mxu0 0.0
    %3676 = vmatpush.msra.mxu0 0.0
    %3677 = vmatpush.msra.mxu0 0.0
    %3678 = vmatpush.msra.mxu0 0.0
    %3679 = vmatpush.msra.mxu0 0.0
    %3680 = vmatpush.msra.mxu0 0.0
    %3681 = vmatpush.msra.mxu0 0.0
    %3682 = vmatpush.msra.mxu0 0.0
    %3683 = vmatpush.msra.mxu0 0.0
    %3684 = vmatpush.msra.mxu0 0.0
    %v3685 = vand.u32 %v3082, 4294901760
    %v3686 = vsub.f32 %v3082, %v3685
    %v3687 = vand.u32 %v3686, 4294901760
    %3688 = vmatpush.msra.mxu0 %v3687
    %v3689 = vand.u32 %v3081, 4294901760
    %v3690 = vsub.f32 %v3081, %v3689
    %v3691 = vand.u32 %v3690, 4294901760
    %3692 = vmatpush.msra.mxu0 %v3691
    %v3693 = vand.u32 %v3080, 4294901760
    %v3694 = vsub.f32 %v3080, %v3693
    %v3695 = vand.u32 %v3694, 4294901760
    %3696 = vmatpush.msra.mxu0 %v3695
    %v3697 = vand.u32 %v3079, 4294901760
    %v3698 = vsub.f32 %v3079, %v3697
    %v3699 = vand.u32 %v3698, 4294901760
    %3700 = vmatpush.msra.mxu0 %v3699
    %v3701 = vand.u32 %v3078, 4294901760
    %v3702 = vsub.f32 %v3078, %v3701
    %v3703 = vand.u32 %v3702, 4294901760
    %3704 = vmatpush.msra.mxu0 %v3703
    %v3705 = vand.u32 %v3436, 4294901760
    %3706 = vmatmul.f32.gmra.mxu0 %v3705
    %v3707 = vpop.f32.mrf.mxu0
    %v3708 = vadd.f32 %v3648, %v3707
    %v3709 = vand.u32 %v3438, 4294901760
    %3710 = vmatmul.f32.gmra.mxu0 %v3709
    %v3711 = vpop.f32.mrf.mxu0
    %v3712 = vadd.f32 %v3654, %v3711
    %v3713 = vand.u32 %v3440, 4294901760
    %3714 = vmatmul.f32.gmra.mxu0 %v3713
    %v3715 = vpop.f32.mrf.mxu0
    %v3716 = vadd.f32 %v3660, %v3715
    %v3717 = vand.u32 %v3442, 4294901760
    %3718 = vmatmul.f32.gmra.mxu0 %v3717
    %v3719 = vpop.f32.mrf.mxu0
    %v3720 = vadd.f32 %v3666, %v3719
    %v3721 = vand.u32 %v3444, 4294901760
    %3722 = vmatmul.f32.gmra.mxu0 %v3721
    %v3723 = vpop.f32.mrf.mxu0
    %v3724 = vadd.f32 %v3672, %v3723
    %3725 = vdwg.mxu0
    %3726 = vmatpush.msra.mxu0 0.0
    %3727 = vmatpush.msra.mxu0 0.0
    %3728 = vmatpush.msra.mxu0 0.0
    %3729 = vmatpush.msra.mxu0 0.0
    %3730 = vmatpush.msra.mxu0 0.0
    %3731 = vmatpush.msra.mxu0 0.0
    %3732 = vmatpush.msra.mxu0 0.0
    %3733 = vmatpush.msra.mxu0 0.0
    %3734 = vmatpush.msra.mxu0 0.0
    %3735 = vmatpush.msra.mxu0 0.0
    %3736 = vmatpush.msra.mxu0 0.0
    %v3737 = vand.u32 %v3082, 4294901760
    %3738 = vmatpush.msra.mxu0 %v3737
    %v3739 = vand.u32 %v3081, 4294901760
    %3740 = vmatpush.msra.mxu0 %v3739
    %v3741 = vand.u32 %v3080, 4294901760
    %3742 = vmatpush.msra.mxu0 %v3741
    %v3743 = vand.u32 %v3079, 4294901760
    %3744 = vmatpush.msra.mxu0 %v3743
    %v3745 = vand.u32 %v3078, 4294901760
    %3746 = vmatpush.msra.mxu0 %v3745
    %v3747 = vand.u32 %v3436, 4294901760
    %3748 = vmatmul.f32.gmra.mxu0 %v3747
    %v3749 = vpop.f32.mrf.mxu0
    %v3750 = vadd.f32 %v3708, %v3749
    %v3751 = vand.u32 %v3438, 4294901760
    %3752 = vmatmul.f32.gmra.mxu0 %v3751
    %v3753 = vpop.f32.mrf.mxu0
    %v3754 = vadd.f32 %v3712, %v3753
    %v3755 = vand.u32 %v3440, 4294901760
    %3756 = vmatmul.f32.gmra.mxu0 %v3755
    %v3757 = vpop.f32.mrf.mxu0
    %v3758 = vadd.f32 %v3716, %v3757
    %v3759 = vand.u32 %v3442, 4294901760
    %3760 = vmatmul.f32.gmra.mxu0 %v3759
    %v3761 = vpop.f32.mrf.mxu0
    %v3762 = vadd.f32 %v3720, %v3761
    %v3763 = vand.u32 %v3444, 4294901760
    %3764 = vmatmul.f32.gmra.mxu0 %v3763
    %v3765 = vpop.f32.mrf.mxu0
    %v3766 = vadd.f32 %v3724, %v3765
    %3767 = vdwg.mxu0
    %s3768 = scalar_lea.vmem [#allocation2], 80
    %v3769 = vld [vmem:[%s3768] sm:$0xff]
    %v3770 = vld [vmem:[%s3768 + $0x8] sm:$0xff]
    %v3771 = vld [vmem:[%s3768 + $0x10] sm:$0xff]
    %v3772 = vld [vmem:[%s3768 + $0x18] sm:$0xff]
    %v3773 = vld [vmem:[%s3768 + $0x20] sm:$0xff]
    %v3774 = vrot.slane %v3072, 2
    %v3775 = vrot.slane %v3073, 2
    %v3776 = vsel %vm1304, %v3774, %v3775
    %v3777 = vrot.slane %v3074, 2
    %v3778 = vsel %vm1304, %v3775, %v3777
    %v3779 = vrot.slane %v3075, 2
    %v3780 = vsel %vm1304, %v3777, %v3779
    %v3781 = vrot.slane %v3076, 2
    %v3782 = vsel %vm1304, %v3779, %v3781
    %v3783 = vsel %vm3103, %v3776, 0
    %v3785 = vsel %vm3103, %v3778, 0
    %v3787 = vsel %vm3103, %v3780, 0
    %v3789 = vsel %vm3103, %v3782, 0
    %v3791 = vsel %vm3103, %v3781, 0
    %3793 = vmatpush.msra.mxu0 0.0
    %3794 = vmatpush.msra.mxu0 0.0
    %3795 = vmatpush.msra.mxu0 0.0
    %3796 = vmatpush.msra.mxu0 0.0
    %3797 = vmatpush.msra.mxu0 0.0
    %3798 = vmatpush.msra.mxu0 0.0
    %3799 = vmatpush.msra.mxu0 0.0
    %3800 = vmatpush.msra.mxu0 0.0
    %3801 = vmatpush.msra.mxu0 0.0
    %3802 = vmatpush.msra.mxu0 0.0
    %3803 = vmatpush.msra.mxu0 0.0
    %v3804 = vand.u32 %v3773, 4294901760
    %3805 = vmatpush.msra.mxu0 %v3804
    %v3806 = vand.u32 %v3772, 4294901760
    %3807 = vmatpush.msra.mxu0 %v3806
    %v3808 = vand.u32 %v3771, 4294901760
    %3809 = vmatpush.msra.mxu0 %v3808
    %v3810 = vand.u32 %v3770, 4294901760
    %3811 = vmatpush.msra.mxu0 %v3810
    %v3812 = vand.u32 %v3769, 4294901760
    %3813 = vmatpush.msra.mxu0 %v3812
    %v3814 = vand.u32 %v3783, 4294901760
    %v3815 = vsub.f32 %v3783, %v3814
    %v3816 = vand.u32 %v3815, 4294901760
    %v3817 = vsub.f32 %v3815, %v3816
    %v3818 = vand.u32 %v3817, 4294901760
    %3819 = vmatmul.f32.gmra.mxu0 %v3818
    %v3820 = vpop.f32.mrf.mxu0
    %v3821 = vadd.f32 0.0, %v3820
    %v3822 = vand.u32 %v3785, 4294901760
    %v3823 = vsub.f32 %v3785, %v3822
    %v3824 = vand.u32 %v3823, 4294901760
    %v3825 = vsub.f32 %v3823, %v3824
    %v3826 = vand.u32 %v3825, 4294901760
    %3827 = vmatmul.f32.gmra.mxu0 %v3826
    %v3828 = vpop.f32.mrf.mxu0
    %v3829 = vadd.f32 0.0, %v3828
    %v3830 = vand.u32 %v3787, 4294901760
    %v3831 = vsub.f32 %v3787, %v3830
    %v3832 = vand.u32 %v3831, 4294901760
    %v3833 = vsub.f32 %v3831, %v3832
    %v3834 = vand.u32 %v3833, 4294901760
    %3835 = vmatmul.f32.gmra.mxu0 %v3834
    %v3836 = vpop.f32.mrf.mxu0
    %v3837 = vadd.f32 0.0, %v3836
    %v3838 = vand.u32 %v3789, 4294901760
    %v3839 = vsub.f32 %v3789, %v3838
    %v3840 = vand.u32 %v3839, 4294901760
    %v3841 = vsub.f32 %v3839, %v3840
    %v3842 = vand.u32 %v3841, 4294901760
    %3843 = vmatmul.f32.gmra.mxu0 %v3842
    %v3844 = vpop.f32.mrf.mxu0
    %v3845 = vadd.f32 0.0, %v3844
    %v3846 = vand.u32 %v3791, 4294901760
    %v3847 = vsub.f32 %v3791, %v3846
    %v3848 = vand.u32 %v3847, 4294901760
    %v3849 = vsub.f32 %v3847, %v3848
    %v3850 = vand.u32 %v3849, 4294901760
    %3851 = vmatmul.f32.gmra.mxu0 %v3850
    %v3852 = vpop.f32.mrf.mxu0
    %v3853 = vadd.f32 0.0, %v3852
    %3854 = vdwg.mxu0
    %3855 = vmatpush.msra.mxu0 0.0
    %3856 = vmatpush.msra.mxu0 0.0
    %3857 = vmatpush.msra.mxu0 0.0
    %3858 = vmatpush.msra.mxu0 0.0
    %3859 = vmatpush.msra.mxu0 0.0
    %3860 = vmatpush.msra.mxu0 0.0
    %3861 = vmatpush.msra.mxu0 0.0
    %3862 = vmatpush.msra.mxu0 0.0
    %3863 = vmatpush.msra.mxu0 0.0
    %3864 = vmatpush.msra.mxu0 0.0
    %3865 = vmatpush.msra.mxu0 0.0
    %v3866 = vand.u32 %v3773, 4294901760
    %v3867 = vsub.f32 %v3773, %v3866
    %v3868 = vand.u32 %v3867, 4294901760
    %v3869 = vsub.f32 %v3867, %v3868
    %v3870 = vand.u32 %v3869, 4294901760
    %3871 = vmatpush.msra.mxu0 %v3870
    %v3872 = vand.u32 %v3772, 4294901760
    %v3873 = vsub.f32 %v3772, %v3872
    %v3874 = vand.u32 %v3873, 4294901760
    %v3875 = vsub.f32 %v3873, %v3874
    %v3876 = vand.u32 %v3875, 4294901760
    %3877 = vmatpush.msra.mxu0 %v3876
    %v3878 = vand.u32 %v3771, 4294901760
    %v3879 = vsub.f32 %v3771, %v3878
    %v3880 = vand.u32 %v3879, 4294901760
    %v3881 = vsub.f32 %v3879, %v3880
    %v3882 = vand.u32 %v3881, 4294901760
    %3883 = vmatpush.msra.mxu0 %v3882
    %v3884 = vand.u32 %v3770, 4294901760
    %v3885 = vsub.f32 %v3770, %v3884
    %v3886 = vand.u32 %v3885, 4294901760
    %v3887 = vsub.f32 %v3885, %v3886
    %v3888 = vand.u32 %v3887, 4294901760
    %3889 = vmatpush.msra.mxu0 %v3888
    %v3890 = vand.u32 %v3769, 4294901760
    %v3891 = vsub.f32 %v3769, %v3890
    %v3892 = vand.u32 %v3891, 4294901760
    %v3893 = vsub.f32 %v3891, %v3892
    %v3894 = vand.u32 %v3893, 4294901760
    %3895 = vmatpush.msra.mxu0 %v3894
    %v3896 = vand.u32 %v3783, 4294901760
    %3897 = vmatmul.f32.gmra.mxu0 %v3896
    %v3898 = vpop.f32.mrf.mxu0
    %v3899 = vadd.f32 %v3821, %v3898
    %v3900 = vand.u32 %v3785, 4294901760
    %3901 = vmatmul.f32.gmra.mxu0 %v3900
    %v3902 = vpop.f32.mrf.mxu0
    %v3903 = vadd.f32 %v3829, %v3902
    %v3904 = vand.u32 %v3787, 4294901760
    %3905 = vmatmul.f32.gmra.mxu0 %v3904
    %v3906 = vpop.f32.mrf.mxu0
    %v3907 = vadd.f32 %v3837, %v3906
    %v3908 = vand.u32 %v3789, 4294901760
    %3909 = vmatmul.f32.gmra.mxu0 %v3908
    %v3910 = vpop.f32.mrf.mxu0
    %v3911 = vadd.f32 %v3845, %v3910
    %v3912 = vand.u32 %v3791, 4294901760
    %3913 = vmatmul.f32.gmra.mxu0 %v3912
    %v3914 = vpop.f32.mrf.mxu0
    %v3915 = vadd.f32 %v3853, %v3914
    %3916 = vdwg.mxu0
    %3917 = vmatpush.msra.mxu0 0.0
    %3918 = vmatpush.msra.mxu0 0.0
    %3919 = vmatpush.msra.mxu0 0.0
    %3920 = vmatpush.msra.mxu0 0.0
    %3921 = vmatpush.msra.mxu0 0.0
    %3922 = vmatpush.msra.mxu0 0.0
    %3923 = vmatpush.msra.mxu0 0.0
    %3924 = vmatpush.msra.mxu0 0.0
    %3925 = vmatpush.msra.mxu0 0.0
    %3926 = vmatpush.msra.mxu0 0.0
    %3927 = vmatpush.msra.mxu0 0.0
    %v3928 = vand.u32 %v3773, 4294901760
    %v3929 = vsub.f32 %v3773, %v3928
    %3930 = vmatpush.msra.mxu0 %v3929
    %v3931 = vand.u32 %v3772, 4294901760
    %v3932 = vsub.f32 %v3772, %v3931
    %3933 = vmatpush.msra.mxu0 %v3932
    %v3934 = vand.u32 %v3771, 4294901760
    %v3935 = vsub.f32 %v3771, %v3934
    %3936 = vmatpush.msra.mxu0 %v3935
    %v3937 = vand.u32 %v3770, 4294901760
    %v3938 = vsub.f32 %v3770, %v3937
    %3939 = vmatpush.msra.mxu0 %v3938
    %v3940 = vand.u32 %v3769, 4294901760
    %v3941 = vsub.f32 %v3769, %v3940
    %3942 = vmatpush.msra.mxu0 %v3941
    %v3943 = vand.u32 %v3783, 4294901760
    %v3944 = vsub.f32 %v3783, %v3943
    %3945 = vmatmul.f32.gmra.mxu0 %v3944
    %v3946 = vpop.f32.mrf.mxu0
    %v3947 = vadd.f32 %v3899, %v3946
    %v3948 = vand.u32 %v3785, 4294901760
    %v3949 = vsub.f32 %v3785, %v3948
    %3950 = vmatmul.f32.gmra.mxu0 %v3949
    %v3951 = vpop.f32.mrf.mxu0
    %v3952 = vadd.f32 %v3903, %v3951
    %v3953 = vand.u32 %v3787, 4294901760
    %v3954 = vsub.f32 %v3787, %v3953
    %3955 = vmatmul.f32.gmra.mxu0 %v3954
    %v3956 = vpop.f32.mrf.mxu0
    %v3957 = vadd.f32 %v3907, %v3956
    %v3958 = vand.u32 %v3789, 4294901760
    %v3959 = vsub.f32 %v3789, %v3958
    %3960 = vmatmul.f32.gmra.mxu0 %v3959
    %v3961 = vpop.f32.mrf.mxu0
    %v3962 = vadd.f32 %v3911, %v3961
    %v3963 = vand.u32 %v3791, 4294901760
    %v3964 = vsub.f32 %v3791, %v3963
    %3965 = vmatmul.f32.gmra.mxu0 %v3964
    %v3966 = vpop.f32.mrf.mxu0
    %v3967 = vadd.f32 %v3915, %v3966
    %3968 = vdwg.mxu0
    %3969 = vmatpush.msra.mxu0 0.0
    %3970 = vmatpush.msra.mxu0 0.0
    %3971 = vmatpush.msra.mxu0 0.0
    %3972 = vmatpush.msra.mxu0 0.0
    %3973 = vmatpush.msra.mxu0 0.0
    %3974 = vmatpush.msra.mxu0 0.0
    %3975 = vmatpush.msra.mxu0 0.0
    %3976 = vmatpush.msra.mxu0 0.0
    %3977 = vmatpush.msra.mxu0 0.0
    %3978 = vmatpush.msra.mxu0 0.0
    %3979 = vmatpush.msra.mxu0 0.0
    %v3980 = vand.u32 %v3773, 4294901760
    %3981 = vmatpush.msra.mxu0 %v3980
    %v3982 = vand.u32 %v3772, 4294901760
    %3983 = vmatpush.msra.mxu0 %v3982
    %v3984 = vand.u32 %v3771, 4294901760
    %3985 = vmatpush.msra.mxu0 %v3984
    %v3986 = vand.u32 %v3770, 4294901760
    %3987 = vmatpush.msra.mxu0 %v3986
    %v3988 = vand.u32 %v3769, 4294901760
    %3989 = vmatpush.msra.mxu0 %v3988
    %v3990 = vand.u32 %v3783, 4294901760
    %v3991 = vsub.f32 %v3783, %v3990
    %v3992 = vand.u32 %v3991, 4294901760
    %3993 = vmatmul.f32.gmra.mxu0 %v3992
    %v3994 = vpop.f32.mrf.mxu0
    %v3995 = vadd.f32 %v3947, %v3994
    %v3996 = vand.u32 %v3785, 4294901760
    %v3997 = vsub.f32 %v3785, %v3996
    %v3998 = vand.u32 %v3997, 4294901760
    %3999 = vmatmul.f32.gmra.mxu0 %v3998
    %v4000 = vpop.f32.mrf.mxu0
    %v4001 = vadd.f32 %v3952, %v4000
    %v4002 = vand.u32 %v3787, 4294901760
    %v4003 = vsub.f32 %v3787, %v4002
    %v4004 = vand.u32 %v4003, 4294901760
    %4005 = vmatmul.f32.gmra.mxu0 %v4004
    %v4006 = vpop.f32.mrf.mxu0
    %v4007 = vadd.f32 %v3957, %v4006
    %v4008 = vand.u32 %v3789, 4294901760
    %v4009 = vsub.f32 %v3789, %v4008
    %v4010 = vand.u32 %v4009, 4294901760
    %4011 = vmatmul.f32.gmra.mxu0 %v4010
    %v4012 = vpop.f32.mrf.mxu0
    %v4013 = vadd.f32 %v3962, %v4012
    %v4014 = vand.u32 %v3791, 4294901760
    %v4015 = vsub.f32 %v3791, %v4014
    %v4016 = vand.u32 %v4015, 4294901760
    %4017 = vmatmul.f32.gmra.mxu0 %v4016
    %v4018 = vpop.f32.mrf.mxu0
    %v4019 = vadd.f32 %v3967, %v4018
    %4020 = vdwg.mxu0
    %4021 = vmatpush.msra.mxu0 0.0
    %4022 = vmatpush.msra.mxu0 0.0
    %4023 = vmatpush.msra.mxu0 0.0
    %4024 = vmatpush.msra.mxu0 0.0
    %4025 = vmatpush.msra.mxu0 0.0
    %4026 = vmatpush.msra.mxu0 0.0
    %4027 = vmatpush.msra.mxu0 0.0
    %4028 = vmatpush.msra.mxu0 0.0
    %4029 = vmatpush.msra.mxu0 0.0
    %4030 = vmatpush.msra.mxu0 0.0
    %4031 = vmatpush.msra.mxu0 0.0
    %v4032 = vand.u32 %v3773, 4294901760
    %v4033 = vsub.f32 %v3773, %v4032
    %v4034 = vand.u32 %v4033, 4294901760
    %4035 = vmatpush.msra.mxu0 %v4034
    %v4036 = vand.u32 %v3772, 4294901760
    %v4037 = vsub.f32 %v3772, %v4036
    %v4038 = vand.u32 %v4037, 4294901760
    %4039 = vmatpush.msra.mxu0 %v4038
    %v4040 = vand.u32 %v3771, 4294901760
    %v4041 = vsub.f32 %v3771, %v4040
    %v4042 = vand.u32 %v4041, 4294901760
    %4043 = vmatpush.msra.mxu0 %v4042
    %v4044 = vand.u32 %v3770, 4294901760
    %v4045 = vsub.f32 %v3770, %v4044
    %v4046 = vand.u32 %v4045, 4294901760
    %4047 = vmatpush.msra.mxu0 %v4046
    %v4048 = vand.u32 %v3769, 4294901760
    %v4049 = vsub.f32 %v3769, %v4048
    %v4050 = vand.u32 %v4049, 4294901760
    %4051 = vmatpush.msra.mxu0 %v4050
    %v4052 = vand.u32 %v3783, 4294901760
    %4053 = vmatmul.f32.gmra.mxu0 %v4052
    %v4054 = vpop.f32.mrf.mxu0
    %v4055 = vadd.f32 %v3995, %v4054
    %v4056 = vand.u32 %v3785, 4294901760
    %4057 = vmatmul.f32.gmra.mxu0 %v4056
    %v4058 = vpop.f32.mrf.mxu0
    %v4059 = vadd.f32 %v4001, %v4058
    %v4060 = vand.u32 %v3787, 4294901760
    %4061 = vmatmul.f32.gmra.mxu0 %v4060
    %v4062 = vpop.f32.mrf.mxu0
    %v4063 = vadd.f32 %v4007, %v4062
    %v4064 = vand.u32 %v3789, 4294901760
    %4065 = vmatmul.f32.gmra.mxu0 %v4064
    %v4066 = vpop.f32.mrf.mxu0
    %v4067 = vadd.f32 %v4013, %v4066
    %v4068 = vand.u32 %v3791, 4294901760
    %4069 = vmatmul.f32.gmra.mxu0 %v4068
    %v4070 = vpop.f32.mrf.mxu0
    %v4071 = vadd.f32 %v4019, %v4070
    %4072 = vdwg.mxu0
    %4073 = vmatpush.msra.mxu0 0.0
    %4074 = vmatpush.msra.mxu0 0.0
    %4075 = vmatpush.msra.mxu0 0.0
    %4076 = vmatpush.msra.mxu0 0.0
    %4077 = vmatpush.msra.mxu0 0.0
    %4078 = vmatpush.msra.mxu0 0.0
    %4079 = vmatpush.msra.mxu0 0.0
    %4080 = vmatpush.msra.mxu0 0.0
    %4081 = vmatpush.msra.mxu0 0.0
    %4082 = vmatpush.msra.mxu0 0.0
    %4083 = vmatpush.msra.mxu0 0.0
    %v4084 = vand.u32 %v3773, 4294901760
    %4085 = vmatpush.msra.mxu0 %v4084
    %v4086 = vand.u32 %v3772, 4294901760
    %4087 = vmatpush.msra.mxu0 %v4086
    %v4088 = vand.u32 %v3771, 4294901760
    %4089 = vmatpush.msra.mxu0 %v4088
    %v4090 = vand.u32 %v3770, 4294901760
    %4091 = vmatpush.msra.mxu0 %v4090
    %v4092 = vand.u32 %v3769, 4294901760
    %4093 = vmatpush.msra.mxu0 %v4092
    %v4094 = vand.u32 %v3783, 4294901760
    %4095 = vmatmul.f32.gmra.mxu0 %v4094
    %v4096 = vpop.f32.mrf.mxu0
    %v4097 = vadd.f32 %v4055, %v4096
    %v4098 = vand.u32 %v3785, 4294901760
    %4099 = vmatmul.f32.gmra.mxu0 %v4098
    %v4100 = vpop.f32.mrf.mxu0
    %v4101 = vadd.f32 %v4059, %v4100
    %v4102 = vand.u32 %v3787, 4294901760
    %4103 = vmatmul.f32.gmra.mxu0 %v4102
    %v4104 = vpop.f32.mrf.mxu0
    %v4105 = vadd.f32 %v4063, %v4104
    %v4106 = vand.u32 %v3789, 4294901760
    %4107 = vmatmul.f32.gmra.mxu0 %v4106
    %v4108 = vpop.f32.mrf.mxu0
    %v4109 = vadd.f32 %v4067, %v4108
    %v4110 = vand.u32 %v3791, 4294901760
    %4111 = vmatmul.f32.gmra.mxu0 %v4110
    %v4112 = vpop.f32.mrf.mxu0
    %v4113 = vadd.f32 %v4071, %v4112
    %4114 = vdwg.mxu0
    %v4115 = vadd.f32 %v3750, %v4097
    %v4116 = vadd.f32 %v3754, %v4101
    %v4117 = vadd.f32 %v3758, %v4105
    %v4118 = vadd.f32 %v3762, %v4109
    %v4119 = vadd.f32 %v3766, %v4113
    %v4121 = vperm.slane %v3077, 0
    %v4123 = vadd.f32 %v4115, %v4121
    %v4124 = vadd.f32 %v4116, %v4121
    %v4125 = vadd.f32 %v4117, %v4121
    %v4126 = vadd.f32 %v4118, %v4121
    %v4127 = vadd.f32 %v4119, %v4121
    %v4128 = vld [vmem:[%s7] sm:$0xff]
    %v4129 = vld [vmem:[%s7 + $0x8] sm:$0xff]
    %v4130 = vld [vmem:[%s8] sm:$0xff]
    %v4131 = vld [vmem:[%s8 + $0x8] sm:$0xff]
    %v4132 = vld [vmem:[%s8 + $0x10] sm:$0xff]
    %v4133 = vld [vmem:[%s8 + $0x18] sm:$0xff]
    %v4134 = vld [vmem:[%s8 + $0x20] sm:$0xff]
    %v4135 = vld [vmem:[%s8 + $0x28] sm:$0xff]
    %v4136 = vld [vmem:[%s8 + $0x30] sm:$0xff]
    %v4142 = vrot.slane %v4123, 1
    %v4143 = vrot.slane %v4124, 1
    %v4144 = vsel %vm100, %v4142, %v4143
    %v4145 = vrot.slane %v4125, 1
    %v4146 = vsel %vm100, %v4143, %v4145
    %v4147 = vrot.slane %v4126, 1
    %v4148 = vsel %vm100, %v4145, %v4147
    %v4149 = vrot.slane %v4127, 1
    %v4150 = vsel %vm100, %v4147, %v4149
    %v4156 = vmax.f32 %v4123, %v4144
    %v4157 = vmax.f32 %v4124, %v4146
    %v4158 = vmax.f32 %v4125, %v4148
    %v4159 = vmax.f32 %v4126, %v4150
    %v4160 = vmax.f32 %v4127, %v4149
    %vm4161 = vcmask 302080
    %v4163 = vsel %vm4161, %v4128, 0
    %v4166 = vsel %vm4161, %v4129, 0
    %v4169 = vsel %vm2021, %v4160, 0
    %4171 = vmatpush.msra.mxu0 0.0
    %4172 = vmatpush.msra.mxu0 0.0
    %4173 = vmatpush.msra.mxu0 0.0
    %4174 = vmatpush.msra.mxu0 0.0
    %4175 = vmatpush.msra.mxu0 0.0
    %4176 = vmatpush.msra.mxu0 0.0
    %4177 = vmatpush.msra.mxu0 0.0
    %4178 = vmatpush.msra.mxu0 0.0
    %4179 = vmatpush.msra.mxu0 0.0
    %4180 = vmatpush.msra.mxu0 0.0
    %4181 = vmatpush.msra.mxu0 0.0
    %v4182 = vand.u32 %v4169, 4294901760
    %4183 = vmatpush.msra.mxu0 %v4182
    %v4184 = vand.u32 %v4159, 4294901760
    %4185 = vmatpush.msra.mxu0 %v4184
    %v4186 = vand.u32 %v4158, 4294901760
    %4187 = vmatpush.msra.mxu0 %v4186
    %v4188 = vand.u32 %v4157, 4294901760
    %4189 = vmatpush.msra.mxu0 %v4188
    %v4190 = vand.u32 %v4156, 4294901760
    %4191 = vmatpush.msra.mxu0 %v4190
    %v4192 = vand.u32 %v4163, 4294901760
    %v4193 = vsub.f32 %v4163, %v4192
    %v4194 = vand.u32 %v4193, 4294901760
    %v4195 = vsub.f32 %v4193, %v4194
    %v4196 = vand.u32 %v4195, 4294901760
    %4197 = vmatmul.f32.gmra.mxu0 %v4196
    %v4198 = vpop.f32.mrf.mxu0
    %v4199 = vadd.f32 0.0, %v4198
    %v4200 = vand.u32 %v4166, 4294901760
    %v4201 = vsub.f32 %v4166, %v4200
    %v4202 = vand.u32 %v4201, 4294901760
    %v4203 = vsub.f32 %v4201, %v4202
    %v4204 = vand.u32 %v4203, 4294901760
    %4205 = vmatmul.f32.gmra.mxu0 %v4204
    %v4206 = vpop.f32.mrf.mxu0
    %v4207 = vadd.f32 0.0, %v4206
    %4208 = vdwg.mxu0
    %4209 = vmatpush.msra.mxu0 0.0
    %4210 = vmatpush.msra.mxu0 0.0
    %4211 = vmatpush.msra.mxu0 0.0
    %4212 = vmatpush.msra.mxu0 0.0
    %4213 = vmatpush.msra.mxu0 0.0
    %4214 = vmatpush.msra.mxu0 0.0
    %4215 = vmatpush.msra.mxu0 0.0
    %4216 = vmatpush.msra.mxu0 0.0
    %4217 = vmatpush.msra.mxu0 0.0
    %4218 = vmatpush.msra.mxu0 0.0
    %4219 = vmatpush.msra.mxu0 0.0
    %v4220 = vand.u32 %v4169, 4294901760
    %v4221 = vsub.f32 %v4169, %v4220
    %v4222 = vand.u32 %v4221, 4294901760
    %v4223 = vsub.f32 %v4221, %v4222
    %v4224 = vand.u32 %v4223, 4294901760
    %4225 = vmatpush.msra.mxu0 %v4224
    %v4226 = vand.u32 %v4159, 4294901760
    %v4227 = vsub.f32 %v4159, %v4226
    %v4228 = vand.u32 %v4227, 4294901760
    %v4229 = vsub.f32 %v4227, %v4228
    %v4230 = vand.u32 %v4229, 4294901760
    %4231 = vmatpush.msra.mxu0 %v4230
    %v4232 = vand.u32 %v4158, 4294901760
    %v4233 = vsub.f32 %v4158, %v4232
    %v4234 = vand.u32 %v4233, 4294901760
    %v4235 = vsub.f32 %v4233, %v4234
    %v4236 = vand.u32 %v4235, 4294901760
    %4237 = vmatpush.msra.mxu0 %v4236
    %v4238 = vand.u32 %v4157, 4294901760
    %v4239 = vsub.f32 %v4157, %v4238
    %v4240 = vand.u32 %v4239, 4294901760
    %v4241 = vsub.f32 %v4239, %v4240
    %v4242 = vand.u32 %v4241, 4294901760
    %4243 = vmatpush.msra.mxu0 %v4242
    %v4244 = vand.u32 %v4156, 4294901760
    %v4245 = vsub.f32 %v4156, %v4244
    %v4246 = vand.u32 %v4245, 4294901760
    %v4247 = vsub.f32 %v4245, %v4246
    %v4248 = vand.u32 %v4247, 4294901760
    %4249 = vmatpush.msra.mxu0 %v4248
    %v4250 = vand.u32 %v4163, 4294901760
    %4251 = vmatmul.f32.gmra.mxu0 %v4250
    %v4252 = vpop.f32.mrf.mxu0
    %v4253 = vadd.f32 %v4199, %v4252
    %v4254 = vand.u32 %v4166, 4294901760
    %4255 = vmatmul.f32.gmra.mxu0 %v4254
    %v4256 = vpop.f32.mrf.mxu0
    %v4257 = vadd.f32 %v4207, %v4256
    %4258 = vdwg.mxu0
    %4259 = vmatpush.msra.mxu0 0.0
    %4260 = vmatpush.msra.mxu0 0.0
    %4261 = vmatpush.msra.mxu0 0.0
    %4262 = vmatpush.msra.mxu0 0.0
    %4263 = vmatpush.msra.mxu0 0.0
    %4264 = vmatpush.msra.mxu0 0.0
    %4265 = vmatpush.msra.mxu0 0.0
    %4266 = vmatpush.msra.mxu0 0.0
    %4267 = vmatpush.msra.mxu0 0.0
    %4268 = vmatpush.msra.mxu0 0.0
    %4269 = vmatpush.msra.mxu0 0.0
    %v4270 = vand.u32 %v4169, 4294901760
    %v4271 = vsub.f32 %v4169, %v4270
    %4272 = vmatpush.msra.mxu0 %v4271
    %v4273 = vand.u32 %v4159, 4294901760
    %v4274 = vsub.f32 %v4159, %v4273
    %4275 = vmatpush.msra.mxu0 %v4274
    %v4276 = vand.u32 %v4158, 4294901760
    %v4277 = vsub.f32 %v4158, %v4276
    %4278 = vmatpush.msra.mxu0 %v4277
    %v4279 = vand.u32 %v4157, 4294901760
    %v4280 = vsub.f32 %v4157, %v4279
    %4281 = vmatpush.msra.mxu0 %v4280
    %v4282 = vand.u32 %v4156, 4294901760
    %v4283 = vsub.f32 %v4156, %v4282
    %4284 = vmatpush.msra.mxu0 %v4283
    %v4285 = vand.u32 %v4163, 4294901760
    %v4286 = vsub.f32 %v4163, %v4285
    %4287 = vmatmul.f32.gmra.mxu0 %v4286
    %v4288 = vpop.f32.mrf.mxu0
    %v4289 = vadd.f32 %v4253, %v4288
    %v4290 = vand.u32 %v4166, 4294901760
    %v4291 = vsub.f32 %v4166, %v4290
    %4292 = vmatmul.f32.gmra.mxu0 %v4291
    %v4293 = vpop.f32.mrf.mxu0
    %v4294 = vadd.f32 %v4257, %v4293
    %4295 = vdwg.mxu0
    %4296 = vmatpush.msra.mxu0 0.0
    %4297 = vmatpush.msra.mxu0 0.0
    %4298 = vmatpush.msra.mxu0 0.0
    %4299 = vmatpush.msra.mxu0 0.0
    %4300 = vmatpush.msra.mxu0 0.0
    %4301 = vmatpush.msra.mxu0 0.0
    %4302 = vmatpush.msra.mxu0 0.0
    %4303 = vmatpush.msra.mxu0 0.0
    %4304 = vmatpush.msra.mxu0 0.0
    %4305 = vmatpush.msra.mxu0 0.0
    %4306 = vmatpush.msra.mxu0 0.0
    %v4307 = vand.u32 %v4169, 4294901760
    %4308 = vmatpush.msra.mxu0 %v4307
    %v4309 = vand.u32 %v4159, 4294901760
    %4310 = vmatpush.msra.mxu0 %v4309
    %v4311 = vand.u32 %v4158, 4294901760
    %4312 = vmatpush.msra.mxu0 %v4311
    %v4313 = vand.u32 %v4157, 4294901760
    %4314 = vmatpush.msra.mxu0 %v4313
    %v4315 = vand.u32 %v4156, 4294901760
    %4316 = vmatpush.msra.mxu0 %v4315
    %v4317 = vand.u32 %v4163, 4294901760
    %v4318 = vsub.f32 %v4163, %v4317
    %v4319 = vand.u32 %v4318, 4294901760
    %4320 = vmatmul.f32.gmra.mxu0 %v4319
    %v4321 = vpop.f32.mrf.mxu0
    %v4322 = vadd.f32 %v4289, %v4321
    %v4323 = vand.u32 %v4166, 4294901760
    %v4324 = vsub.f32 %v4166, %v4323
    %v4325 = vand.u32 %v4324, 4294901760
    %4326 = vmatmul.f32.gmra.mxu0 %v4325
    %v4327 = vpop.f32.mrf.mxu0
    %v4328 = vadd.f32 %v4294, %v4327
    %4329 = vdwg.mxu0
    %4330 = vmatpush.msra.mxu0 0.0
    %4331 = vmatpush.msra.mxu0 0.0
    %4332 = vmatpush.msra.mxu0 0.0
    %4333 = vmatpush.msra.mxu0 0.0
    %4334 = vmatpush.msra.mxu0 0.0
    %4335 = vmatpush.msra.mxu0 0.0
    %4336 = vmatpush.msra.mxu0 0.0
    %4337 = vmatpush.msra.mxu0 0.0
    %4338 = vmatpush.msra.mxu0 0.0
    %4339 = vmatpush.msra.mxu0 0.0
    %4340 = vmatpush.msra.mxu0 0.0
    %v4341 = vand.u32 %v4169, 4294901760
    %v4342 = vsub.f32 %v4169, %v4341
    %v4343 = vand.u32 %v4342, 4294901760
    %4344 = vmatpush.msra.mxu0 %v4343
    %v4345 = vand.u32 %v4159, 4294901760
    %v4346 = vsub.f32 %v4159, %v4345
    %v4347 = vand.u32 %v4346, 4294901760
    %4348 = vmatpush.msra.mxu0 %v4347
    %v4349 = vand.u32 %v4158, 4294901760
    %v4350 = vsub.f32 %v4158, %v4349
    %v4351 = vand.u32 %v4350, 4294901760
    %4352 = vmatpush.msra.mxu0 %v4351
    %v4353 = vand.u32 %v4157, 4294901760
    %v4354 = vsub.f32 %v4157, %v4353
    %v4355 = vand.u32 %v4354, 4294901760
    %4356 = vmatpush.msra.mxu0 %v4355
    %v4357 = vand.u32 %v4156, 4294901760
    %v4358 = vsub.f32 %v4156, %v4357
    %v4359 = vand.u32 %v4358, 4294901760
    %4360 = vmatpush.msra.mxu0 %v4359
    %v4361 = vand.u32 %v4163, 4294901760
    %4362 = vmatmul.f32.gmra.mxu0 %v4361
    %v4363 = vpop.f32.mrf.mxu0
    %v4364 = vadd.f32 %v4322, %v4363
    %v4365 = vand.u32 %v4166, 4294901760
    %4366 = vmatmul.f32.gmra.mxu0 %v4365
    %v4367 = vpop.f32.mrf.mxu0
    %v4368 = vadd.f32 %v4328, %v4367
    %4369 = vdwg.mxu0
    %4370 = vmatpush.msra.mxu0 0.0
    %4371 = vmatpush.msra.mxu0 0.0
    %4372 = vmatpush.msra.mxu0 0.0
    %4373 = vmatpush.msra.mxu0 0.0
    %4374 = vmatpush.msra.mxu0 0.0
    %4375 = vmatpush.msra.mxu0 0.0
    %4376 = vmatpush.msra.mxu0 0.0
    %4377 = vmatpush.msra.mxu0 0.0
    %4378 = vmatpush.msra.mxu0 0.0
    %4379 = vmatpush.msra.mxu0 0.0
    %4380 = vmatpush.msra.mxu0 0.0
    %v4381 = vand.u32 %v4169, 4294901760
    %4382 = vmatpush.msra.mxu0 %v4381
    %v4383 = vand.u32 %v4159, 4294901760
    %4384 = vmatpush.msra.mxu0 %v4383
    %v4385 = vand.u32 %v4158, 4294901760
    %4386 = vmatpush.msra.mxu0 %v4385
    %v4387 = vand.u32 %v4157, 4294901760
    %4388 = vmatpush.msra.mxu0 %v4387
    %v4389 = vand.u32 %v4156, 4294901760
    %4390 = vmatpush.msra.mxu0 %v4389
    %v4391 = vand.u32 %v4163, 4294901760
    %4392 = vmatmul.f32.gmra.mxu0 %v4391
    %v4393 = vpop.f32.mrf.mxu0
    %v4394 = vadd.f32 %v4364, %v4393
    %v4395 = vand.u32 %v4166, 4294901760
    %4396 = vmatmul.f32.gmra.mxu0 %v4395
    %v4397 = vpop.f32.mrf.mxu0
    %v4398 = vadd.f32 %v4368, %v4397
    %4399 = vdwg.mxu0
    %4402 = vrot.lane.b32.xlu0 %v4394, 120
    %v4403 = vpop.permute.xlu0 %4402
    %4404 = vrot.lane.b32.xlu0 %v4398, 120
    %v4405 = vpop.permute.xlu0 %4404
    %v4408 = vmax.f32 %v4394, %v4403
    %v4409 = vmax.f32 %v4398, %v4405
    %vm4410 = vcmask 457728
    %v4412 = vsel %vm4410, %v4408, 0
    %v4415 = vsel %vm4410, %v4409, 0
    %4417 = vmatpush.msra.mxu0 0.0
    %4418 = vmatpush.msra.mxu0 0.0
    %4419 = vmatpush.msra.mxu0 0.0
    %4420 = vmatpush.msra.mxu0 0.0
    %4421 = vmatpush.msra.mxu0 0.0
    %4422 = vmatpush.msra.mxu0 0.0
    %4423 = vmatpush.msra.mxu0 0.0
    %4424 = vmatpush.msra.mxu0 0.0
    %4425 = vmatpush.msra.mxu0 0.0
    %v4426 = vand.u32 %v4136, 4294901760
    %4427 = vmatpush.msra.mxu0 %v4426
    %v4428 = vand.u32 %v4135, 4294901760
    %4429 = vmatpush.msra.mxu0 %v4428
    %v4430 = vand.u32 %v4134, 4294901760
    %4431 = vmatpush.msra.mxu0 %v4430
    %v4432 = vand.u32 %v4133, 4294901760
    %4433 = vmatpush.msra.mxu0 %v4432
    %v4434 = vand.u32 %v4132, 4294901760
    %4435 = vmatpush.msra.mxu0 %v4434
    %v4436 = vand.u32 %v4131, 4294901760
    %4437 = vmatpush.msra.mxu0 %v4436
    %v4438 = vand.u32 %v4130, 4294901760
    %4439 = vmatpush.msra.mxu0 %v4438
    %v4440 = vand.u32 %v4412, 4294901760
    %v4441 = vsub.f32 %v4412, %v4440
    %v4442 = vand.u32 %v4441, 4294901760
    %v4443 = vsub.f32 %v4441, %v4442
    %v4444 = vand.u32 %v4443, 4294901760
    %4445 = vmatmul.f32.gmra.mxu0 %v4444
    %v4446 = vpop.f32.mrf.mxu0
    %v4447 = vadd.f32 0.0, %v4446
    %v4448 = vand.u32 %v4415, 4294901760
    %v4449 = vsub.f32 %v4415, %v4448
    %v4450 = vand.u32 %v4449, 4294901760
    %v4451 = vsub.f32 %v4449, %v4450
    %v4452 = vand.u32 %v4451, 4294901760
    %4453 = vmatmul.f32.gmra.mxu0 %v4452
    %v4454 = vpop.f32.mrf.mxu0
    %v4455 = vadd.f32 0.0, %v4454
    %4456 = vdwg.mxu0
    %4457 = vmatpush.msra.mxu0 0.0
    %4458 = vmatpush.msra.mxu0 0.0
    %4459 = vmatpush.msra.mxu0 0.0
    %4460 = vmatpush.msra.mxu0 0.0
    %4461 = vmatpush.msra.mxu0 0.0
    %4462 = vmatpush.msra.mxu0 0.0
    %4463 = vmatpush.msra.mxu0 0.0
    %4464 = vmatpush.msra.mxu0 0.0
    %4465 = vmatpush.msra.mxu0 0.0
    %v4466 = vand.u32 %v4136, 4294901760
    %v4467 = vsub.f32 %v4136, %v4466
    %v4468 = vand.u32 %v4467, 4294901760
    %v4469 = vsub.f32 %v4467, %v4468
    %v4470 = vand.u32 %v4469, 4294901760
    %4471 = vmatpush.msra.mxu0 %v4470
    %v4472 = vand.u32 %v4135, 4294901760
    %v4473 = vsub.f32 %v4135, %v4472
    %v4474 = vand.u32 %v4473, 4294901760
    %v4475 = vsub.f32 %v4473, %v4474
    %v4476 = vand.u32 %v4475, 4294901760
    %4477 = vmatpush.msra.mxu0 %v4476
    %v4478 = vand.u32 %v4134, 4294901760
    %v4479 = vsub.f32 %v4134, %v4478
    %v4480 = vand.u32 %v4479, 4294901760
    %v4481 = vsub.f32 %v4479, %v4480
    %v4482 = vand.u32 %v4481, 4294901760
    %4483 = vmatpush.msra.mxu0 %v4482
    %v4484 = vand.u32 %v4133, 4294901760
    %v4485 = vsub.f32 %v4133, %v4484
    %v4486 = vand.u32 %v4485, 4294901760
    %v4487 = vsub.f32 %v4485, %v4486
    %v4488 = vand.u32 %v4487, 4294901760
    %4489 = vmatpush.msra.mxu0 %v4488
    %v4490 = vand.u32 %v4132, 4294901760
    %v4491 = vsub.f32 %v4132, %v4490
    %v4492 = vand.u32 %v4491, 4294901760
    %v4493 = vsub.f32 %v4491, %v4492
    %v4494 = vand.u32 %v4493, 4294901760
    %4495 = vmatpush.msra.mxu0 %v4494
    %v4496 = vand.u32 %v4131, 4294901760
    %v4497 = vsub.f32 %v4131, %v4496
    %v4498 = vand.u32 %v4497, 4294901760
    %v4499 = vsub.f32 %v4497, %v4498
    %v4500 = vand.u32 %v4499, 4294901760
    %4501 = vmatpush.msra.mxu0 %v4500
    %v4502 = vand.u32 %v4130, 4294901760
    %v4503 = vsub.f32 %v4130, %v4502
    %v4504 = vand.u32 %v4503, 4294901760
    %v4505 = vsub.f32 %v4503, %v4504
    %v4506 = vand.u32 %v4505, 4294901760
    %4507 = vmatpush.msra.mxu0 %v4506
    %v4508 = vand.u32 %v4412, 4294901760
    %4509 = vmatmul.f32.gmra.mxu0 %v4508
    %v4510 = vpop.f32.mrf.mxu0
    %v4511 = vadd.f32 %v4447, %v4510
    %v4512 = vand.u32 %v4415, 4294901760
    %4513 = vmatmul.f32.gmra.mxu0 %v4512
    %v4514 = vpop.f32.mrf.mxu0
    %v4515 = vadd.f32 %v4455, %v4514
    %4516 = vdwg.mxu0
    %4517 = vmatpush.msra.mxu0 0.0
    %4518 = vmatpush.msra.mxu0 0.0
    %4519 = vmatpush.msra.mxu0 0.0
    %4520 = vmatpush.msra.mxu0 0.0
    %4521 = vmatpush.msra.mxu0 0.0
    %4522 = vmatpush.msra.mxu0 0.0
    %4523 = vmatpush.msra.mxu0 0.0
    %4524 = vmatpush.msra.mxu0 0.0
    %4525 = vmatpush.msra.mxu0 0.0
    %v4526 = vand.u32 %v4136, 4294901760
    %v4527 = vsub.f32 %v4136, %v4526
    %4528 = vmatpush.msra.mxu0 %v4527
    %v4529 = vand.u32 %v4135, 4294901760
    %v4530 = vsub.f32 %v4135, %v4529
    %4531 = vmatpush.msra.mxu0 %v4530
    %v4532 = vand.u32 %v4134, 4294901760
    %v4533 = vsub.f32 %v4134, %v4532
    %4534 = vmatpush.msra.mxu0 %v4533
    %v4535 = vand.u32 %v4133, 4294901760
    %v4536 = vsub.f32 %v4133, %v4535
    %4537 = vmatpush.msra.mxu0 %v4536
    %v4538 = vand.u32 %v4132, 4294901760
    %v4539 = vsub.f32 %v4132, %v4538
    %4540 = vmatpush.msra.mxu0 %v4539
    %v4541 = vand.u32 %v4131, 4294901760
    %v4542 = vsub.f32 %v4131, %v4541
    %4543 = vmatpush.msra.mxu0 %v4542
    %v4544 = vand.u32 %v4130, 4294901760
    %v4545 = vsub.f32 %v4130, %v4544
    %4546 = vmatpush.msra.mxu0 %v4545
    %v4547 = vand.u32 %v4412, 4294901760
    %v4548 = vsub.f32 %v4412, %v4547
    %4549 = vmatmul.f32.gmra.mxu0 %v4548
    %v4550 = vpop.f32.mrf.mxu0
    %v4551 = vadd.f32 %v4511, %v4550
    %v4552 = vand.u32 %v4415, 4294901760
    %v4553 = vsub.f32 %v4415, %v4552
    %4554 = vmatmul.f32.gmra.mxu0 %v4553
    %v4555 = vpop.f32.mrf.mxu0
    %v4556 = vadd.f32 %v4515, %v4555
    %4557 = vdwg.mxu0
    %4558 = vmatpush.msra.mxu0 0.0
    %4559 = vmatpush.msra.mxu0 0.0
    %4560 = vmatpush.msra.mxu0 0.0
    %4561 = vmatpush.msra.mxu0 0.0
    %4562 = vmatpush.msra.mxu0 0.0
    %4563 = vmatpush.msra.mxu0 0.0
    %4564 = vmatpush.msra.mxu0 0.0
    %4565 = vmatpush.msra.mxu0 0.0
    %4566 = vmatpush.msra.mxu0 0.0
    %v4567 = vand.u32 %v4136, 4294901760
    %4568 = vmatpush.msra.mxu0 %v4567
    %v4569 = vand.u32 %v4135, 4294901760
    %4570 = vmatpush.msra.mxu0 %v4569
    %v4571 = vand.u32 %v4134, 4294901760
    %4572 = vmatpush.msra.mxu0 %v4571
    %v4573 = vand.u32 %v4133, 4294901760
    %4574 = vmatpush.msra.mxu0 %v4573
    %v4575 = vand.u32 %v4132, 4294901760
    %4576 = vmatpush.msra.mxu0 %v4575
    %v4577 = vand.u32 %v4131, 4294901760
    %4578 = vmatpush.msra.mxu0 %v4577
    %v4579 = vand.u32 %v4130, 4294901760
    %4580 = vmatpush.msra.mxu0 %v4579
    %v4581 = vand.u32 %v4412, 4294901760
    %v4582 = vsub.f32 %v4412, %v4581
    %v4583 = vand.u32 %v4582, 4294901760
    %4584 = vmatmul.f32.gmra.mxu0 %v4583
    %v4585 = vpop.f32.mrf.mxu0
    %v4586 = vadd.f32 %v4551, %v4585
    %v4587 = vand.u32 %v4415, 4294901760
    %v4588 = vsub.f32 %v4415, %v4587
    %v4589 = vand.u32 %v4588, 4294901760
    %4590 = vmatmul.f32.gmra.mxu0 %v4589
    %v4591 = vpop.f32.mrf.mxu0
    %v4592 = vadd.f32 %v4556, %v4591
    %4593 = vdwg.mxu0
    %4594 = vmatpush.msra.mxu0 0.0
    %4595 = vmatpush.msra.mxu0 0.0
    %4596 = vmatpush.msra.mxu0 0.0
    %4597 = vmatpush.msra.mxu0 0.0
    %4598 = vmatpush.msra.mxu0 0.0
    %4599 = vmatpush.msra.mxu0 0.0
    %4600 = vmatpush.msra.mxu0 0.0
    %4601 = vmatpush.msra.mxu0 0.0
    %4602 = vmatpush.msra.mxu0 0.0
    %v4603 = vand.u32 %v4136, 4294901760
    %v4604 = vsub.f32 %v4136, %v4603
    %v4605 = vand.u32 %v4604, 4294901760
    %4606 = vmatpush.msra.mxu0 %v4605
    %v4607 = vand.u32 %v4135, 4294901760
    %v4608 = vsub.f32 %v4135, %v4607
    %v4609 = vand.u32 %v4608, 4294901760
    %4610 = vmatpush.msra.mxu0 %v4609
    %v4611 = vand.u32 %v4134, 4294901760
    %v4612 = vsub.f32 %v4134, %v4611
    %v4613 = vand.u32 %v4612, 4294901760
    %4614 = vmatpush.msra.mxu0 %v4613
    %v4615 = vand.u32 %v4133, 4294901760
    %v4616 = vsub.f32 %v4133, %v4615
    %v4617 = vand.u32 %v4616, 4294901760
    %4618 = vmatpush.msra.mxu0 %v4617
    %v4619 = vand.u32 %v4132, 4294901760
    %v4620 = vsub.f32 %v4132, %v4619
    %v4621 = vand.u32 %v4620, 4294901760
    %4622 = vmatpush.msra.mxu0 %v4621
    %v4623 = vand.u32 %v4131, 4294901760
    %v4624 = vsub.f32 %v4131, %v4623
    %v4625 = vand.u32 %v4624, 4294901760
    %4626 = vmatpush.msra.mxu0 %v4625
    %v4627 = vand.u32 %v4130, 4294901760
    %v4628 = vsub.f32 %v4130, %v4627
    %v4629 = vand.u32 %v4628, 4294901760
    %4630 = vmatpush.msra.mxu0 %v4629
    %v4631 = vand.u32 %v4412, 4294901760
    %4632 = vmatmul.f32.gmra.mxu0 %v4631
    %v4633 = vpop.f32.mrf.mxu0
    %v4634 = vadd.f32 %v4586, %v4633
    %v4635 = vand.u32 %v4415, 4294901760
    %4636 = vmatmul.f32.gmra.mxu0 %v4635
    %v4637 = vpop.f32.mrf.mxu0
    %v4638 = vadd.f32 %v4592, %v4637
    %4639 = vdwg.mxu0
    %4640 = vmatpush.msra.mxu0 0.0
    %4641 = vmatpush.msra.mxu0 0.0
    %4642 = vmatpush.msra.mxu0 0.0
    %4643 = vmatpush.msra.mxu0 0.0
    %4644 = vmatpush.msra.mxu0 0.0
    %4645 = vmatpush.msra.mxu0 0.0
    %4646 = vmatpush.msra.mxu0 0.0
    %4647 = vmatpush.msra.mxu0 0.0
    %4648 = vmatpush.msra.mxu0 0.0
    %v4649 = vand.u32 %v4136, 4294901760
    %4650 = vmatpush.msra.mxu0 %v4649
    %v4651 = vand.u32 %v4135, 4294901760
    %4652 = vmatpush.msra.mxu0 %v4651
    %v4653 = vand.u32 %v4134, 4294901760
    %4654 = vmatpush.msra.mxu0 %v4653
    %v4655 = vand.u32 %v4133, 4294901760
    %4656 = vmatpush.msra.mxu0 %v4655
    %v4657 = vand.u32 %v4132, 4294901760
    %4658 = vmatpush.msra.mxu0 %v4657
    %v4659 = vand.u32 %v4131, 4294901760
    %4660 = vmatpush.msra.mxu0 %v4659
    %v4661 = vand.u32 %v4130, 4294901760
    %4662 = vmatpush.msra.mxu0 %v4661
    %v4663 = vand.u32 %v4412, 4294901760
    %4664 = vmatmul.f32.gmra.mxu0 %v4663
    %v4665 = vpop.f32.mrf.mxu0
    %v4666 = vadd.f32 %v4634, %v4665
    %v4667 = vand.u32 %v4415, 4294901760
    %4668 = vmatmul.f32.gmra.mxu0 %v4667
    %v4669 = vpop.f32.mrf.mxu0
    %v4670 = vadd.f32 %v4638, %v4669
    %4671 = vdwg.mxu0
    %v4672 = vmul.f32 %v4666, 0.5
    %v4673 = vmul.f32 %v4670, 0.5
    %v4674 = vmul.f32 %v4666, 0.70710677
    %v4675 = vmul.f32 %v4670, 0.70710677
    %v4676 = vmul.f32 %v4674, %v4674
    %v4677 = vmin.f32 16.0, %v4676
    %v4678 = vmul.f32 %v4677, 2.1237322e-06
    %v4679 = vadd.f32 %v4678, 0.00028619796
    %v4680 = vmul.f32 %v4677, %v4679
    %v4681 = vadd.f32 %v4680, 0.0036580483
    %v4682 = vmul.f32 %v4677, %v4681
    %v4683 = vadd.f32 %v4682, 0.05243302
    %v4684 = vmul.f32 %v4677, %v4683
    %v4685 = vadd.f32 %v4684, 0.18741608
    %v4686 = vmul.f32 %v4677, %v4685
    %v4687 = vadd.f32 %v4686, 1.1283791
    %v4688 = vmul.f32 %v4674, %v4687
    %v4689 = vmul.f32 %v4677, 3.8918573e-05
    %v4690 = vadd.f32 %v4689, 0.001143296
    %v4691 = vmul.f32 %v4677, %v4690
    %v4692 = vadd.f32 %v4691, 0.014752088
    %v4693 = vmul.f32 %v4677, %v4692
    %v4694 = vadd.f32 %v4693, 0.112945676
    %v4695 = vmul.f32 %v4677, %v4694
    %v4696 = vadd.f32 %v4695, 0.4994258
    %v4697 = vmul.f32 %v4677, %v4696
    %v4698 = vadd.f32 %v4697, 1.0
    %v4699 = vrcp.pop %v4698
    %v4700 = vmul.f32 %v4698, %v4699
    %v4701 = vsub.f32 1.0, %v4700
    %v4702 = vmul.f32 %v4699, %v4701
    %v4703 = vadd.f32 %v4699, %v4702
    %vm4704 = vweird.f32 %v4698
    %vm4705 = vweird.f32 %v4699
    %vm4706 = vmor %vm4704, %vm4705
    %v4707 = vsel %vm4706, %v4699, %v4703
    %v4708 = vand.u32 2147483647, %v4698
    %vm4709 = vcmp.eq.f32.partialorder %v4708, 8.507059e+37
    %v4710 = vand.u32 %v4698, 2147483648
    %v4711 = vor.u32 1.1754944e-38, %v4710
    %v4712 = vsel %vm4709, %v4711, %v4707
    %v4713 = vmul.f32 %v4688, %v4712
    %v4714 = vmin.f32 %v4713, 1.0
    %v4715 = vmax.f32 %v4714, -1.0
    %v4716 = vmul.f32 %v4675, %v4675
    %v4717 = vmin.f32 16.0, %v4716
    %v4718 = vmul.f32 %v4717, 2.1237322e-06
    %v4719 = vadd.f32 %v4718, 0.00028619796
    %v4720 = vmul.f32 %v4717, %v4719
    %v4721 = vadd.f32 %v4720, 0.0036580483
    %v4722 = vmul.f32 %v4717, %v4721
    %v4723 = vadd.f32 %v4722, 0.05243302
    %v4724 = vmul.f32 %v4717, %v4723
    %v4725 = vadd.f32 %v4724, 0.18741608
    %v4726 = vmul.f32 %v4717, %v4725
    %v4727 = vadd.f32 %v4726, 1.1283791
    %v4728 = vmul.f32 %v4675, %v4727
    %v4729 = vmul.f32 %v4717, 3.8918573e-05
    %v4730 = vadd.f32 %v4729, 0.001143296
    %v4731 = vmul.f32 %v4717, %v4730
    %v4732 = vadd.f32 %v4731, 0.014752088
    %v4733 = vmul.f32 %v4717, %v4732
    %v4734 = vadd.f32 %v4733, 0.112945676
    %v4735 = vmul.f32 %v4717, %v4734
    %v4736 = vadd.f32 %v4735, 0.4994258
    %v4737 = vmul.f32 %v4717, %v4736
    %v4738 = vadd.f32 %v4737, 1.0
    %v4739 = vrcp.pop %v4738
    %v4740 = vmul.f32 %v4738, %v4739
    %v4741 = vsub.f32 1.0, %v4740
    %v4742 = vmul.f32 %v4739, %v4741
    %v4743 = vadd.f32 %v4739, %v4742
    %vm4744 = vweird.f32 %v4738
    %vm4745 = vweird.f32 %v4739
    %vm4746 = vmor %vm4744, %vm4745
    %v4747 = vsel %vm4746, %v4739, %v4743
    %v4748 = vand.u32 2147483647, %v4738
    %vm4749 = vcmp.eq.f32.partialorder %v4748, 8.507059e+37
    %v4750 = vand.u32 %v4738, 2147483648
    %v4751 = vor.u32 1.1754944e-38, %v4750
    %v4752 = vsel %vm4749, %v4751, %v4747
    %v4753 = vmul.f32 %v4728, %v4752
    %v4754 = vmin.f32 %v4753, 1.0
    %v4755 = vmax.f32 %v4754, -1.0
    %v4756 = vadd.f32 %v4715, 1.0
    %v4757 = vadd.f32 %v4755, 1.0
    %v4758 = vmul.f32 %v4672, %v4756
    %v4759 = vmul.f32 %v4673, %v4757
    %v4760 = vld [vmem:[%s10] sm:$0x1]
    %v4761 = vld [vmem:[%s9] sm:$0xff]
    %v4762 = vld [vmem:[%s9 + $0x8] sm:$0xff]
    %v4763 = vld [vmem:[%s9 + $0x10] sm:$0xff]
    %v4764 = vld [vmem:[%s9 + $0x18] sm:$0xff]
    %s4765 = scalar_lea.vmem %s9, 32
    %v4766 = vld [vmem:[%s4765] sm:$0xff]
    %v4767 = vld [vmem:[%s4765 + $0x8] sm:$0xff]
    %v4768 = vld [vmem:[%s4765 + $0x10] sm:$0xff]
    %v4769 = vld [vmem:[%s4765 + $0x18] sm:$0xff]
    %v4772 = vrot.slane %v4758, 1
    %v4773 = vrot.slane %v4759, 1
    %v4774 = vsel %vm100, %v4772, %v4773
    %vm4775 = vcmask 261120
    %v4776 = vsel %vm4775, %v4774, 0
    %v4778 = vsel %vm4775, %v4773, 0
    %4780 = vmatpush.msra.mxu0 0.0
    %4781 = vmatpush.msra.mxu0 0.0
    %4782 = vmatpush.msra.mxu0 0.0
    %4783 = vmatpush.msra.mxu0 0.0
    %4784 = vmatpush.msra.mxu0 0.0
    %4785 = vmatpush.msra.mxu0 0.0
    %4786 = vmatpush.msra.mxu0 0.0
    %4787 = vmatpush.msra.mxu0 0.0
    %4788 = vmatpush.msra.mxu0 0.0
    %4789 = vmatpush.msra.mxu0 0.0
    %4790 = vmatpush.msra.mxu0 0.0
    %4791 = vmatpush.msra.mxu0 0.0
    %v4792 = vand.u32 %v4769, 4294901760
    %4793 = vmatpush.msra.mxu0 %v4792
    %v4794 = vand.u32 %v4768, 4294901760
    %4795 = vmatpush.msra.mxu0 %v4794
    %v4796 = vand.u32 %v4767, 4294901760
    %4797 = vmatpush.msra.mxu0 %v4796
    %v4798 = vand.u32 %v4766, 4294901760
    %4799 = vmatpush.msra.mxu0 %v4798
    %v4800 = vand.u32 %v4776, 4294901760
    %v4801 = vsub.f32 %v4776, %v4800
    %v4802 = vand.u32 %v4801, 4294901760
    %v4803 = vsub.f32 %v4801, %v4802
    %v4804 = vand.u32 %v4803, 4294901760
    %4805 = vmatmul.f32.gmra.mxu0 %v4804
    %v4806 = vpop.f32.mrf.mxu0
    %v4807 = vadd.f32 0.0, %v4806
    %v4808 = vand.u32 %v4778, 4294901760
    %v4809 = vsub.f32 %v4778, %v4808
    %v4810 = vand.u32 %v4809, 4294901760
    %v4811 = vsub.f32 %v4809, %v4810
    %v4812 = vand.u32 %v4811, 4294901760
    %4813 = vmatmul.f32.gmra.mxu0 %v4812
    %v4814 = vpop.f32.mrf.mxu0
    %v4815 = vadd.f32 0.0, %v4814
    %4816 = vdwg.mxu0
    %4817 = vmatpush.msra.mxu0 0.0
    %4818 = vmatpush.msra.mxu0 0.0
    %4819 = vmatpush.msra.mxu0 0.0
    %4820 = vmatpush.msra.mxu0 0.0
    %4821 = vmatpush.msra.mxu0 0.0
    %4822 = vmatpush.msra.mxu0 0.0
    %4823 = vmatpush.msra.mxu0 0.0
    %4824 = vmatpush.msra.mxu0 0.0
    %4825 = vmatpush.msra.mxu0 0.0
    %4826 = vmatpush.msra.mxu0 0.0
    %4827 = vmatpush.msra.mxu0 0.0
    %4828 = vmatpush.msra.mxu0 0.0
    %v4829 = vand.u32 %v4769, 4294901760
    %v4830 = vsub.f32 %v4769, %v4829
    %v4831 = vand.u32 %v4830, 4294901760
    %v4832 = vsub.f32 %v4830, %v4831
    %v4833 = vand.u32 %v4832, 4294901760
    %4834 = vmatpush.msra.mxu0 %v4833
    %v4835 = vand.u32 %v4768, 4294901760
    %v4836 = vsub.f32 %v4768, %v4835
    %v4837 = vand.u32 %v4836, 4294901760
    %v4838 = vsub.f32 %v4836, %v4837
    %v4839 = vand.u32 %v4838, 4294901760
    %4840 = vmatpush.msra.mxu0 %v4839
    %v4841 = vand.u32 %v4767, 4294901760
    %v4842 = vsub.f32 %v4767, %v4841
    %v4843 = vand.u32 %v4842, 4294901760
    %v4844 = vsub.f32 %v4842, %v4843
    %v4845 = vand.u32 %v4844, 4294901760
    %4846 = vmatpush.msra.mxu0 %v4845
    %v4847 = vand.u32 %v4766, 4294901760
    %v4848 = vsub.f32 %v4766, %v4847
    %v4849 = vand.u32 %v4848, 4294901760
    %v4850 = vsub.f32 %v4848, %v4849
    %v4851 = vand.u32 %v4850, 4294901760
    %4852 = vmatpush.msra.mxu0 %v4851
    %v4853 = vand.u32 %v4776, 4294901760
    %4854 = vmatmul.f32.gmra.mxu0 %v4853
    %v4855 = vpop.f32.mrf.mxu0
    %v4856 = vadd.f32 %v4807, %v4855
    %v4857 = vand.u32 %v4778, 4294901760
    %4858 = vmatmul.f32.gmra.mxu0 %v4857
    %v4859 = vpop.f32.mrf.mxu0
    %v4860 = vadd.f32 %v4815, %v4859
    %4861 = vdwg.mxu0
    %4862 = vmatpush.msra.mxu0 0.0
    %4863 = vmatpush.msra.mxu0 0.0
    %4864 = vmatpush.msra.mxu0 0.0
    %4865 = vmatpush.msra.mxu0 0.0
    %4866 = vmatpush.msra.mxu0 0.0
    %4867 = vmatpush.msra.mxu0 0.0
    %4868 = vmatpush.msra.mxu0 0.0
    %4869 = vmatpush.msra.mxu0 0.0
    %4870 = vmatpush.msra.mxu0 0.0
    %4871 = vmatpush.msra.mxu0 0.0
    %4872 = vmatpush.msra.mxu0 0.0
    %4873 = vmatpush.msra.mxu0 0.0
    %v4874 = vand.u32 %v4769, 4294901760
    %v4875 = vsub.f32 %v4769, %v4874
    %4876 = vmatpush.msra.mxu0 %v4875
    %v4877 = vand.u32 %v4768, 4294901760
    %v4878 = vsub.f32 %v4768, %v4877
    %4879 = vmatpush.msra.mxu0 %v4878
    %v4880 = vand.u32 %v4767, 4294901760
    %v4881 = vsub.f32 %v4767, %v4880
    %4882 = vmatpush.msra.mxu0 %v4881
    %v4883 = vand.u32 %v4766, 4294901760
    %v4884 = vsub.f32 %v4766, %v4883
    %4885 = vmatpush.msra.mxu0 %v4884
    %v4886 = vand.u32 %v4776, 4294901760
    %v4887 = vsub.f32 %v4776, %v4886
    %4888 = vmatmul.f32.gmra.mxu0 %v4887
    %v4889 = vpop.f32.mrf.mxu0
    %v4890 = vadd.f32 %v4856, %v4889
    %v4891 = vand.u32 %v4778, 4294901760
    %v4892 = vsub.f32 %v4778, %v4891
    %4893 = vmatmul.f32.gmra.mxu0 %v4892
    %v4894 = vpop.f32.mrf.mxu0
    %v4895 = vadd.f32 %v4860, %v4894
    %4896 = vdwg.mxu0
    %4897 = vmatpush.msra.mxu0 0.0
    %4898 = vmatpush.msra.mxu0 0.0
    %4899 = vmatpush.msra.mxu0 0.0
    %4900 = vmatpush.msra.mxu0 0.0
    %4901 = vmatpush.msra.mxu0 0.0
    %4902 = vmatpush.msra.mxu0 0.0
    %4903 = vmatpush.msra.mxu0 0.0
    %4904 = vmatpush.msra.mxu0 0.0
    %4905 = vmatpush.msra.mxu0 0.0
    %4906 = vmatpush.msra.mxu0 0.0
    %4907 = vmatpush.msra.mxu0 0.0
    %4908 = vmatpush.msra.mxu0 0.0
    %v4909 = vand.u32 %v4769, 4294901760
    %4910 = vmatpush.msra.mxu0 %v4909
    %v4911 = vand.u32 %v4768, 4294901760
    %4912 = vmatpush.msra.mxu0 %v4911
    %v4913 = vand.u32 %v4767, 4294901760
    %4914 = vmatpush.msra.mxu0 %v4913
    %v4915 = vand.u32 %v4766, 4294901760
    %4916 = vmatpush.msra.mxu0 %v4915
    %v4917 = vand.u32 %v4776, 4294901760
    %v4918 = vsub.f32 %v4776, %v4917
    %v4919 = vand.u32 %v4918, 4294901760
    %4920 = vmatmul.f32.gmra.mxu0 %v4919
    %v4921 = vpop.f32.mrf.mxu0
    %v4922 = vadd.f32 %v4890, %v4921
    %v4923 = vand.u32 %v4778, 4294901760
    %v4924 = vsub.f32 %v4778, %v4923
    %v4925 = vand.u32 %v4924, 4294901760
    %4926 = vmatmul.f32.gmra.mxu0 %v4925
    %v4927 = vpop.f32.mrf.mxu0
    %v4928 = vadd.f32 %v4895, %v4927
    %4929 = vdwg.mxu0
    %4930 = vmatpush.msra.mxu0 0.0
    %4931 = vmatpush.msra.mxu0 0.0
    %4932 = vmatpush.msra.mxu0 0.0
    %4933 = vmatpush.msra.mxu0 0.0
    %4934 = vmatpush.msra.mxu0 0.0
    %4935 = vmatpush.msra.mxu0 0.0
    %4936 = vmatpush.msra.mxu0 0.0
    %4937 = vmatpush.msra.mxu0 0.0
    %4938 = vmatpush.msra.mxu0 0.0
    %4939 = vmatpush.msra.mxu0 0.0
    %4940 = vmatpush.msra.mxu0 0.0
    %4941 = vmatpush.msra.mxu0 0.0
    %v4942 = vand.u32 %v4769, 4294901760
    %v4943 = vsub.f32 %v4769, %v4942
    %v4944 = vand.u32 %v4943, 4294901760
    %4945 = vmatpush.msra.mxu0 %v4944
    %v4946 = vand.u32 %v4768, 4294901760
    %v4947 = vsub.f32 %v4768, %v4946
    %v4948 = vand.u32 %v4947, 4294901760
    %4949 = vmatpush.msra.mxu0 %v4948
    %v4950 = vand.u32 %v4767, 4294901760
    %v4951 = vsub.f32 %v4767, %v4950
    %v4952 = vand.u32 %v4951, 4294901760
    %4953 = vmatpush.msra.mxu0 %v4952
    %v4954 = vand.u32 %v4766, 4294901760
    %v4955 = vsub.f32 %v4766, %v4954
    %v4956 = vand.u32 %v4955, 4294901760
    %4957 = vmatpush.msra.mxu0 %v4956
    %v4958 = vand.u32 %v4776, 4294901760
    %4959 = vmatmul.f32.gmra.mxu0 %v4958
    %v4960 = vpop.f32.mrf.mxu0
    %v4961 = vadd.f32 %v4922, %v4960
    %v4962 = vand.u32 %v4778, 4294901760
    %4963 = vmatmul.f32.gmra.mxu0 %v4962
    %v4964 = vpop.f32.mrf.mxu0
    %v4965 = vadd.f32 %v4928, %v4964
    %4966 = vdwg.mxu0
    %4967 = vmatpush.msra.mxu0 0.0
    %4968 = vmatpush.msra.mxu0 0.0
    %4969 = vmatpush.msra.mxu0 0.0
    %4970 = vmatpush.msra.mxu0 0.0
    %4971 = vmatpush.msra.mxu0 0.0
    %4972 = vmatpush.msra.mxu0 0.0
    %4973 = vmatpush.msra.mxu0 0.0
    %4974 = vmatpush.msra.mxu0 0.0
    %4975 = vmatpush.msra.mxu0 0.0
    %4976 = vmatpush.msra.mxu0 0.0
    %4977 = vmatpush.msra.mxu0 0.0
    %4978 = vmatpush.msra.mxu0 0.0
    %v4979 = vand.u32 %v4769, 4294901760
    %4980 = vmatpush.msra.mxu0 %v4979
    %v4981 = vand.u32 %v4768, 4294901760
    %4982 = vmatpush.msra.mxu0 %v4981
    %v4983 = vand.u32 %v4767, 4294901760
    %4984 = vmatpush.msra.mxu0 %v4983
    %v4985 = vand.u32 %v4766, 4294901760
    %4986 = vmatpush.msra.mxu0 %v4985
    %v4987 = vand.u32 %v4776, 4294901760
    %4988 = vmatmul.f32.gmra.mxu0 %v4987
    %v4989 = vpop.f32.mrf.mxu0
    %v4990 = vadd.f32 %v4961, %v4989
    %v4991 = vand.u32 %v4778, 4294901760
    %4992 = vmatmul.f32.gmra.mxu0 %v4991
    %v4993 = vpop.f32.mrf.mxu0
    %v4994 = vadd.f32 %v4965, %v4993
    %4995 = vdwg.mxu0
    %v4996 = vsel %vm4775, %v4758, 0
    %v4998 = vsel %vm4775, %v4759, 0
    %5000 = vmatpush.msra.mxu0 0.0
    %5001 = vmatpush.msra.mxu0 0.0
    %5002 = vmatpush.msra.mxu0 0.0
    %5003 = vmatpush.msra.mxu0 0.0
    %5004 = vmatpush.msra.mxu0 0.0
    %5005 = vmatpush.msra.mxu0 0.0
    %5006 = vmatpush.msra.mxu0 0.0
    %5007 = vmatpush.msra.mxu0 0.0
    %5008 = vmatpush.msra.mxu0 0.0
    %5009 = vmatpush.msra.mxu0 0.0
    %5010 = vmatpush.msra.mxu0 0.0
    %5011 = vmatpush.msra.mxu0 0.0
    %v5012 = vand.u32 %v4764, 4294901760
    %5013 = vmatpush.msra.mxu0 %v5012
    %v5014 = vand.u32 %v4763, 4294901760
    %5015 = vmatpush.msra.mxu0 %v5014
    %v5016 = vand.u32 %v4762, 4294901760
    %5017 = vmatpush.msra.mxu0 %v5016
    %v5018 = vand.u32 %v4761, 4294901760
    %5019 = vmatpush.msra.mxu0 %v5018
    %v5020 = vand.u32 %v4996, 4294901760
    %v5021 = vsub.f32 %v4996, %v5020
    %v5022 = vand.u32 %v5021, 4294901760
    %v5023 = vsub.f32 %v5021, %v5022
    %v5024 = vand.u32 %v5023, 4294901760
    %5025 = vmatmul.f32.gmra.mxu0 %v5024
    %v5026 = vpop.f32.mrf.mxu0
    %v5027 = vadd.f32 %v4990, %v5026
    %v5028 = vand.u32 %v4998, 4294901760
    %v5029 = vsub.f32 %v4998, %v5028
    %v5030 = vand.u32 %v5029, 4294901760
    %v5031 = vsub.f32 %v5029, %v5030
    %v5032 = vand.u32 %v5031, 4294901760
    %5033 = vmatmul.f32.gmra.mxu0 %v5032
    %v5034 = vpop.f32.mrf.mxu0
    %v5035 = vadd.f32 %v4994, %v5034
    %5036 = vdwg.mxu0
    %5037 = vmatpush.msra.mxu0 0.0
    %5038 = vmatpush.msra.mxu0 0.0
    %5039 = vmatpush.msra.mxu0 0.0
    %5040 = vmatpush.msra.mxu0 0.0
    %5041 = vmatpush.msra.mxu0 0.0
    %5042 = vmatpush.msra.mxu0 0.0
    %5043 = vmatpush.msra.mxu0 0.0
    %5044 = vmatpush.msra.mxu0 0.0
    %5045 = vmatpush.msra.mxu0 0.0
    %5046 = vmatpush.msra.mxu0 0.0
    %5047 = vmatpush.msra.mxu0 0.0
    %5048 = vmatpush.msra.mxu0 0.0
    %v5049 = vand.u32 %v4764, 4294901760
    %v5050 = vsub.f32 %v4764, %v5049
    %v5051 = vand.u32 %v5050, 4294901760
    %v5052 = vsub.f32 %v5050, %v5051
    %v5053 = vand.u32 %v5052, 4294901760
    %5054 = vmatpush.msra.mxu0 %v5053
    %v5055 = vand.u32 %v4763, 4294901760
    %v5056 = vsub.f32 %v4763, %v5055
    %v5057 = vand.u32 %v5056, 4294901760
    %v5058 = vsub.f32 %v5056, %v5057
    %v5059 = vand.u32 %v5058, 4294901760
    %5060 = vmatpush.msra.mxu0 %v5059
    %v5061 = vand.u32 %v4762, 4294901760
    %v5062 = vsub.f32 %v4762, %v5061
    %v5063 = vand.u32 %v5062, 4294901760
    %v5064 = vsub.f32 %v5062, %v5063
    %v5065 = vand.u32 %v5064, 4294901760
    %5066 = vmatpush.msra.mxu0 %v5065
    %v5067 = vand.u32 %v4761, 4294901760
    %v5068 = vsub.f32 %v4761, %v5067
    %v5069 = vand.u32 %v5068, 4294901760
    %v5070 = vsub.f32 %v5068, %v5069
    %v5071 = vand.u32 %v5070, 4294901760
    %5072 = vmatpush.msra.mxu0 %v5071
    %v5073 = vand.u32 %v4996, 4294901760
    %5074 = vmatmul.f32.gmra.mxu0 %v5073
    %v5075 = vpop.f32.mrf.mxu0
    %v5076 = vadd.f32 %v5027, %v5075
    %v5077 = vand.u32 %v4998, 4294901760
    %5078 = vmatmul.f32.gmra.mxu0 %v5077
    %v5079 = vpop.f32.mrf.mxu0
    %v5080 = vadd.f32 %v5035, %v5079
    %5081 = vdwg.mxu0
    %5082 = vmatpush.msra.mxu0 0.0
    %5083 = vmatpush.msra.mxu0 0.0
    %5084 = vmatpush.msra.mxu0 0.0
    %5085 = vmatpush.msra.mxu0 0.0
    %5086 = vmatpush.msra.mxu0 0.0
    %5087 = vmatpush.msra.mxu0 0.0
    %5088 = vmatpush.msra.mxu0 0.0
    %5089 = vmatpush.msra.mxu0 0.0
    %5090 = vmatpush.msra.mxu0 0.0
    %5091 = vmatpush.msra.mxu0 0.0
    %5092 = vmatpush.msra.mxu0 0.0
    %5093 = vmatpush.msra.mxu0 0.0
    %v5094 = vand.u32 %v4764, 4294901760
    %v5095 = vsub.f32 %v4764, %v5094
    %5096 = vmatpush.msra.mxu0 %v5095
    %v5097 = vand.u32 %v4763, 4294901760
    %v5098 = vsub.f32 %v4763, %v5097
    %5099 = vmatpush.msra.mxu0 %v5098
    %v5100 = vand.u32 %v4762, 4294901760
    %v5101 = vsub.f32 %v4762, %v5100
    %5102 = vmatpush.msra.mxu0 %v5101
    %v5103 = vand.u32 %v4761, 4294901760
    %v5104 = vsub.f32 %v4761, %v5103
    %5105 = vmatpush.msra.mxu0 %v5104
    %v5106 = vand.u32 %v4996, 4294901760
    %v5107 = vsub.f32 %v4996, %v5106
    %5108 = vmatmul.f32.gmra.mxu0 %v5107
    %v5109 = vpop.f32.mrf.mxu0
    %v5110 = vadd.f32 %v5076, %v5109
    %v5111 = vand.u32 %v4998, 4294901760
    %v5112 = vsub.f32 %v4998, %v5111
    %5113 = vmatmul.f32.gmra.mxu0 %v5112
    %v5114 = vpop.f32.mrf.mxu0
    %v5115 = vadd.f32 %v5080, %v5114
    %5116 = vdwg.mxu0
    %5117 = vmatpush.msra.mxu0 0.0
    %5118 = vmatpush.msra.mxu0 0.0
    %5119 = vmatpush.msra.mxu0 0.0
    %5120 = vmatpush.msra.mxu0 0.0
    %5121 = vmatpush.msra.mxu0 0.0
    %5122 = vmatpush.msra.mxu0 0.0
    %5123 = vmatpush.msra.mxu0 0.0
    %5124 = vmatpush.msra.mxu0 0.0
    %5125 = vmatpush.msra.mxu0 0.0
    %5126 = vmatpush.msra.mxu0 0.0
    %5127 = vmatpush.msra.mxu0 0.0
    %5128 = vmatpush.msra.mxu0 0.0
    %v5129 = vand.u32 %v4764, 4294901760
    %5130 = vmatpush.msra.mxu0 %v5129
    %v5131 = vand.u32 %v4763, 4294901760
    %5132 = vmatpush.msra.mxu0 %v5131
    %v5133 = vand.u32 %v4762, 4294901760
    %5134 = vmatpush.msra.mxu0 %v5133
    %v5135 = vand.u32 %v4761, 4294901760
    %5136 = vmatpush.msra.mxu0 %v5135
    %v5137 = vand.u32 %v4996, 4294901760
    %v5138 = vsub.f32 %v4996, %v5137
    %v5139 = vand.u32 %v5138, 4294901760
    %5140 = vmatmul.f32.gmra.mxu0 %v5139
    %v5141 = vpop.f32.mrf.mxu0
    %v5142 = vadd.f32 %v5110, %v5141
    %v5143 = vand.u32 %v4998, 4294901760
    %v5144 = vsub.f32 %v4998, %v5143
    %v5145 = vand.u32 %v5144, 4294901760
    %5146 = vmatmul.f32.gmra.mxu0 %v5145
    %v5147 = vpop.f32.mrf.mxu0
    %v5148 = vadd.f32 %v5115, %v5147
    %5149 = vdwg.mxu0
    %5150 = vmatpush.msra.mxu0 0.0
    %5151 = vmatpush.msra.mxu0 0.0
    %5152 = vmatpush.msra.mxu0 0.0
    %5153 = vmatpush.msra.mxu0 0.0
    %5154 = vmatpush.msra.mxu0 0.0
    %5155 = vmatpush.msra.mxu0 0.0
    %5156 = vmatpush.msra.mxu0 0.0
    %5157 = vmatpush.msra.mxu0 0.0
    %5158 = vmatpush.msra.mxu0 0.0
    %5159 = vmatpush.msra.mxu0 0.0
    %5160 = vmatpush.msra.mxu0 0.0
    %5161 = vmatpush.msra.mxu0 0.0
    %v5162 = vand.u32 %v4764, 4294901760
    %v5163 = vsub.f32 %v4764, %v5162
    %v5164 = vand.u32 %v5163, 4294901760
    %5165 = vmatpush.msra.mxu0 %v5164
    %v5166 = vand.u32 %v4763, 4294901760
    %v5167 = vsub.f32 %v4763, %v5166
    %v5168 = vand.u32 %v5167, 4294901760
    %5169 = vmatpush.msra.mxu0 %v5168
    %v5170 = vand.u32 %v4762, 4294901760
    %v5171 = vsub.f32 %v4762, %v5170
    %v5172 = vand.u32 %v5171, 4294901760
    %5173 = vmatpush.msra.mxu0 %v5172
    %v5174 = vand.u32 %v4761, 4294901760
    %v5175 = vsub.f32 %v4761, %v5174
    %v5176 = vand.u32 %v5175, 4294901760
    %5177 = vmatpush.msra.mxu0 %v5176
    %v5178 = vand.u32 %v4996, 4294901760
    %5179 = vmatmul.f32.gmra.mxu0 %v5178
    %v5180 = vpop.f32.mrf.mxu0
    %v5181 = vadd.f32 %v5142, %v5180
    %v5182 = vand.u32 %v4998, 4294901760
    %5183 = vmatmul.f32.gmra.mxu0 %v5182
    %v5184 = vpop.f32.mrf.mxu0
    %v5185 = vadd.f32 %v5148, %v5184
    %5186 = vdwg.mxu0
    %5187 = vmatpush.msra.mxu0 0.0
    %5188 = vmatpush.msra.mxu0 0.0
    %5189 = vmatpush.msra.mxu0 0.0
    %5190 = vmatpush.msra.mxu0 0.0
    %5191 = vmatpush.msra.mxu0 0.0
    %5192 = vmatpush.msra.mxu0 0.0
    %5193 = vmatpush.msra.mxu0 0.0
    %5194 = vmatpush.msra.mxu0 0.0
    %5195 = vmatpush.msra.mxu0 0.0
    %5196 = vmatpush.msra.mxu0 0.0
    %5197 = vmatpush.msra.mxu0 0.0
    %5198 = vmatpush.msra.mxu0 0.0
    %v5199 = vand.u32 %v4764, 4294901760
    %5200 = vmatpush.msra.mxu0 %v5199
    %v5201 = vand.u32 %v4763, 4294901760
    %5202 = vmatpush.msra.mxu0 %v5201
    %v5203 = vand.u32 %v4762, 4294901760
    %5204 = vmatpush.msra.mxu0 %v5203
    %v5205 = vand.u32 %v4761, 4294901760
    %5206 = vmatpush.msra.mxu0 %v5205
    %v5207 = vand.u32 %v4996, 4294901760
    %5208 = vmatmul.f32.gmra.mxu0 %v5207
    %v5209 = vpop.f32.mrf.mxu0
    %v5210 = vadd.f32 %v5181, %v5209
    %v5211 = vand.u32 %v4998, 4294901760
    %5212 = vmatmul.f32.gmra.mxu0 %v5211
    %v5213 = vpop.f32.mrf.mxu0
    %v5214 = vadd.f32 %v5185, %v5213
    %5215 = vdwg.mxu0
    %s5216 = scalar_lea.vmem %s9, 64
    %v5217 = vld [vmem:[%s5216] sm:$0xff]
    %v5218 = vld [vmem:[%s5216 + $0x8] sm:$0xff]
    %v5219 = vld [vmem:[%s5216 + $0x10] sm:$0xff]
    %v5220 = vld [vmem:[%s5216 + $0x18] sm:$0xff]
    %v5221 = vrot.slane %v4758, 2
    %v5222 = vrot.slane %v4759, 2
    %v5223 = vsel %vm1304, %v5221, %v5222
    %v5224 = vsel %vm4775, %v5223, 0
    %v5226 = vsel %vm4775, %v5222, 0
    %5228 = vmatpush.msra.mxu0 0.0
    %5229 = vmatpush.msra.mxu0 0.0
    %5230 = vmatpush.msra.mxu0 0.0
    %5231 = vmatpush.msra.mxu0 0.0
    %5232 = vmatpush.msra.mxu0 0.0
    %5233 = vmatpush.msra.mxu0 0.0
    %5234 = vmatpush.msra.mxu0 0.0
    %5235 = vmatpush.msra.mxu0 0.0
    %5236 = vmatpush.msra.mxu0 0.0
    %5237 = vmatpush.msra.mxu0 0.0
    %5238 = vmatpush.msra.mxu0 0.0
    %5239 = vmatpush.msra.mxu0 0.0
    %v5240 = vand.u32 %v5220, 4294901760
    %5241 = vmatpush.msra.mxu0 %v5240
    %v5242 = vand.u32 %v5219, 4294901760
    %5243 = vmatpush.msra.mxu0 %v5242
    %v5244 = vand.u32 %v5218, 4294901760
    %5245 = vmatpush.msra.mxu0 %v5244
    %v5246 = vand.u32 %v5217, 4294901760
    %5247 = vmatpush.msra.mxu0 %v5246
    %v5248 = vand.u32 %v5224, 4294901760
    %v5249 = vsub.f32 %v5224, %v5248
    %v5250 = vand.u32 %v5249, 4294901760
    %v5251 = vsub.f32 %v5249, %v5250
    %v5252 = vand.u32 %v5251, 4294901760
    %5253 = vmatmul.f32.gmra.mxu0 %v5252
    %v5254 = vpop.f32.mrf.mxu0
    %v5255 = vadd.f32 0.0, %v5254
    %v5256 = vand.u32 %v5226, 4294901760
    %v5257 = vsub.f32 %v5226, %v5256
    %v5258 = vand.u32 %v5257, 4294901760
    %v5259 = vsub.f32 %v5257, %v5258
    %v5260 = vand.u32 %v5259, 4294901760
    %5261 = vmatmul.f32.gmra.mxu0 %v5260
    %v5262 = vpop.f32.mrf.mxu0
    %v5263 = vadd.f32 0.0, %v5262
    %5264 = vdwg.mxu0
    %5265 = vmatpush.msra.mxu0 0.0
    %5266 = vmatpush.msra.mxu0 0.0
    %5267 = vmatpush.msra.mxu0 0.0
    %5268 = vmatpush.msra.mxu0 0.0
    %5269 = vmatpush.msra.mxu0 0.0
    %5270 = vmatpush.msra.mxu0 0.0
    %5271 = vmatpush.msra.mxu0 0.0
    %5272 = vmatpush.msra.mxu0 0.0
    %5273 = vmatpush.msra.mxu0 0.0
    %5274 = vmatpush.msra.mxu0 0.0
    %5275 = vmatpush.msra.mxu0 0.0
    %5276 = vmatpush.msra.mxu0 0.0
    %v5277 = vand.u32 %v5220, 4294901760
    %v5278 = vsub.f32 %v5220, %v5277
    %v5279 = vand.u32 %v5278, 4294901760
    %v5280 = vsub.f32 %v5278, %v5279
    %v5281 = vand.u32 %v5280, 4294901760
    %5282 = vmatpush.msra.mxu0 %v5281
    %v5283 = vand.u32 %v5219, 4294901760
    %v5284 = vsub.f32 %v5219, %v5283
    %v5285 = vand.u32 %v5284, 4294901760
    %v5286 = vsub.f32 %v5284, %v5285
    %v5287 = vand.u32 %v5286, 4294901760
    %5288 = vmatpush.msra.mxu0 %v5287
    %v5289 = vand.u32 %v5218, 4294901760
    %v5290 = vsub.f32 %v5218, %v5289
    %v5291 = vand.u32 %v5290, 4294901760
    %v5292 = vsub.f32 %v5290, %v5291
    %v5293 = vand.u32 %v5292, 4294901760
    %5294 = vmatpush.msra.mxu0 %v5293
    %v5295 = vand.u32 %v5217, 4294901760
    %v5296 = vsub.f32 %v5217, %v5295
    %v5297 = vand.u32 %v5296, 4294901760
    %v5298 = vsub.f32 %v5296, %v5297
    %v5299 = vand.u32 %v5298, 4294901760
    %5300 = vmatpush.msra.mxu0 %v5299
    %v5301 = vand.u32 %v5224, 4294901760
    %5302 = vmatmul.f32.gmra.mxu0 %v5301
    %v5303 = vpop.f32.mrf.mxu0
    %v5304 = vadd.f32 %v5255, %v5303
    %v5305 = vand.u32 %v5226, 4294901760
    %5306 = vmatmul.f32.gmra.mxu0 %v5305
    %v5307 = vpop.f32.mrf.mxu0
    %v5308 = vadd.f32 %v5263, %v5307
    %5309 = vdwg.mxu0
    %5310 = vmatpush.msra.mxu0 0.0
    %5311 = vmatpush.msra.mxu0 0.0
    %5312 = vmatpush.msra.mxu0 0.0
    %5313 = vmatpush.msra.mxu0 0.0
    %5314 = vmatpush.msra.mxu0 0.0
    %5315 = vmatpush.msra.mxu0 0.0
    %5316 = vmatpush.msra.mxu0 0.0
    %5317 = vmatpush.msra.mxu0 0.0
    %5318 = vmatpush.msra.mxu0 0.0
    %5319 = vmatpush.msra.mxu0 0.0
    %5320 = vmatpush.msra.mxu0 0.0
    %5321 = vmatpush.msra.mxu0 0.0
    %v5322 = vand.u32 %v5220, 4294901760
    %v5323 = vsub.f32 %v5220, %v5322
    %5324 = vmatpush.msra.mxu0 %v5323
    %v5325 = vand.u32 %v5219, 4294901760
    %v5326 = vsub.f32 %v5219, %v5325
    %5327 = vmatpush.msra.mxu0 %v5326
    %v5328 = vand.u32 %v5218, 4294901760
    %v5329 = vsub.f32 %v5218, %v5328
    %5330 = vmatpush.msra.mxu0 %v5329
    %v5331 = vand.u32 %v5217, 4294901760
    %v5332 = vsub.f32 %v5217, %v5331
    %5333 = vmatpush.msra.mxu0 %v5332
    %v5334 = vand.u32 %v5224, 4294901760
    %v5335 = vsub.f32 %v5224, %v5334
    %5336 = vmatmul.f32.gmra.mxu0 %v5335
    %v5337 = vpop.f32.mrf.mxu0
    %v5338 = vadd.f32 %v5304, %v5337
    %v5339 = vand.u32 %v5226, 4294901760
    %v5340 = vsub.f32 %v5226, %v5339
    %5341 = vmatmul.f32.gmra.mxu0 %v5340
    %v5342 = vpop.f32.mrf.mxu0
    %v5343 = vadd.f32 %v5308, %v5342
    %5344 = vdwg.mxu0
    %5345 = vmatpush.msra.mxu0 0.0
    %5346 = vmatpush.msra.mxu0 0.0
    %5347 = vmatpush.msra.mxu0 0.0
    %5348 = vmatpush.msra.mxu0 0.0
    %5349 = vmatpush.msra.mxu0 0.0
    %5350 = vmatpush.msra.mxu0 0.0
    %5351 = vmatpush.msra.mxu0 0.0
    %5352 = vmatpush.msra.mxu0 0.0
    %5353 = vmatpush.msra.mxu0 0.0
    %5354 = vmatpush.msra.mxu0 0.0
    %5355 = vmatpush.msra.mxu0 0.0
    %5356 = vmatpush.msra.mxu0 0.0
    %v5357 = vand.u32 %v5220, 4294901760
    %5358 = vmatpush.msra.mxu0 %v5357
    %v5359 = vand.u32 %v5219, 4294901760
    %5360 = vmatpush.msra.mxu0 %v5359
    %v5361 = vand.u32 %v5218, 4294901760
    %5362 = vmatpush.msra.mxu0 %v5361
    %v5363 = vand.u32 %v5217, 4294901760
    %5364 = vmatpush.msra.mxu0 %v5363
    %v5365 = vand.u32 %v5224, 4294901760
    %v5366 = vsub.f32 %v5224, %v5365
    %v5367 = vand.u32 %v5366, 4294901760
    %5368 = vmatmul.f32.gmra.mxu0 %v5367
    %v5369 = vpop.f32.mrf.mxu0
    %v5370 = vadd.f32 %v5338, %v5369
    %v5371 = vand.u32 %v5226, 4294901760
    %v5372 = vsub.f32 %v5226, %v5371
    %v5373 = vand.u32 %v5372, 4294901760
    %5374 = vmatmul.f32.gmra.mxu0 %v5373
    %v5375 = vpop.f32.mrf.mxu0
    %v5376 = vadd.f32 %v5343, %v5375
    %5377 = vdwg.mxu0
    %5378 = vmatpush.msra.mxu0 0.0
    %5379 = vmatpush.msra.mxu0 0.0
    %5380 = vmatpush.msra.mxu0 0.0
    %5381 = vmatpush.msra.mxu0 0.0
    %5382 = vmatpush.msra.mxu0 0.0
    %5383 = vmatpush.msra.mxu0 0.0
    %5384 = vmatpush.msra.mxu0 0.0
    %5385 = vmatpush.msra.mxu0 0.0
    %5386 = vmatpush.msra.mxu0 0.0
    %5387 = vmatpush.msra.mxu0 0.0
    %5388 = vmatpush.msra.mxu0 0.0
    %5389 = vmatpush.msra.mxu0 0.0
    %v5390 = vand.u32 %v5220, 4294901760
    %v5391 = vsub.f32 %v5220, %v5390
    %v5392 = vand.u32 %v5391, 4294901760
    %5393 = vmatpush.msra.mxu0 %v5392
    %v5394 = vand.u32 %v5219, 4294901760
    %v5395 = vsub.f32 %v5219, %v5394
    %v5396 = vand.u32 %v5395, 4294901760
    %5397 = vmatpush.msra.mxu0 %v5396
    %v5398 = vand.u32 %v5218, 4294901760
    %v5399 = vsub.f32 %v5218, %v5398
    %v5400 = vand.u32 %v5399, 4294901760
    %5401 = vmatpush.msra.mxu0 %v5400
    %v5402 = vand.u32 %v5217, 4294901760
    %v5403 = vsub.f32 %v5217, %v5402
    %v5404 = vand.u32 %v5403, 4294901760
    %5405 = vmatpush.msra.mxu0 %v5404
    %v5406 = vand.u32 %v5224, 4294901760
    %5407 = vmatmul.f32.gmra.mxu0 %v5406
    %v5408 = vpop.f32.mrf.mxu0
    %v5409 = vadd.f32 %v5370, %v5408
    %v5410 = vand.u32 %v5226, 4294901760
    %5411 = vmatmul.f32.gmra.mxu0 %v5410
    %v5412 = vpop.f32.mrf.mxu0
    %v5413 = vadd.f32 %v5376, %v5412
    %5414 = vdwg.mxu0
    %5415 = vmatpush.msra.mxu0 0.0
    %5416 = vmatpush.msra.mxu0 0.0
    %5417 = vmatpush.msra.mxu0 0.0
    %5418 = vmatpush.msra.mxu0 0.0
    %5419 = vmatpush.msra.mxu0 0.0
    %5420 = vmatpush.msra.mxu0 0.0
    %5421 = vmatpush.msra.mxu0 0.0
    %5422 = vmatpush.msra.mxu0 0.0
    %5423 = vmatpush.msra.mxu0 0.0
    %5424 = vmatpush.msra.mxu0 0.0
    %5425 = vmatpush.msra.mxu0 0.0
    %5426 = vmatpush.msra.mxu0 0.0
    %v5427 = vand.u32 %v5220, 4294901760
    %5428 = vmatpush.msra.mxu0 %v5427
    %v5429 = vand.u32 %v5219, 4294901760
    %5430 = vmatpush.msra.mxu0 %v5429
    %v5431 = vand.u32 %v5218, 4294901760
    %5432 = vmatpush.msra.mxu0 %v5431
    %v5433 = vand.u32 %v5217, 4294901760
    %5434 = vmatpush.msra.mxu0 %v5433
    %v5435 = vand.u32 %v5224, 4294901760
    %5436 = vmatmul.f32.gmra.mxu0 %v5435
    %v5437 = vpop.f32.mrf.mxu0
    %v5438 = vadd.f32 %v5409, %v5437
    %v5439 = vand.u32 %v5226, 4294901760
    %5440 = vmatmul.f32.gmra.mxu0 %v5439
    %v5441 = vpop.f32.mrf.mxu0
    %v5442 = vadd.f32 %v5413, %v5441
    %5443 = vdwg.mxu0
    %v5444 = vadd.f32 %v5210, %v5438
    %v5445 = vadd.f32 %v5214, %v5442
    %v5447 = vperm.slane %v4760, 0
    %v5449 = vadd.f32 %v5444, %v5447
    %v5450 = vadd.f32 %v5445, %v5447
    %v5453 = vrot.slane %v5449, 1
    %v5454 = vrot.slane %v5450, 1
    %v5455 = vsel %vm100, %v5453, %v5454
    %v5458 = vmax.f32 %v5449, %v5455
    %v5459 = vmax.f32 %v5450, %v5454
    %v5460 = vld [vmem:[%s11] sm:$0xf]
    %vm5461 = vcmask 105472
    %v5463 = vsel %vm5461, %v5460, 0
    %v5466 = vsel %vm2021, %v5459, 0
    %5468 = vmatpush.msra.mxu0 0.0
    %5469 = vmatpush.msra.mxu0 0.0
    %5470 = vmatpush.msra.mxu0 0.0
    %5471 = vmatpush.msra.mxu0 0.0
    %5472 = vmatpush.msra.mxu0 0.0
    %5473 = vmatpush.msra.mxu0 0.0
    %5474 = vmatpush.msra.mxu0 0.0
    %5475 = vmatpush.msra.mxu0 0.0
    %5476 = vmatpush.msra.mxu0 0.0
    %5477 = vmatpush.msra.mxu0 0.0
    %5478 = vmatpush.msra.mxu0 0.0
    %5479 = vmatpush.msra.mxu0 0.0
    %5480 = vmatpush.msra.mxu0 0.0
    %5481 = vmatpush.msra.mxu0 0.0
    %v5482 = vand.u32 %v5466, 4294901760
    %5483 = vmatpush.msra.mxu0 %v5482
    %v5484 = vand.u32 %v5458, 4294901760
    %5485 = vmatpush.msra.mxu0 %v5484
    %v5486 = vand.u32 %v5463, 4294901760
    %v5487 = vsub.f32 %v5463, %v5486
    %v5488 = vand.u32 %v5487, 4294901760
    %v5489 = vsub.f32 %v5487, %v5488
    %v5490 = vand.u32 %v5489, 4294901760
    %5491 = vmatmul.f32.gmra.mxu0 %v5490
    %v5492 = vpop.f32.mrf.mxu0
    %v5493 = vadd.f32 0.0, %v5492
    %5494 = vdwg.mxu0
    %5495 = vmatpush.msra.mxu0 0.0
    %5496 = vmatpush.msra.mxu0 0.0
    %5497 = vmatpush.msra.mxu0 0.0
    %5498 = vmatpush.msra.mxu0 0.0
    %5499 = vmatpush.msra.mxu0 0.0
    %5500 = vmatpush.msra.mxu0 0.0
    %5501 = vmatpush.msra.mxu0 0.0
    %5502 = vmatpush.msra.mxu0 0.0
    %5503 = vmatpush.msra.mxu0 0.0
    %5504 = vmatpush.msra.mxu0 0.0
    %5505 = vmatpush.msra.mxu0 0.0
    %5506 = vmatpush.msra.mxu0 0.0
    %5507 = vmatpush.msra.mxu0 0.0
    %5508 = vmatpush.msra.mxu0 0.0
    %v5509 = vand.u32 %v5466, 4294901760
    %v5510 = vsub.f32 %v5466, %v5509
    %v5511 = vand.u32 %v5510, 4294901760
    %v5512 = vsub.f32 %v5510, %v5511
    %v5513 = vand.u32 %v5512, 4294901760
    %5514 = vmatpush.msra.mxu0 %v5513
    %v5515 = vand.u32 %v5458, 4294901760
    %v5516 = vsub.f32 %v5458, %v5515
    %v5517 = vand.u32 %v5516, 4294901760
    %v5518 = vsub.f32 %v5516, %v5517
    %v5519 = vand.u32 %v5518, 4294901760
    %5520 = vmatpush.msra.mxu0 %v5519
    %v5521 = vand.u32 %v5463, 4294901760
    %5522 = vmatmul.f32.gmra.mxu0 %v5521
    %v5523 = vpop.f32.mrf.mxu0
    %v5524 = vadd.f32 %v5493, %v5523
    %5525 = vdwg.mxu0
    %5526 = vmatpush.msra.mxu0 0.0
    %5527 = vmatpush.msra.mxu0 0.0
    %5528 = vmatpush.msra.mxu0 0.0
    %5529 = vmatpush.msra.mxu0 0.0
    %5530 = vmatpush.msra.mxu0 0.0
    %5531 = vmatpush.msra.mxu0 0.0
    %5532 = vmatpush.msra.mxu0 0.0
    %5533 = vmatpush.msra.mxu0 0.0
    %5534 = vmatpush.msra.mxu0 0.0
    %5535 = vmatpush.msra.mxu0 0.0
    %5536 = vmatpush.msra.mxu0 0.0
    %5537 = vmatpush.msra.mxu0 0.0
    %5538 = vmatpush.msra.mxu0 0.0
    %5539 = vmatpush.msra.mxu0 0.0
    %v5540 = vand.u32 %v5466, 4294901760
    %v5541 = vsub.f32 %v5466, %v5540
    %5542 = vmatpush.msra.mxu0 %v5541
    %v5543 = vand.u32 %v5458, 4294901760
    %v5544 = vsub.f32 %v5458, %v5543
    %5545 = vmatpush.msra.mxu0 %v5544
    %v5546 = vand.u32 %v5463, 4294901760
    %v5547 = vsub.f32 %v5463, %v5546
    %5548 = vmatmul.f32.gmra.mxu0 %v5547
    %v5549 = vpop.f32.mrf.mxu0
    %v5550 = vadd.f32 %v5524, %v5549
    %5551 = vdwg.mxu0
    %5552 = vmatpush.msra.mxu0 0.0
    %5553 = vmatpush.msra.mxu0 0.0
    %5554 = vmatpush.msra.mxu0 0.0
    %5555 = vmatpush.msra.mxu0 0.0
    %5556 = vmatpush.msra.mxu0 0.0
    %5557 = vmatpush.msra.mxu0 0.0
    %5558 = vmatpush.msra.mxu0 0.0
    %5559 = vmatpush.msra.mxu0 0.0
    %5560 = vmatpush.msra.mxu0 0.0
    %5561 = vmatpush.msra.mxu0 0.0
    %5562 = vmatpush.msra.mxu0 0.0
    %5563 = vmatpush.msra.mxu0 0.0
    %5564 = vmatpush.msra.mxu0 0.0
    %5565 = vmatpush.msra.mxu0 0.0
    %v5566 = vand.u32 %v5466, 4294901760
    %5567 = vmatpush.msra.mxu0 %v5566
    %v5568 = vand.u32 %v5458, 4294901760
    %5569 = vmatpush.msra.mxu0 %v5568
    %v5570 = vand.u32 %v5463, 4294901760
    %v5571 = vsub.f32 %v5463, %v5570
    %v5572 = vand.u32 %v5571, 4294901760
    %5573 = vmatmul.f32.gmra.mxu0 %v5572
    %v5574 = vpop.f32.mrf.mxu0
    %v5575 = vadd.f32 %v5550, %v5574
    %5576 = vdwg.mxu0
    %5577 = vmatpush.msra.mxu0 0.0
    %5578 = vmatpush.msra.mxu0 0.0
    %5579 = vmatpush.msra.mxu0 0.0
    %5580 = vmatpush.msra.mxu0 0.0
    %5581 = vmatpush.msra.mxu0 0.0
    %5582 = vmatpush.msra.mxu0 0.0
    %5583 = vmatpush.msra.mxu0 0.0
    %5584 = vmatpush.msra.mxu0 0.0
    %5585 = vmatpush.msra.mxu0 0.0
    %5586 = vmatpush.msra.mxu0 0.0
    %5587 = vmatpush.msra.mxu0 0.0
    %5588 = vmatpush.msra.mxu0 0.0
    %5589 = vmatpush.msra.mxu0 0.0
    %5590 = vmatpush.msra.mxu0 0.0
    %v5591 = vand.u32 %v5466, 4294901760
    %v5592 = vsub.f32 %v5466, %v5591
    %v5593 = vand.u32 %v5592, 4294901760
    %5594 = vmatpush.msra.mxu0 %v5593
    %v5595 = vand.u32 %v5458, 4294901760
    %v5596 = vsub.f32 %v5458, %v5595
    %v5597 = vand.u32 %v5596, 4294901760
    %5598 = vmatpush.msra.mxu0 %v5597
    %v5599 = vand.u32 %v5463, 4294901760
    %5600 = vmatmul.f32.gmra.mxu0 %v5599
    %v5601 = vpop.f32.mrf.mxu0
    %v5602 = vadd.f32 %v5575, %v5601
    %5603 = vdwg.mxu0
    %5604 = vmatpush.msra.mxu0 0.0
    %5605 = vmatpush.msra.mxu0 0.0
    %5606 = vmatpush.msra.mxu0 0.0
    %5607 = vmatpush.msra.mxu0 0.0
    %5608 = vmatpush.msra.mxu0 0.0
    %5609 = vmatpush.msra.mxu0 0.0
    %5610 = vmatpush.msra.mxu0 0.0
    %5611 = vmatpush.msra.mxu0 0.0
    %5612 = vmatpush.msra.mxu0 0.0
    %5613 = vmatpush.msra.mxu0 0.0
    %5614 = vmatpush.msra.mxu0 0.0
    %5615 = vmatpush.msra.mxu0 0.0
    %5616 = vmatpush.msra.mxu0 0.0
    %5617 = vmatpush.msra.mxu0 0.0
    %v5618 = vand.u32 %v5466, 4294901760
    %5619 = vmatpush.msra.mxu0 %v5618
    %v5620 = vand.u32 %v5458, 4294901760
    %5621 = vmatpush.msra.mxu0 %v5620
    %v5622 = vand.u32 %v5463, 4294901760
    %5623 = vmatmul.f32.gmra.mxu0 %v5622
    %v5624 = vpop.f32.mrf.mxu0
    %v5625 = vadd.f32 %v5602, %v5624
    %5626 = vdwg.mxu0
    %5628 = vrot.lane.b32.xlu0 %v5625, 116
    %v5629 = vpop.permute.xlu0 %5628
    %v5631 = vmax.f32 %v5625, %v5629
    %v5632 = vmul.f32 %v5631, 0.5
    %v5633 = vmul.f32 %v5631, 0.70710677
    %v5634 = vmul.f32 %v5633, %v5633
    %v5635 = vmin.f32 16.0, %v5634
    %v5636 = vmul.f32 %v5635, 2.1237322e-06
    %v5637 = vadd.f32 %v5636, 0.00028619796
    %v5638 = vmul.f32 %v5635, %v5637
    %v5639 = vadd.f32 %v5638, 0.0036580483
    %v5640 = vmul.f32 %v5635, %v5639
    %v5641 = vadd.f32 %v5640, 0.05243302
    %v5642 = vmul.f32 %v5635, %v5641
    %v5643 = vadd.f32 %v5642, 0.18741608
    %v5644 = vmul.f32 %v5635, %v5643
    %v5645 = vadd.f32 %v5644, 1.1283791
    %v5646 = vmul.f32 %v5633, %v5645
    %v5647 = vmul.f32 %v5635, 3.8918573e-05
    %v5648 = vadd.f32 %v5647, 0.001143296
    %v5649 = vmul.f32 %v5635, %v5648
    %v5650 = vadd.f32 %v5649, 0.014752088
    %v5651 = vmul.f32 %v5635, %v5650
    %v5652 = vadd.f32 %v5651, 0.112945676
    %v5653 = vmul.f32 %v5635, %v5652
    %v5654 = vadd.f32 %v5653, 0.4994258
    %v5655 = vmul.f32 %v5635, %v5654
    %v5656 = vadd.f32 %v5655, 1.0
    %v5657 = vrcp.pop %v5656
    %v5658 = vmul.f32 %v5656, %v5657
    %v5659 = vsub.f32 1.0, %v5658
    %v5660 = vmul.f32 %v5657, %v5659
    %v5661 = vadd.f32 %v5657, %v5660
    %vm5662 = vweird.f32 %v5656
    %vm5663 = vweird.f32 %v5657
    %vm5664 = vmor %vm5662, %vm5663
    %v5665 = vsel %vm5664, %v5657, %v5661
    %v5666 = vand.u32 2147483647, %v5656
    %vm5667 = vcmp.eq.f32.partialorder %v5666, 8.507059e+37
    %v5668 = vand.u32 %v5656, 2147483648
    %v5669 = vor.u32 1.1754944e-38, %v5668
    %v5670 = vsel %vm5667, %v5669, %v5665
    %v5671 = vmul.f32 %v5646, %v5670
    %v5672 = vmin.f32 %v5671, 1.0
    %v5673 = vmax.f32 %v5672, -1.0
    %v5674 = vadd.f32 %v5673, 1.0
    %v5675 = vmul.f32 %v5632, %v5674
    %vm5676 = vcmask 93184
    %5677 = vst.msk [vmem:[#allocation5] sm:$0xf] %vm5676, %v5675
    // Predicated region
    $region54: #{tpu_custom_call.1} parent=1 // pred_check
      _
    $region55: #{tpu_custom_call.1} parent=1 // pred_check_branch
      %5679 = sbr.rel (0) target = $region57
    $region56: #{tpu_custom_call.1} parent=1 // pred_region
      %5681 = vsyncadd [#allocation4], 0
      %s5683 = sshll.u32 [#allocation5], 4
      %s5684 = int_to_ptr.vmem [resolvable:$true] %s5683
      %s5685 = sshll.u32 %s12, 4
      %s5686 = int_to_ptr.hbm [resolvable:$true] %s5685
      %5688 = dma.vmem_to_hbm [thread:$0]  %s5684, 64, %s5686, [#allocation4]
    $region57: #{tpu_custom_call.1} parent=1 // pred_fallthru
      _
    // Predicated region
    $region58: #{tpu_custom_call.1} parent=1 // pred_check
      _
    $region59: #{tpu_custom_call.1} parent=1 // pred_check_branch
      %5690 = sbr.rel (0) target = $region61
    $region60: #{tpu_custom_call.1} parent=1 // pred_region
      %5692 = dma.done [#allocation4], 64
    $region61: #{tpu_custom_call.1} parent=1 // pred_fallthru
      _
    %5693 = vsyncpa [#allocation3], 1
    %5694 = vsyncpa [#allocation4], 1

</llo_original>
